<compile_context>
chip_gen: v6e
topology: v6e:2x2x1
jax: 0.10.0
libtpu: 0.0.40
codegen_flags: <defaults>
</compile_context>

<pallas_src>
import jax
import jax.numpy as jnp
import numpy as np
from jax.experimental import pallas as pl
from jax.experimental.pallas import tpu as pltpu

_T = 16  # number of kernel taps (4x4)


# --------------------------------------------------------------------------
# Host-side (prep-time) construction of the per-layer GEMM operators.
# --------------------------------------------------------------------------
def _conv_gather(hin, win, hout, wout, k, s, p):
    """R[t, hi*win+wi, ho*wout+wo] = 1 iff input (hi,wi) feeds output (ho,wo)
    through tap t=(i,j) of a regular conv (stride s, pad p)."""
    R = np.zeros((k * k, hin * win, hout * wout), np.float32)
    for i in range(k):
        for j in range(k):
            t = i * k + j
            for ho in range(hout):
                hi = s * ho + i - p
                if hi < 0 or hi >= hin:
                    continue
                for wo in range(wout):
                    wi = s * wo + j - p
                    if wi < 0 or wi >= win:
                        continue
                    R[t, hi * win + wi, ho * wout + wo] = 1.0
    return R


def _convT_gather(hin, win, hout, wout, k, s, p):
    """Same, for ConvTranspose2d: output (ho,wo) = (s*hi + i - p, s*wi + j - p)."""
    R = np.zeros((k * k, hin * win, hout * wout), np.float32)
    for i in range(k):
        for j in range(k):
            t = i * k + j
            for hi in range(hin):
                ho = s * hi + i - p
                if ho < 0 or ho >= hout:
                    continue
                for wi in range(win):
                    wo = s * wi + j - p
                    if wo < 0 or wo >= wout:
                        continue
                    R[t, hi * win + wi, ho * wout + wo] = 1.0
    return R


def _conv_lmats(w_oihw, n):
    """Per-tap channel mixer for Conv2d: L_t = kron(I_N, W[:,:,i,j])  (NCo, NCi)."""
    cout, cin, k, _ = w_oihw.shape
    eye = np.eye(n, dtype=np.float32)
    L = np.zeros((k * k, n * cout, n * cin), np.float32)
    for i in range(k):
        for j in range(k):
            L[i * k + j] = np.kron(eye, w_oihw[:, :, i, j])
    return L


def _convT_lmats(w_iohw, n):
    """Per-tap channel mixer for ConvTranspose2d: L_t = kron(I_N, W[:,:,i,j].T)."""
    cin, cout, k, _ = w_iohw.shape
    eye = np.eye(n, dtype=np.float32)
    L = np.zeros((k * k, n * cout, n * cin), np.float32)
    for i in range(k):
        for j in range(k):
            L[i * k + j] = np.kron(eye, w_iohw[:, :, i, j].T)
    return L


def _bias_col(b, n):
    """Bias as an (N*C_out, 1) column, broadcast over lanes in-kernel."""
    return np.tile(np.asarray(b, np.float32), n).reshape(-1, 1)


def prepare_params(p, n, h, w):
    """Build tap-merged GEMM operators once (outside the traced forward)."""
    k, s, pad = 4, 2, 1
    h1, w1 = h // 2, w // 2      # after conv1
    h2, w2 = h1 // 2, w1 // 2    # after conv2
    f32, bf16 = jnp.float32, jnp.bfloat16

    r1 = _conv_gather(h, w, h1, w1, k, s, pad)
    l1 = _conv_lmats(np.asarray(p["w1"]), n)
    r2 = _conv_gather(h1, w1, h2, w2, k, s, pad)
    l2 = _conv_lmats(np.asarray(p["w2"]), n)
    r3 = _convT_gather(h2, w2, h1, w1, k, s, pad)
    l3 = _convT_lmats(np.asarray(p["w3"]), n)
    r4 = _convT_gather(h1, w1, h, w, k, s, pad)
    l4 = _convT_lmats(np.asarray(p["w4"]), n)

    def wide(r):      # (T, HWi, HWo) -> (HWi, T*HWo): tap t at columns [t*HWo,(t+1)*HWo)
        return np.concatenate(list(r), axis=1)

    def cat(l):       # (T, NCo, NCi) -> (NCo, T*NCi): tap t at columns [t*NCi,(t+1)*NCi)
        return np.concatenate(list(l), axis=1)

    def vstack(a):    # (T, A, B) -> (T*A, B): tap t at rows [t*A,(t+1)*A)
        return a.reshape(-1, a.shape[-1])

    return {
        # encoder (gather-first)
        "r1w": jnp.asarray(wide(r1), bf16), "l1c": jnp.asarray(cat(l1), f32),
        "b1": jnp.asarray(_bias_col(p["b1"], n), f32),
        "r2w": jnp.asarray(wide(r2), bf16), "l2c": jnp.asarray(cat(l2), f32),
        "b2": jnp.asarray(_bias_col(p["b2"], n), f32),
        # decoder (mix-first)
        "l3s": jnp.asarray(vstack(l3), f32), "r3s": jnp.asarray(vstack(r3), bf16),
        "b3": jnp.asarray(_bias_col(p["b3"], n), f32),
        "l4s": jnp.asarray(vstack(l4), f32), "r4s": jnp.asarray(vstack(r4), bf16),
        "b4": jnp.asarray(_bias_col(p["b4"], n), f32),
    }


# --------------------------------------------------------------------------
# The fused Pallas kernel: whole forward pass, VMEM resident.
# --------------------------------------------------------------------------
def _fused_autenc_kernel(x_ref, r1w, l1c, b1, r2w, l2c, b2,
                         l3s, b3, l4s, b4, r3_hbm, r4_hbm,
                         o_ref, r3_vmem, r4_vmem, dma_sem):
    # Kick off the decoder gather-matrix DMAs immediately; they are only needed
    # after the encoder has run, so they hide behind layers 1-2 compute.
    cp3 = pltpu.make_async_copy(r3_hbm, r3_vmem, dma_sem.at[0])
    cp4 = pltpu.make_async_copy(r4_hbm, r4_vmem, dma_sem.at[1])
    cp3.start()
    cp4.start()

    def gather_first(a, r_wide, l_cat, b, relu):
        # One wide spatial-gather matmul over all 16 taps, then one channel mix.
        hw_out = r_wide.shape[1] // _T
        g = jnp.dot(a, r_wide.astype(jnp.float32),          # (NCi, T*HWo)
                    preferred_element_type=jnp.float32)
        gs = jnp.concatenate(                                # lane->sublane regroup
            [g[:, t * hw_out:(t + 1) * hw_out] for t in range(_T)], axis=0)
        acc = jnp.dot(l_cat, gs,                             # (NCo, HWo)
                      preferred_element_type=jnp.float32) + b
        return jnp.maximum(acc, 0.0) if relu else acc

    def mix_first(a, l_stack, r_stack, b, relu):
        # Channel mix first (NCo < NCi), then one wide spatial-scatter matmul.
        nco = l_stack.shape[0] // _T
        m = jnp.dot(l_stack, a,                              # (T*NCo, HWi)
                    preferred_element_type=jnp.float32)
        mr = jnp.concatenate(                                # sublane->lane regroup
            [m[t * nco:(t + 1) * nco, :] for t in range(_T)], axis=1)
        acc = jnp.dot(mr, r_stack.astype(jnp.float32),       # (NCo, HWo)
                      preferred_element_type=jnp.float32) + b
        return jnp.maximum(acc, 0.0) if relu else acc

    a = x_ref[...]                                           # (N*3, H*W) f32
    a = gather_first(a, r1w[...], l1c[...], b1[...], True)   # conv1  + ReLU -> (N*6,  64)
    a = gather_first(a, r2w[...], l2c[...], b2[...], True)   # conv2  + ReLU -> (N*10, 16)
    cp3.wait()
    a = mix_first(a, l3s[...], r3_vmem[...], b3[...], True)  # convT1 + ReLU -> (N*6,  64)
    cp4.wait()
    a = mix_first(a, l4s[...], r4_vmem[...], b4[...], False) # convT2        -> (N*2, 256)
    o_ref[...] = a                                           # lane-dense full-width store


def _full_spec(shape):
    return pl.BlockSpec(tuple(shape), lambda *_: (0,) * len(shape))


def aut_enc_e_forward(x_nchw, pp):
    n, c, h, w = x_nchw.shape
    a0 = x_nchw.astype(jnp.float32).reshape(n * c, h * w)    # NCHW is already (N*C, H*W)
    vmem_args = (a0, pp["r1w"], pp["l1c"], pp["b1"],
                 pp["r2w"], pp["l2c"], pp["b2"],
                 pp["l3s"], pp["b3"], pp["l4s"], pp["b4"])
    hbm_args = (pp["r3s"], pp["r4s"])                        # manually prefetched in-kernel
    c_out_rows = pp["b4"].shape[0]                           # N * C_out_final = 4
    out = pl.pallas_call(
        _fused_autenc_kernel,
        out_shape=jax.ShapeDtypeStruct((c_out_rows, h * w), jnp.float32),
        grid=(1,),
        in_specs=[_full_spec(a.shape) for a in vmem_args]
        + [pl.BlockSpec(memory_space=pl.ANY) for _ in hbm_args],
        out_specs=_full_spec((c_out_rows, h * w)),
        scratch_shapes=[
            pltpu.VMEM(tuple(pp["r3s"].shape), jnp.bfloat16),
            pltpu.VMEM(tuple(pp["r4s"].shape), jnp.bfloat16),
            pltpu.SemaphoreType.DMA((2,)),
        ],
        compiler_params=pltpu.CompilerParams(dimension_semantics=("arbitrary",)),
    )(*vmem_args, *hbm_args)
    return out.reshape(n, c_out_rows // n, h, w)             # -> NCHW


# --------------------------------------------------------------------------
# Raw (PyTorch-layout) parameters + independent XLA reference.
# --------------------------------------------------------------------------
def init_params(key):
    ks = jax.random.split(key, 8)
    s = 0.1
    return {
        "w1": jax.random.normal(ks[0], (6, 3, 4, 4), jnp.float32) * s,
        "b1": jax.random.normal(ks[1], (6,), jnp.float32) * s,
        "w2": jax.random.normal(ks[2], (10, 6, 4, 4), jnp.float32) * s,
        "b2": jax.random.normal(ks[3], (10,), jnp.float32) * s,
        "w3": jax.random.normal(ks[4], (10, 6, 4, 4), jnp.float32) * s,   # ConvT(10->6)
        "b3": jax.random.normal(ks[5], (6,), jnp.float32) * s,
        "w4": jax.random.normal(ks[6], (6, 2, 4, 4), jnp.float32) * s,    # ConvT(6->2)
        "b4": jax.random.normal(ks[7], (2,), jnp.float32) * s,
    }


def ref_forward(x, p):
    dn = ("NCHW", "OIHW", "NCHW")

    def bias(b):
        return b[None, :, None, None]

    y = jax.lax.conv_general_dilated(x, p["w1"], (2, 2), [(1, 1), (1, 1)],
                                     dimension_numbers=dn) + bias(p["b1"])
    y = jnp.maximum(y, 0.0)
    y = jax.lax.conv_general_dilated(y, p["w2"], (2, 2), [(1, 1), (1, 1)],
                                     dimension_numbers=dn) + bias(p["b2"])
    y = jnp.maximum(y, 0.0)
    w3c = jnp.transpose(jnp.flip(p["w3"], (2, 3)), (1, 0, 2, 3))
    y = jax.lax.conv_general_dilated(y, w3c, (1, 1), [(2, 2), (2, 2)],
                                     lhs_dilation=(2, 2), dimension_numbers=dn) + bias(p["b3"])
    y = jnp.maximum(y, 0.0)
    w4c = jnp.transpose(jnp.flip(p["w4"], (2, 3)), (1, 0, 2, 3))
    y = jax.lax.conv_general_dilated(y, w4c, (1, 1), [(2, 2), (2, 2)],
                                     lhs_dilation=(2, 2), dimension_numbers=dn) + bias(p["b4"])
    return y


if __name__ == "__main__":
    key = jax.random.PRNGKey(0)
    kx, kp = jax.random.split(key)
    x = jax.random.normal(kx, (2, 3, 16, 16), jnp.float32)   # NCHW, as in PyTorch
    raw = init_params(kp)
    prep = prepare_params(raw, n=2, h=16, w=16)              # one-time param prep

    fwd = jax.jit(aut_enc_e_forward)
    out = jax.block_until_ready(fwd(x, prep))

    assert out.shape == (2, 2, 16, 16), out.shape
    ref = jax.block_until_ready(ref_forward(x, raw))
    np.testing.assert_allclose(np.asarray(out), np.asarray(ref), rtol=1e-2, atol=1e-3)

    print("KERNEL_OK")
</pallas_src>

<mosaic_0001>
module attributes {stable_mosaic.version = 11 : i64} {
  func.func @_fused_autenc_kernel(%arg0: i32, %arg1: memref<6x256xf32, #tpu.memory_space<vmem>>, %arg2: memref<256x1024xbf16, #tpu.memory_space<vmem>>, %arg3: memref<12x96xf32, #tpu.memory_space<vmem>>, %arg4: memref<12x1xf32, #tpu.memory_space<vmem>>, %arg5: memref<64x256xbf16, #tpu.memory_space<vmem>>, %arg6: memref<20x192xf32, #tpu.memory_space<vmem>>, %arg7: memref<20x1xf32, #tpu.memory_space<vmem>>, %arg8: memref<192x20xf32, #tpu.memory_space<vmem>>, %arg9: memref<12x1xf32, #tpu.memory_space<vmem>>, %arg10: memref<64x12xf32, #tpu.memory_space<vmem>>, %arg11: memref<4x1xf32, #tpu.memory_space<vmem>>, %arg12: memref<256x64xbf16, #tpu.memory_space<any>>, %arg13: memref<1024x256xbf16, #tpu.memory_space<any>>, %arg14: memref<4x256xf32, #tpu.memory_space<vmem>>, %arg15: memref<256x64xbf16, #tpu.memory_space<vmem>>, %arg16: memref<1024x256xbf16, #tpu.memory_space<vmem>>, %arg17: memref<2x!tpu.dma_semaphore, #tpu.memory_space<semaphore_mem>>) attributes {dimension_semantics = [#tpu.dimension_semantics<arbitrary>], iteration_bounds = array<i64: 1>, scalar_prefetch = 0 : i64, scratch_operands = 3 : i64, tpu.core_type = #tpu.core_type<tc>, window_params = [{pipeline_mode = #tpu.pipeline_mode<synchronous>, transform_indices = @transform_0, window_bounds = array<i64: 6, 256>}, {pipeline_mode = #tpu.pipeline_mode<synchronous>, transform_indices = @transform_1, window_bounds = array<i64: 256, 1024>}, {pipeline_mode = #tpu.pipeline_mode<synchronous>, transform_indices = @transform_2, window_bounds = array<i64: 12, 96>}, {pipeline_mode = #tpu.pipeline_mode<synchronous>, transform_indices = @transform_3, window_bounds = array<i64: 12, 1>}, {pipeline_mode = #tpu.pipeline_mode<synchronous>, transform_indices = @transform_4, window_bounds = array<i64: 64, 256>}, {pipeline_mode = #tpu.pipeline_mode<synchronous>, transform_indices = @transform_5, window_bounds = array<i64: 20, 192>}, {pipeline_mode = #tpu.pipeline_mode<synchronous>, transform_indices = @transform_6, window_bounds = array<i64: 20, 1>}, {pipeline_mode = #tpu.pipeline_mode<synchronous>, transform_indices = @transform_7, window_bounds = array<i64: 192, 20>}, {pipeline_mode = #tpu.pipeline_mode<synchronous>, transform_indices = @transform_8, window_bounds = array<i64: 12, 1>}, {pipeline_mode = #tpu.pipeline_mode<synchronous>, transform_indices = @transform_9, window_bounds = array<i64: 64, 12>}, {pipeline_mode = #tpu.pipeline_mode<synchronous>, transform_indices = @transform_10, window_bounds = array<i64: 4, 1>}, {}, {}, {pipeline_mode = #tpu.pipeline_mode<synchronous>, transform_indices = @transform_13, window_bounds = array<i64: 4, 256>}]} {
    %c0_i32 = arith.constant 0 : i32
    %0 = tpu.memref_slice %arg17[%c0_i32] : memref<2x!tpu.dma_semaphore, #tpu.memory_space<semaphore_mem>> -> memref<1x!tpu.dma_semaphore, #tpu.memory_space<semaphore_mem>>
    %1 = tpu.memref_squeeze %0 : memref<1x!tpu.dma_semaphore, #tpu.memory_space<semaphore_mem>> -> memref<!tpu.dma_semaphore, #tpu.memory_space<semaphore_mem>>
    tpu.enqueue_dma source(%arg12 : memref<256x64xbf16, #tpu.memory_space<any>>) target(%arg15 : memref<256x64xbf16, #tpu.memory_space<vmem>>) target_semaphore(%1 : memref<!tpu.dma_semaphore, #tpu.memory_space<semaphore_mem>>)
    %c1_i32 = arith.constant 1 : i32
    %2 = tpu.memref_slice %arg17[%c1_i32] : memref<2x!tpu.dma_semaphore, #tpu.memory_space<semaphore_mem>> -> memref<1x!tpu.dma_semaphore, #tpu.memory_space<semaphore_mem>>
    %3 = tpu.memref_squeeze %2 : memref<1x!tpu.dma_semaphore, #tpu.memory_space<semaphore_mem>> -> memref<!tpu.dma_semaphore, #tpu.memory_space<semaphore_mem>>
    tpu.enqueue_dma source(%arg13 : memref<1024x256xbf16, #tpu.memory_space<any>>) target(%arg16 : memref<1024x256xbf16, #tpu.memory_space<vmem>>) target_semaphore(%3 : memref<!tpu.dma_semaphore, #tpu.memory_space<semaphore_mem>>)
    %c0 = arith.constant 0 : index
    %c0_0 = arith.constant 0 : index
    %4 = vector.load %arg1[%c0, %c0_0] : memref<6x256xf32, #tpu.memory_space<vmem>>, vector<6x256xf32>
    %c0_1 = arith.constant 0 : index
    %c0_2 = arith.constant 0 : index
    %5 = vector.load %arg2[%c0_1, %c0_2] : memref<256x1024xbf16, #tpu.memory_space<vmem>>, vector<256x1024xbf16>
    %c0_3 = arith.constant 0 : index
    %c0_4 = arith.constant 0 : index
    %6 = vector.load %arg3[%c0_3, %c0_4] : memref<12x96xf32, #tpu.memory_space<vmem>>, vector<12x96xf32>
    %c0_5 = arith.constant 0 : index
    %c0_6 = arith.constant 0 : index
    %7 = vector.load %arg4[%c0_5, %c0_6] : memref<12x1xf32, #tpu.memory_space<vmem>>, vector<12x1xf32>
    %8 = arith.extf %5 : vector<256x1024xbf16> to vector<256x1024xf32>
    %cst = arith.constant dense<0.000000e+00> : vector<6x1024xf32>
    %9 = tpu.matmul %4, %8, %cst {dimension_numbers = #tpu.dot_dimension_numbers<[1], [0], [0], [1], [0, 0, 1, 1], [], []>} : vector<6x256xf32>, vector<256x1024xf32>, vector<6x1024xf32> -> vector<6x1024xf32>
    %10 = vector.extract_strided_slice %9 {offsets = [0, 0], sizes = [6, 64], strides = [1, 1]} : vector<6x1024xf32> to vector<6x64xf32>
    %11 = vector.extract_strided_slice %9 {offsets = [0, 64], sizes = [6, 64], strides = [1, 1]} : vector<6x1024xf32> to vector<6x64xf32>
    %12 = vector.extract_strided_slice %9 {offsets = [0, 128], sizes = [6, 64], strides = [1, 1]} : vector<6x1024xf32> to vector<6x64xf32>
    %13 = vector.extract_strided_slice %9 {offsets = [0, 192], sizes = [6, 64], strides = [1, 1]} : vector<6x1024xf32> to vector<6x64xf32>
    %14 = vector.extract_strided_slice %9 {offsets = [0, 256], sizes = [6, 64], strides = [1, 1]} : vector<6x1024xf32> to vector<6x64xf32>
    %15 = vector.extract_strided_slice %9 {offsets = [0, 320], sizes = [6, 64], strides = [1, 1]} : vector<6x1024xf32> to vector<6x64xf32>
    %16 = vector.extract_strided_slice %9 {offsets = [0, 384], sizes = [6, 64], strides = [1, 1]} : vector<6x1024xf32> to vector<6x64xf32>
    %17 = vector.extract_strided_slice %9 {offsets = [0, 448], sizes = [6, 64], strides = [1, 1]} : vector<6x1024xf32> to vector<6x64xf32>
    %18 = vector.extract_strided_slice %9 {offsets = [0, 512], sizes = [6, 64], strides = [1, 1]} : vector<6x1024xf32> to vector<6x64xf32>
    %19 = vector.extract_strided_slice %9 {offsets = [0, 576], sizes = [6, 64], strides = [1, 1]} : vector<6x1024xf32> to vector<6x64xf32>
    %20 = vector.extract_strided_slice %9 {offsets = [0, 640], sizes = [6, 64], strides = [1, 1]} : vector<6x1024xf32> to vector<6x64xf32>
    %21 = vector.extract_strided_slice %9 {offsets = [0, 704], sizes = [6, 64], strides = [1, 1]} : vector<6x1024xf32> to vector<6x64xf32>
    %22 = vector.extract_strided_slice %9 {offsets = [0, 768], sizes = [6, 64], strides = [1, 1]} : vector<6x1024xf32> to vector<6x64xf32>
    %23 = vector.extract_strided_slice %9 {offsets = [0, 832], sizes = [6, 64], strides = [1, 1]} : vector<6x1024xf32> to vector<6x64xf32>
    %24 = vector.extract_strided_slice %9 {offsets = [0, 896], sizes = [6, 64], strides = [1, 1]} : vector<6x1024xf32> to vector<6x64xf32>
    %25 = vector.extract_strided_slice %9 {offsets = [0, 960], sizes = [6, 64], strides = [1, 1]} : vector<6x1024xf32> to vector<6x64xf32>
    %26 = tpu.concatenate %10, %11, %12, %13, %14, %15, %16, %17, %18, %19, %20, %21, %22, %23, %24, %25 in 0 : vector<6x64xf32>, vector<6x64xf32>, vector<6x64xf32>, vector<6x64xf32>, vector<6x64xf32>, vector<6x64xf32>, vector<6x64xf32>, vector<6x64xf32>, vector<6x64xf32>, vector<6x64xf32>, vector<6x64xf32>, vector<6x64xf32>, vector<6x64xf32>, vector<6x64xf32>, vector<6x64xf32>, vector<6x64xf32> -> vector<96x64xf32>
    %cst_7 = arith.constant dense<0.000000e+00> : vector<12x64xf32>
    %27 = tpu.matmul %6, %26, %cst_7 {dimension_numbers = #tpu.dot_dimension_numbers<[1], [0], [0], [1], [0, 0, 1, 1], [], []>} : vector<12x96xf32>, vector<96x64xf32>, vector<12x64xf32> -> vector<12x64xf32>
    %28 = vector.broadcast %7 : vector<12x1xf32> to vector<12x64xf32>
    %29 = arith.addf %27, %28 : vector<12x64xf32>
    %cst_8 = arith.constant 0.000000e+00 : f32
    %30 = vector.broadcast %cst_8 : f32 to vector<12x64xf32>
    %31 = arith.maximumf %29, %30 : vector<12x64xf32>
    %c0_9 = arith.constant 0 : index
    %c0_10 = arith.constant 0 : index
    %32 = vector.load %arg5[%c0_9, %c0_10] : memref<64x256xbf16, #tpu.memory_space<vmem>>, vector<64x256xbf16>
    %c0_11 = arith.constant 0 : index
    %c0_12 = arith.constant 0 : index
    %33 = vector.load %arg6[%c0_11, %c0_12] : memref<20x192xf32, #tpu.memory_space<vmem>>, vector<20x192xf32>
    %c0_13 = arith.constant 0 : index
    %c0_14 = arith.constant 0 : index
    %34 = vector.load %arg7[%c0_13, %c0_14] : memref<20x1xf32, #tpu.memory_space<vmem>>, vector<20x1xf32>
    %35 = arith.extf %32 : vector<64x256xbf16> to vector<64x256xf32>
    %cst_15 = arith.constant dense<0.000000e+00> : vector<12x256xf32>
    %36 = tpu.matmul %31, %35, %cst_15 {dimension_numbers = #tpu.dot_dimension_numbers<[1], [0], [0], [1], [0, 0, 1, 1], [], []>} : vector<12x64xf32>, vector<64x256xf32>, vector<12x256xf32> -> vector<12x256xf32>
    %37 = vector.extract_strided_slice %36 {offsets = [0, 0], sizes = [12, 16], strides = [1, 1]} : vector<12x256xf32> to vector<12x16xf32>
    %38 = vector.extract_strided_slice %36 {offsets = [0, 16], sizes = [12, 16], strides = [1, 1]} : vector<12x256xf32> to vector<12x16xf32>
    %39 = vector.extract_strided_slice %36 {offsets = [0, 32], sizes = [12, 16], strides = [1, 1]} : vector<12x256xf32> to vector<12x16xf32>
    %40 = vector.extract_strided_slice %36 {offsets = [0, 48], sizes = [12, 16], strides = [1, 1]} : vector<12x256xf32> to vector<12x16xf32>
    %41 = vector.extract_strided_slice %36 {offsets = [0, 64], sizes = [12, 16], strides = [1, 1]} : vector<12x256xf32> to vector<12x16xf32>
    %42 = vector.extract_strided_slice %36 {offsets = [0, 80], sizes = [12, 16], strides = [1, 1]} : vector<12x256xf32> to vector<12x16xf32>
    %43 = vector.extract_strided_slice %36 {offsets = [0, 96], sizes = [12, 16], strides = [1, 1]} : vector<12x256xf32> to vector<12x16xf32>
    %44 = vector.extract_strided_slice %36 {offsets = [0, 112], sizes = [12, 16], strides = [1, 1]} : vector<12x256xf32> to vector<12x16xf32>
    %45 = vector.extract_strided_slice %36 {offsets = [0, 128], sizes = [12, 16], strides = [1, 1]} : vector<12x256xf32> to vector<12x16xf32>
    %46 = vector.extract_strided_slice %36 {offsets = [0, 144], sizes = [12, 16], strides = [1, 1]} : vector<12x256xf32> to vector<12x16xf32>
    %47 = vector.extract_strided_slice %36 {offsets = [0, 160], sizes = [12, 16], strides = [1, 1]} : vector<12x256xf32> to vector<12x16xf32>
    %48 = vector.extract_strided_slice %36 {offsets = [0, 176], sizes = [12, 16], strides = [1, 1]} : vector<12x256xf32> to vector<12x16xf32>
    %49 = vector.extract_strided_slice %36 {offsets = [0, 192], sizes = [12, 16], strides = [1, 1]} : vector<12x256xf32> to vector<12x16xf32>
    %50 = vector.extract_strided_slice %36 {offsets = [0, 208], sizes = [12, 16], strides = [1, 1]} : vector<12x256xf32> to vector<12x16xf32>
    %51 = vector.extract_strided_slice %36 {offsets = [0, 224], sizes = [12, 16], strides = [1, 1]} : vector<12x256xf32> to vector<12x16xf32>
    %52 = vector.extract_strided_slice %36 {offsets = [0, 240], sizes = [12, 16], strides = [1, 1]} : vector<12x256xf32> to vector<12x16xf32>
    %53 = tpu.concatenate %37, %38, %39, %40, %41, %42, %43, %44, %45, %46, %47, %48, %49, %50, %51, %52 in 0 : vector<12x16xf32>, vector<12x16xf32>, vector<12x16xf32>, vector<12x16xf32>, vector<12x16xf32>, vector<12x16xf32>, vector<12x16xf32>, vector<12x16xf32>, vector<12x16xf32>, vector<12x16xf32>, vector<12x16xf32>, vector<12x16xf32>, vector<12x16xf32>, vector<12x16xf32>, vector<12x16xf32>, vector<12x16xf32> -> vector<192x16xf32>
    %cst_16 = arith.constant dense<0.000000e+00> : vector<20x16xf32>
    %54 = tpu.matmul %33, %53, %cst_16 {dimension_numbers = #tpu.dot_dimension_numbers<[1], [0], [0], [1], [0, 0, 1, 1], [], []>} : vector<20x192xf32>, vector<192x16xf32>, vector<20x16xf32> -> vector<20x16xf32>
    %55 = vector.broadcast %34 : vector<20x1xf32> to vector<20x16xf32>
    %56 = arith.addf %54, %55 : vector<20x16xf32>
    %cst_17 = arith.constant 0.000000e+00 : f32
    %57 = vector.broadcast %cst_17 : f32 to vector<20x16xf32>
    %58 = arith.maximumf %56, %57 : vector<20x16xf32>
    %c0_i32_18 = arith.constant 0 : i32
    %59 = tpu.memref_slice %arg17[%c0_i32_18] : memref<2x!tpu.dma_semaphore, #tpu.memory_space<semaphore_mem>> -> memref<1x!tpu.dma_semaphore, #tpu.memory_space<semaphore_mem>>
    %60 = tpu.memref_squeeze %59 : memref<1x!tpu.dma_semaphore, #tpu.memory_space<semaphore_mem>> -> memref<!tpu.dma_semaphore, #tpu.memory_space<semaphore_mem>>
    tpu.wait_dma2 semaphore(%60 : memref<!tpu.dma_semaphore, #tpu.memory_space<semaphore_mem>>) src(%arg12 : memref<256x64xbf16, #tpu.memory_space<any>>) dst(%arg15 : memref<256x64xbf16, #tpu.memory_space<vmem>>)
    %c0_19 = arith.constant 0 : index
    %c0_20 = arith.constant 0 : index
    %61 = vector.load %arg8[%c0_19, %c0_20] : memref<192x20xf32, #tpu.memory_space<vmem>>, vector<192x20xf32>
    %c0_21 = arith.constant 0 : index
    %c0_22 = arith.constant 0 : index
    %62 = vector.load %arg15[%c0_21, %c0_22] : memref<256x64xbf16, #tpu.memory_space<vmem>>, vector<256x64xbf16>
    %c0_23 = arith.constant 0 : index
    %c0_24 = arith.constant 0 : index
    %63 = vector.load %arg9[%c0_23, %c0_24] : memref<12x1xf32, #tpu.memory_space<vmem>>, vector<12x1xf32>
    %cst_25 = arith.constant dense<0.000000e+00> : vector<192x16xf32>
    %64 = tpu.matmul %61, %58, %cst_25 {dimension_numbers = #tpu.dot_dimension_numbers<[1], [0], [0], [1], [0, 0, 1, 1], [], []>} : vector<192x20xf32>, vector<20x16xf32>, vector<192x16xf32> -> vector<192x16xf32>
    %65 = vector.extract_strided_slice %64 {offsets = [0, 0], sizes = [12, 16], strides = [1, 1]} : vector<192x16xf32> to vector<12x16xf32>
    %66 = vector.extract_strided_slice %64 {offsets = [12, 0], sizes = [12, 16], strides = [1, 1]} : vector<192x16xf32> to vector<12x16xf32>
    %67 = vector.extract_strided_slice %64 {offsets = [24, 0], sizes = [12, 16], strides = [1, 1]} : vector<192x16xf32> to vector<12x16xf32>
    %68 = vector.extract_strided_slice %64 {offsets = [36, 0], sizes = [12, 16], strides = [1, 1]} : vector<192x16xf32> to vector<12x16xf32>
    %69 = vector.extract_strided_slice %64 {offsets = [48, 0], sizes = [12, 16], strides = [1, 1]} : vector<192x16xf32> to vector<12x16xf32>
    %70 = vector.extract_strided_slice %64 {offsets = [60, 0], sizes = [12, 16], strides = [1, 1]} : vector<192x16xf32> to vector<12x16xf32>
    %71 = vector.extract_strided_slice %64 {offsets = [72, 0], sizes = [12, 16], strides = [1, 1]} : vector<192x16xf32> to vector<12x16xf32>
    %72 = vector.extract_strided_slice %64 {offsets = [84, 0], sizes = [12, 16], strides = [1, 1]} : vector<192x16xf32> to vector<12x16xf32>
    %73 = vector.extract_strided_slice %64 {offsets = [96, 0], sizes = [12, 16], strides = [1, 1]} : vector<192x16xf32> to vector<12x16xf32>
    %74 = vector.extract_strided_slice %64 {offsets = [108, 0], sizes = [12, 16], strides = [1, 1]} : vector<192x16xf32> to vector<12x16xf32>
    %75 = vector.extract_strided_slice %64 {offsets = [120, 0], sizes = [12, 16], strides = [1, 1]} : vector<192x16xf32> to vector<12x16xf32>
    %76 = vector.extract_strided_slice %64 {offsets = [132, 0], sizes = [12, 16], strides = [1, 1]} : vector<192x16xf32> to vector<12x16xf32>
    %77 = vector.extract_strided_slice %64 {offsets = [144, 0], sizes = [12, 16], strides = [1, 1]} : vector<192x16xf32> to vector<12x16xf32>
    %78 = vector.extract_strided_slice %64 {offsets = [156, 0], sizes = [12, 16], strides = [1, 1]} : vector<192x16xf32> to vector<12x16xf32>
    %79 = vector.extract_strided_slice %64 {offsets = [168, 0], sizes = [12, 16], strides = [1, 1]} : vector<192x16xf32> to vector<12x16xf32>
    %80 = vector.extract_strided_slice %64 {offsets = [180, 0], sizes = [12, 16], strides = [1, 1]} : vector<192x16xf32> to vector<12x16xf32>
    %81 = tpu.concatenate %65, %66, %67, %68, %69, %70, %71, %72, %73, %74, %75, %76, %77, %78, %79, %80 in 1 : vector<12x16xf32>, vector<12x16xf32>, vector<12x16xf32>, vector<12x16xf32>, vector<12x16xf32>, vector<12x16xf32>, vector<12x16xf32>, vector<12x16xf32>, vector<12x16xf32>, vector<12x16xf32>, vector<12x16xf32>, vector<12x16xf32>, vector<12x16xf32>, vector<12x16xf32>, vector<12x16xf32>, vector<12x16xf32> -> vector<12x256xf32>
    %82 = arith.extf %62 : vector<256x64xbf16> to vector<256x64xf32>
    %cst_26 = arith.constant dense<0.000000e+00> : vector<12x64xf32>
    %83 = tpu.matmul %81, %82, %cst_26 {dimension_numbers = #tpu.dot_dimension_numbers<[1], [0], [0], [1], [0, 0, 1, 1], [], []>} : vector<12x256xf32>, vector<256x64xf32>, vector<12x64xf32> -> vector<12x64xf32>
    %84 = vector.broadcast %63 : vector<12x1xf32> to vector<12x64xf32>
    %85 = arith.addf %83, %84 : vector<12x64xf32>
    %cst_27 = arith.constant 0.000000e+00 : f32
    %86 = vector.broadcast %cst_27 : f32 to vector<12x64xf32>
    %87 = arith.maximumf %85, %86 : vector<12x64xf32>
    %c1_i32_28 = arith.constant 1 : i32
    %88 = tpu.memref_slice %arg17[%c1_i32_28] : memref<2x!tpu.dma_semaphore, #tpu.memory_space<semaphore_mem>> -> memref<1x!tpu.dma_semaphore, #tpu.memory_space<semaphore_mem>>
    %89 = tpu.memref_squeeze %88 : memref<1x!tpu.dma_semaphore, #tpu.memory_space<semaphore_mem>> -> memref<!tpu.dma_semaphore, #tpu.memory_space<semaphore_mem>>
    tpu.wait_dma2 semaphore(%89 : memref<!tpu.dma_semaphore, #tpu.memory_space<semaphore_mem>>) src(%arg13 : memref<1024x256xbf16, #tpu.memory_space<any>>) dst(%arg16 : memref<1024x256xbf16, #tpu.memory_space<vmem>>)
    %c0_29 = arith.constant 0 : index
    %c0_30 = arith.constant 0 : index
    %90 = vector.load %arg10[%c0_29, %c0_30] : memref<64x12xf32, #tpu.memory_space<vmem>>, vector<64x12xf32>
    %c0_31 = arith.constant 0 : index
    %c0_32 = arith.constant 0 : index
    %91 = vector.load %arg16[%c0_31, %c0_32] : memref<1024x256xbf16, #tpu.memory_space<vmem>>, vector<1024x256xbf16>
    %c0_33 = arith.constant 0 : index
    %c0_34 = arith.constant 0 : index
    %92 = vector.load %arg11[%c0_33, %c0_34] : memref<4x1xf32, #tpu.memory_space<vmem>>, vector<4x1xf32>
    %cst_35 = arith.constant dense<0.000000e+00> : vector<64x64xf32>
    %93 = tpu.matmul %90, %87, %cst_35 {dimension_numbers = #tpu.dot_dimension_numbers<[1], [0], [0], [1], [0, 0, 1, 1], [], []>} : vector<64x12xf32>, vector<12x64xf32>, vector<64x64xf32> -> vector<64x64xf32>
    %94 = vector.extract_strided_slice %93 {offsets = [0, 0], sizes = [4, 64], strides = [1, 1]} : vector<64x64xf32> to vector<4x64xf32>
    %95 = vector.extract_strided_slice %93 {offsets = [4, 0], sizes = [4, 64], strides = [1, 1]} : vector<64x64xf32> to vector<4x64xf32>
    %96 = vector.extract_strided_slice %93 {offsets = [8, 0], sizes = [4, 64], strides = [1, 1]} : vector<64x64xf32> to vector<4x64xf32>
    %97 = vector.extract_strided_slice %93 {offsets = [12, 0], sizes = [4, 64], strides = [1, 1]} : vector<64x64xf32> to vector<4x64xf32>
    %98 = vector.extract_strided_slice %93 {offsets = [16, 0], sizes = [4, 64], strides = [1, 1]} : vector<64x64xf32> to vector<4x64xf32>
    %99 = vector.extract_strided_slice %93 {offsets = [20, 0], sizes = [4, 64], strides = [1, 1]} : vector<64x64xf32> to vector<4x64xf32>
    %100 = vector.extract_strided_slice %93 {offsets = [24, 0], sizes = [4, 64], strides = [1, 1]} : vector<64x64xf32> to vector<4x64xf32>
    %101 = vector.extract_strided_slice %93 {offsets = [28, 0], sizes = [4, 64], strides = [1, 1]} : vector<64x64xf32> to vector<4x64xf32>
    %102 = vector.extract_strided_slice %93 {offsets = [32, 0], sizes = [4, 64], strides = [1, 1]} : vector<64x64xf32> to vector<4x64xf32>
    %103 = vector.extract_strided_slice %93 {offsets = [36, 0], sizes = [4, 64], strides = [1, 1]} : vector<64x64xf32> to vector<4x64xf32>
    %104 = vector.extract_strided_slice %93 {offsets = [40, 0], sizes = [4, 64], strides = [1, 1]} : vector<64x64xf32> to vector<4x64xf32>
    %105 = vector.extract_strided_slice %93 {offsets = [44, 0], sizes = [4, 64], strides = [1, 1]} : vector<64x64xf32> to vector<4x64xf32>
    %106 = vector.extract_strided_slice %93 {offsets = [48, 0], sizes = [4, 64], strides = [1, 1]} : vector<64x64xf32> to vector<4x64xf32>
    %107 = vector.extract_strided_slice %93 {offsets = [52, 0], sizes = [4, 64], strides = [1, 1]} : vector<64x64xf32> to vector<4x64xf32>
    %108 = vector.extract_strided_slice %93 {offsets = [56, 0], sizes = [4, 64], strides = [1, 1]} : vector<64x64xf32> to vector<4x64xf32>
    %109 = vector.extract_strided_slice %93 {offsets = [60, 0], sizes = [4, 64], strides = [1, 1]} : vector<64x64xf32> to vector<4x64xf32>
    %110 = tpu.concatenate %94, %95, %96, %97, %98, %99, %100, %101, %102, %103, %104, %105, %106, %107, %108, %109 in 1 : vector<4x64xf32>, vector<4x64xf32>, vector<4x64xf32>, vector<4x64xf32>, vector<4x64xf32>, vector<4x64xf32>, vector<4x64xf32>, vector<4x64xf32>, vector<4x64xf32>, vector<4x64xf32>, vector<4x64xf32>, vector<4x64xf32>, vector<4x64xf32>, vector<4x64xf32>, vector<4x64xf32>, vector<4x64xf32> -> vector<4x1024xf32>
    %111 = arith.extf %91 : vector<1024x256xbf16> to vector<1024x256xf32>
    %cst_36 = arith.constant dense<0.000000e+00> : vector<4x256xf32>
    %112 = tpu.matmul %110, %111, %cst_36 {dimension_numbers = #tpu.dot_dimension_numbers<[1], [0], [0], [1], [0, 0, 1, 1], [], []>} : vector<4x1024xf32>, vector<1024x256xf32>, vector<4x256xf32> -> vector<4x256xf32>
    %113 = vector.broadcast %92 : vector<4x1xf32> to vector<4x256xf32>
    %114 = arith.addf %112, %113 : vector<4x256xf32>
    %c0_37 = arith.constant 0 : index
    %c0_38 = arith.constant 0 : index
    %115 = vector.load %arg14[%c0_37, %c0_38] : memref<4x256xf32, #tpu.memory_space<vmem>>, vector<4x256xf32>
    tpu.vector_store %arg14[%c0_37, %c0_38], %114 {strides = array<i32>} : memref<4x256xf32, #tpu.memory_space<vmem>>, vector<4x256xf32>,
    return
  }
  func.func @transform_0(%arg0: i32) -> (i32, i32) {
    %c0_i32 = arith.constant 0 : i32
    %c0_i32_0 = arith.constant 0 : i32
    %c0_i32_1 = arith.constant 0 : i32
    return %c0_i32, %c0_i32_0 : i32, i32
  }
  func.func @transform_1(%arg0: i32) -> (i32, i32) {
    %c0_i32 = arith.constant 0 : i32
    %c0_i32_0 = arith.constant 0 : i32
    %c0_i32_1 = arith.constant 0 : i32
    return %c0_i32, %c0_i32_0 : i32, i32
  }
  func.func @transform_2(%arg0: i32) -> (i32, i32) {
    %c0_i32 = arith.constant 0 : i32
    %c0_i32_0 = arith.constant 0 : i32
    %c0_i32_1 = arith.constant 0 : i32
    return %c0_i32, %c0_i32_0 : i32, i32
  }
  func.func @transform_3(%arg0: i32) -> (i32, i32) {
    %c0_i32 = arith.constant 0 : i32
    %c0_i32_0 = arith.constant 0 : i32
    %c0_i32_1 = arith.constant 0 : i32
    return %c0_i32, %c0_i32_0 : i32, i32
  }
  func.func @transform_4(%arg0: i32) -> (i32, i32) {
    %c0_i32 = arith.constant 0 : i32
    %c0_i32_0 = arith.constant 0 : i32
    %c0_i32_1 = arith.constant 0 : i32
    return %c0_i32, %c0_i32_0 : i32, i32
  }
  func.func @transform_5(%arg0: i32) -> (i32, i32) {
    %c0_i32 = arith.constant 0 : i32
    %c0_i32_0 = arith.constant 0 : i32
    %c0_i32_1 = arith.constant 0 : i32
    return %c0_i32, %c0_i32_0 : i32, i32
  }
  func.func @transform_6(%arg0: i32) -> (i32, i32) {
    %c0_i32 = arith.constant 0 : i32
    %c0_i32_0 = arith.constant 0 : i32
    %c0_i32_1 = arith.constant 0 : i32
    return %c0_i32, %c0_i32_0 : i32, i32
  }
  func.func @transform_7(%arg0: i32) -> (i32, i32) {
    %c0_i32 = arith.constant 0 : i32
    %c0_i32_0 = arith.constant 0 : i32
    %c0_i32_1 = arith.constant 0 : i32
    return %c0_i32, %c0_i32_0 : i32, i32
  }
  func.func @transform_8(%arg0: i32) -> (i32, i32) {
    %c0_i32 = arith.constant 0 : i32
    %c0_i32_0 = arith.constant 0 : i32
    %c0_i32_1 = arith.constant 0 : i32
    return %c0_i32, %c0_i32_0 : i32, i32
  }
  func.func @transform_9(%arg0: i32) -> (i32, i32) {
    %c0_i32 = arith.constant 0 : i32
    %c0_i32_0 = arith.constant 0 : i32
    %c0_i32_1 = arith.constant 0 : i32
    return %c0_i32, %c0_i32_0 : i32, i32
  }
  func.func @transform_10(%arg0: i32) -> (i32, i32) {
    %c0_i32 = arith.constant 0 : i32
    %c0_i32_0 = arith.constant 0 : i32
    %c0_i32_1 = arith.constant 0 : i32
    return %c0_i32, %c0_i32_0 : i32, i32
  }
  func.func @transform_13(%arg0: i32) -> (i32, i32) {
    %c0_i32 = arith.constant 0 : i32
    %c0_i32_0 = arith.constant 0 : i32
    %c0_i32_1 = arith.constant 0 : i32
    return %c0_i32, %c0_i32_0 : i32, i32
  }
}

</mosaic_0001>

<llo_original>
// kernel: aut_enc_e_forward.1
$region0: #{aut_enc_e_forward.1}
  #allocation0 [shape = 'u32[]', space=smem, size = 0x4, offset = 0x4, fixed_abs, tag = 'smem constant byte address 0x4 - core index']
  #allocation1 [shape = 'u32[144,128]{1,0:T(1,128)}', space=vmem, size = 0x12000, scoped, tag = 'internal scratch']
  #allocation2 [shape = 'bf16[256,64]{1,0:T(8,128)(2,1)}', space=vmem, size = 0x10000, scoped, tag = 'scratch operand']
  #allocation3 [shape = 'bf16[1024,256]{1,0:T(8,128)(2,1)}', space=vmem, size = 0x80000, scoped, tag = 'scratch operand']
  #allocation4 [shape = 's32[2]{0}', space=sflag, size = 0x8, scoped, tag = 'scratch operand']
  #allocation7 [shape = 's32[]', space=sflag, size = 0x4, offset = 0, fixed_abs, tag = 'sflag constant byte address 0x0 - dummy sync flag']
  #allocation8 [shape = 's32[]', space=sflag, size = 0x4, offset = 0, fixed_abs, tag = 'sflag constant byte address 0x0 - dummy sync flag']
  #allocation9 [shape = 's32[]', space=sflag, size = 0x4, offset = 0, fixed_abs, tag = 'sflag constant byte address 0x0 - dummy sync flag']
  #allocation10 [shape = 'u32[]', space=smem, size = 0x4, offset = 0x44, fixed_abs, tag = 'smem constant byte address 0x44 - assertion arg 0']
  #allocation11 [shape = 'u32[]', space=smem, size = 0x4, offset = 0x48, fixed_abs, tag = 'smem constant byte address 0x48 - assertion arg 1']
  %s0 = inlined_call_operand.vmem [shape: f32[6,256], index: 0, kind: input, shape index: {}]
  %s1 = inlined_call_operand.hbm [shape: bf16[256,1024], index: 1, kind: input, shape index: {}]
  %s2 = inlined_call_operand.vmem [shape: f32[12,96], index: 2, kind: input, shape index: {}]
  %s3 = inlined_call_operand.vmem [shape: f32[12,1], index: 3, kind: input, shape index: {}]
  %s4 = inlined_call_operand.vmem [shape: bf16[64,256], index: 4, kind: input, shape index: {}]
  %s5 = inlined_call_operand.vmem [shape: f32[20,192], index: 5, kind: input, shape index: {}]
  %s6 = inlined_call_operand.vmem [shape: f32[20,1], index: 6, kind: input, shape index: {}]
  %s7 = inlined_call_operand.vmem [shape: f32[192,20], index: 7, kind: input, shape index: {}]
  %s8 = inlined_call_operand.vmem [shape: f32[12,1], index: 8, kind: input, shape index: {}]
  %s9 = inlined_call_operand.vmem [shape: f32[64,12], index: 9, kind: input, shape index: {}]
  %s10 = inlined_call_operand.vmem [shape: f32[4,1], index: 10, kind: input, shape index: {}]
  %s11 = inlined_call_operand.vmem [shape: bf16[256,64], index: 11, kind: input, shape index: {}]
  %s12 = inlined_call_operand.hbm [shape: bf16[1024,256], index: 12, kind: input, shape index: {}]
  %s13 = inlined_call_operand.vmem [shape: f32[4,256], index: 13, kind: output, shape index: {}]
  %s14 = sld [smem:[#allocation0]]
  $region96: #{aut_enc_e_forward.1} parent=0
    _
  %s16 = ssub.s32 1, %s14
  %s17 = scalar_select 0, %s16, %s14
  $region1: #{aut_enc_e_forward.1} parent=0
    #allocation5 [shape = 'u8[524288]{0}', space=vmem, size = 0x80000, scoped, tag = 'input window, operand 1, single buffered']
    #allocation6 [shape = 's32[1]{0}', space=sflag, size = 0x4, scoped, tag = 'scoped memory for aut_enc_e_forward.1']
    %18 = vsyncpa [#allocation6], 0
    // Predicated region
    $region2: #{aut_enc_e_forward.1} parent=1 // pred_check
      _
    $region3: #{aut_enc_e_forward.1} parent=1 // pred_check_branch
      %20 = sbr.rel (0) target = $region5
    $region4: #{aut_enc_e_forward.1} parent=1 // pred_region
      _
    $region5: #{aut_enc_e_forward.1} parent=1 // pred_fallthru
      _
    // Predicated region
    $region6: #{aut_enc_e_forward.1} parent=1 // pred_check
      _
    $region7: #{aut_enc_e_forward.1} parent=1 // pred_check_branch
      %22 = sbr.rel (0) target = $region9
    $region8: #{aut_enc_e_forward.1} parent=1 // pred_region
      %s24 = ssub.s32 16384, 16384
      %25 = vsyncadd [#allocation6], %s24
      %s26 = sshll.u32 [#allocation5], 4
      %s27 = int_to_ptr.vmem [resolvable:$true] %s26
      %32 = dma.hbm_to_vmem [thread:$0]  %s1, 16384, %s27, [#allocation6], 512, 512, 32
    $region9: #{aut_enc_e_forward.1} parent=1 // pred_fallthru
      _
    // Predicated region
    $region10: #{aut_enc_e_forward.1} parent=1 // pred_check
      _
    $region11: #{aut_enc_e_forward.1} parent=1 // pred_check_branch
      %34 = sbr.rel (0) target = $region13
    $region12: #{aut_enc_e_forward.1} parent=1 // pred_region
      _
    $region13: #{aut_enc_e_forward.1} parent=1 // pred_fallthru
      _
    // Predicated region
    $region14: #{aut_enc_e_forward.1} parent=1 // pred_check
      _
    $region15: #{aut_enc_e_forward.1} parent=1 // pred_check_branch
      %36 = sbr.rel (0) target = $region17
    $region16: #{aut_enc_e_forward.1} parent=1 // pred_region
      _
    $region17: #{aut_enc_e_forward.1} parent=1 // pred_fallthru
      _
    // Predicated region
    $region18: #{aut_enc_e_forward.1} parent=1 // pred_check
      _
    $region19: #{aut_enc_e_forward.1} parent=1 // pred_check_branch
      %38 = sbr.rel (0) target = $region21
    $region20: #{aut_enc_e_forward.1} parent=1 // pred_region
      _
    $region21: #{aut_enc_e_forward.1} parent=1 // pred_fallthru
      _
    // Predicated region
    $region22: #{aut_enc_e_forward.1} parent=1 // pred_check
      _
    $region23: #{aut_enc_e_forward.1} parent=1 // pred_check_branch
      %40 = sbr.rel (0) target = $region25
    $region24: #{aut_enc_e_forward.1} parent=1 // pred_region
      _
    $region25: #{aut_enc_e_forward.1} parent=1 // pred_fallthru
      _
    // Predicated region
    $region26: #{aut_enc_e_forward.1} parent=1 // pred_check
      _
    $region27: #{aut_enc_e_forward.1} parent=1 // pred_check_branch
      %42 = sbr.rel (0) target = $region29
    $region28: #{aut_enc_e_forward.1} parent=1 // pred_region
      _
    $region29: #{aut_enc_e_forward.1} parent=1 // pred_fallthru
      _
    // Predicated region
    $region30: #{aut_enc_e_forward.1} parent=1 // pred_check
      _
    $region31: #{aut_enc_e_forward.1} parent=1 // pred_check_branch
      %44 = sbr.rel (0) target = $region33
    $region32: #{aut_enc_e_forward.1} parent=1 // pred_region
      _
    $region33: #{aut_enc_e_forward.1} parent=1 // pred_fallthru
      _
    // Predicated region
    $region34: #{aut_enc_e_forward.1} parent=1 // pred_check
      _
    $region35: #{aut_enc_e_forward.1} parent=1 // pred_check_branch
      %46 = sbr.rel (0) target = $region37
    $region36: #{aut_enc_e_forward.1} parent=1 // pred_region
      _
    $region37: #{aut_enc_e_forward.1} parent=1 // pred_fallthru
      _
    // Predicated region
    $region38: #{aut_enc_e_forward.1} parent=1 // pred_check
      _
    $region39: #{aut_enc_e_forward.1} parent=1 // pred_check_branch
      %48 = sbr.rel (0) target = $region41
    $region40: #{aut_enc_e_forward.1} parent=1 // pred_region
      _
    $region41: #{aut_enc_e_forward.1} parent=1 // pred_fallthru
      _
    // Predicated region
    $region42: #{aut_enc_e_forward.1} parent=1 // pred_check
      _
    $region43: #{aut_enc_e_forward.1} parent=1 // pred_check_branch
      %50 = sbr.rel (0) target = $region45
    $region44: #{aut_enc_e_forward.1} parent=1 // pred_region
      _
    $region45: #{aut_enc_e_forward.1} parent=1 // pred_fallthru
      _
    // Predicated region
    $region46: #{aut_enc_e_forward.1} parent=1 // pred_check
      _
    $region47: #{aut_enc_e_forward.1} parent=1 // pred_check_branch
      %52 = sbr.rel (0) target = $region49
    $region48: #{aut_enc_e_forward.1} parent=1 // pred_region
      %53 = dma.done [#allocation6], 16384
    $region49: #{aut_enc_e_forward.1} parent=1 // pred_fallthru
      _
    %p55 = scmp.lt.u32.totalorder 128, 8
    %p56 = pneg %p55
    // Predicated region
    $region50: #{aut_enc_e_forward.1} parent=1 // pred_check
      _
    $region51: #{aut_enc_e_forward.1} parent=1 // pred_check_branch
      %58 = sbr.rel (%p55) target = $region53
    $region52: #{aut_enc_e_forward.1} parent=1 // pred_region
      %s74 = sand.u32 128, 7
      %p75 = scmp.eq.s32.totalorder %s74, 0
      // Predicated region
      $region65: #{aut_enc_e_forward.1} parent=52 // pred_check
        %p76 = pneg %p75
      $region66: #{aut_enc_e_forward.1} parent=52 // pred_check_branch
        %78 = sbr.rel (%p76) target = $region68
      $region67: #{aut_enc_e_forward.1} parent=52 // pred_region
        loop: start=0, step=1, limit=1
        $region69: #{aut_enc_e_forward.1} parent=67 // loop_pre_header
          _
        $region70: #{aut_enc_e_forward.1} parent=67 // loop_header
          %s80 = sphi 0, %s84
          %p81 = scmp.ge.s32.totalorder %s80, 1
          %s85 = sphi %s11, %s11
          %s86 = sphi [#allocation2], [#allocation2]
        $region71: #{aut_enc_e_forward.1} parent=67 // loop_header_branch
          %83 = sbr.rel (%p81) target = $region75
        $region72: #{aut_enc_e_forward.1} parent=67 // loop_body
          %v87 = vld [vmem:[%s85] sm:$0xff]
          %88 = vst [vmem:[%s86] sm:$0xff] %v87
          %v89 = vld [vmem:[%s85 + $0x8] sm:$0xff]
          %90 = vst [vmem:[%s86 + $0x8] sm:$0xff] %v89
          %v91 = vld [vmem:[%s85 + $0x10] sm:$0xff]
          %92 = vst [vmem:[%s86 + $0x10] sm:$0xff] %v91
          %v93 = vld [vmem:[%s85 + $0x18] sm:$0xff]
          %94 = vst [vmem:[%s86 + $0x18] sm:$0xff] %v93
          %v95 = vld [vmem:[%s85 + $0x20] sm:$0xff]
          %96 = vst [vmem:[%s86 + $0x20] sm:$0xff] %v95
          %v97 = vld [vmem:[%s85 + $0x28] sm:$0xff]
          %98 = vst [vmem:[%s86 + $0x28] sm:$0xff] %v97
          %v99 = vld [vmem:[%s85 + $0x30] sm:$0xff]
          %100 = vst [vmem:[%s86 + $0x30] sm:$0xff] %v99
          %v101 = vld [vmem:[%s85 + $0x38] sm:$0xff]
          %102 = vst [vmem:[%s86 + $0x38] sm:$0xff] %v101
          %v103 = vld [vmem:[%s85 + $0x40] sm:$0xff]
          %104 = vst [vmem:[%s86 + $0x40] sm:$0xff] %v103
          %v105 = vld [vmem:[%s85 + $0x48] sm:$0xff]
          %106 = vst [vmem:[%s86 + $0x48] sm:$0xff] %v105
          %v107 = vld [vmem:[%s85 + $0x50] sm:$0xff]
          %108 = vst [vmem:[%s86 + $0x50] sm:$0xff] %v107
          %v109 = vld [vmem:[%s85 + $0x58] sm:$0xff]
          %110 = vst [vmem:[%s86 + $0x58] sm:$0xff] %v109
          %v111 = vld [vmem:[%s85 + $0x60] sm:$0xff]
          %112 = vst [vmem:[%s86 + $0x60] sm:$0xff] %v111
          %v113 = vld [vmem:[%s85 + $0x68] sm:$0xff]
          %114 = vst [vmem:[%s86 + $0x68] sm:$0xff] %v113
          %v115 = vld [vmem:[%s85 + $0x70] sm:$0xff]
          %116 = vst [vmem:[%s86 + $0x70] sm:$0xff] %v115
          %v117 = vld [vmem:[%s85 + $0x78] sm:$0xff]
          %118 = vst [vmem:[%s86 + $0x78] sm:$0xff] %v117
        $region73: #{aut_enc_e_forward.1} parent=67 // loop_footer
          %s84 = sadd.s32 1, %s80
        $region74: #{aut_enc_e_forward.1} parent=67 // loop_footer_branch
          %79 = sbr.rel target = $region70
        $region75: #{aut_enc_e_forward.1} parent=67 // loop_exit
          _
      $region68: #{aut_enc_e_forward.1} parent=52 // pred_fallthru
        _
      %p119 = pneg %p75
      // Predicated region
      $region76: #{aut_enc_e_forward.1} parent=52 // pred_check
        _
      $region77: #{aut_enc_e_forward.1} parent=52 // pred_check_branch
        %121 = sbr.rel (%p75) target = $region79
      $region78: #{aut_enc_e_forward.1} parent=52 // pred_region
        %s122 = sand.u32 128, 7
      $region79: #{aut_enc_e_forward.1} parent=52 // pred_fallthru
        _
    $region53: #{aut_enc_e_forward.1} parent=1 // pred_fallthru
      _
    // Predicated region
    $region54: #{aut_enc_e_forward.1} parent=1 // pred_check
      %p59 = pneg %p55
    $region55: #{aut_enc_e_forward.1} parent=1 // pred_check_branch
      %61 = sbr.rel (%p59) target = $region57
    $region56: #{aut_enc_e_forward.1} parent=1 // pred_region
      %s62 = sshll.u32 1, 128
      %s63 = ssub.s32 %s62, 1
      loop: start=0, step=1, limit=1
      $region58: #{aut_enc_e_forward.1} parent=56 // loop_pre_header
        _
      $region59: #{aut_enc_e_forward.1} parent=56 // loop_header
        %s65 = sphi 0, %s69
        %p66 = scmp.ge.s32.totalorder %s65, 1
        %s70 = sphi %s11, %s11
        %s71 = sphi [#allocation2], [#allocation2]
      $region60: #{aut_enc_e_forward.1} parent=56 // loop_header_branch
        %68 = sbr.rel (%p66) target = $region64
      $region61: #{aut_enc_e_forward.1} parent=56 // loop_body
        %v72 = vld [vmem:[%s70] sm:%s63]
        %73 = vst [vmem:[%s71] sm:%s63] %v72
      $region62: #{aut_enc_e_forward.1} parent=56 // loop_footer
        %s69 = sadd.s32 1, %s65
      $region63: #{aut_enc_e_forward.1} parent=56 // loop_footer_branch
        %64 = sbr.rel target = $region59
      $region64: #{aut_enc_e_forward.1} parent=56 // loop_exit
        _
    $region57: #{aut_enc_e_forward.1} parent=1 // pred_fallthru
      _
    // Predicated region
    $region80: #{aut_enc_e_forward.1} parent=1 // pred_check
      _
    $region81: #{aut_enc_e_forward.1} parent=1 // pred_check_branch
      %125 = sbr.rel (0) target = $region83
    $region82: #{aut_enc_e_forward.1} parent=1 // pred_region
      %126 = vsyncadd [#allocation4], 2048
    $region83: #{aut_enc_e_forward.1} parent=1 // pred_fallthru
      _
    %s127 = scalar_lea.sflag [#allocation4], 1
    // Predicated region
    $region84: #{aut_enc_e_forward.1} parent=1 // pred_check
      _
    $region85: #{aut_enc_e_forward.1} parent=1 // pred_check_branch
      %129 = sbr.rel target = $region87
    $region86: #{aut_enc_e_forward.1} parent=1 // pred_region
      %130 = sst [smem:[#allocation10]] [#allocation9]
      %131 = sst [smem:[#allocation11]] [#allocation8]
    $region87: #{aut_enc_e_forward.1} parent=1 // pred_fallthru
      _
    %133 = shalt.err (0)
    %s135 = sshll.u32 [#allocation3], 4
    %s136 = int_to_ptr.vmem [resolvable:$true] %s135
    %138 = dma.hbm_to_vmem [thread:$0]  %s12, 16384, %s136, %s127
    %v139 = vld [vmem:[%s0] sm:$0x3f]
    %v140 = vld [vmem:[%s0 + $0x8] sm:$0x3f]
    %v141 = vld [vmem:[#allocation5] sm:$0xff]
    %v142 = vld [vmem:[#allocation5 + $0x8] sm:$0xff]
    %v143 = vld [vmem:[#allocation5 + $0x10] sm:$0xff]
    %v144 = vld [vmem:[#allocation5 + $0x18] sm:$0xff]
    %v145 = vld [vmem:[#allocation5 + $0x20] sm:$0xff]
    %v146 = vld [vmem:[#allocation5 + $0x28] sm:$0xff]
    %v147 = vld [vmem:[#allocation5 + $0x30] sm:$0xff]
    %v148 = vld [vmem:[#allocation5 + $0x38] sm:$0xff]
    %v149 = vld [vmem:[#allocation5 + $0x40] sm:$0xff]
    %v150 = vld [vmem:[#allocation5 + $0x48] sm:$0xff]
    %v151 = vld [vmem:[#allocation5 + $0x50] sm:$0xff]
    %v152 = vld [vmem:[#allocation5 + $0x58] sm:$0xff]
    %v153 = vld [vmem:[#allocation5 + $0x60] sm:$0xff]
    %v154 = vld [vmem:[#allocation5 + $0x68] sm:$0xff]
    %v155 = vld [vmem:[#allocation5 + $0x70] sm:$0xff]
    %v156 = vld [vmem:[#allocation5 + $0x78] sm:$0xff]
    %v157 = vld [vmem:[#allocation5 + $0x80] sm:$0xff]
    %v158 = vld [vmem:[#allocation5 + $0x88] sm:$0xff]
    %v159 = vld [vmem:[#allocation5 + $0x90] sm:$0xff]
    %v160 = vld [vmem:[#allocation5 + $0x98] sm:$0xff]
    %v161 = vld [vmem:[#allocation5 + $0xa0] sm:$0xff]
    %v162 = vld [vmem:[#allocation5 + $0xa8] sm:$0xff]
    %v163 = vld [vmem:[#allocation5 + $0xb0] sm:$0xff]
    %v164 = vld [vmem:[#allocation5 + $0xb8] sm:$0xff]
    %v165 = vld [vmem:[#allocation5 + $0xc0] sm:$0xff]
    %v166 = vld [vmem:[#allocation5 + $0xc8] sm:$0xff]
    %v167 = vld [vmem:[#allocation5 + $0xd0] sm:$0xff]
    %v168 = vld [vmem:[#allocation5 + $0xd8] sm:$0xff]
    %v169 = vld [vmem:[#allocation5 + $0xe0] sm:$0xff]
    %v170 = vld [vmem:[#allocation5 + $0xe8] sm:$0xff]
    %v171 = vld [vmem:[#allocation5 + $0xf0] sm:$0xff]
    %v172 = vld [vmem:[#allocation5 + $0xf8] sm:$0xff]
    %v173 = vld [vmem:[#allocation5 + $0x100] sm:$0xff]
    %v174 = vld [vmem:[#allocation5 + $0x108] sm:$0xff]
    %v175 = vld [vmem:[#allocation5 + $0x110] sm:$0xff]
    %v176 = vld [vmem:[#allocation5 + $0x118] sm:$0xff]
    %v177 = vld [vmem:[#allocation5 + $0x120] sm:$0xff]
    %v178 = vld [vmem:[#allocation5 + $0x128] sm:$0xff]
    %v179 = vld [vmem:[#allocation5 + $0x130] sm:$0xff]
    %v180 = vld [vmem:[#allocation5 + $0x138] sm:$0xff]
    %v181 = vld [vmem:[#allocation5 + $0x140] sm:$0xff]
    %v182 = vld [vmem:[#allocation5 + $0x148] sm:$0xff]
    %v183 = vld [vmem:[#allocation5 + $0x150] sm:$0xff]
    %v184 = vld [vmem:[#allocation5 + $0x158] sm:$0xff]
    %v185 = vld [vmem:[#allocation5 + $0x160] sm:$0xff]
    %v186 = vld [vmem:[#allocation5 + $0x168] sm:$0xff]
    %v187 = vld [vmem:[#allocation5 + $0x170] sm:$0xff]
    %v188 = vld [vmem:[#allocation5 + $0x178] sm:$0xff]
    %v189 = vld [vmem:[#allocation5 + $0x180] sm:$0xff]
    %v190 = vld [vmem:[#allocation5 + $0x188] sm:$0xff]
    %v191 = vld [vmem:[#allocation5 + $0x190] sm:$0xff]
    %v192 = vld [vmem:[#allocation5 + $0x198] sm:$0xff]
    %v193 = vld [vmem:[#allocation5 + $0x1a0] sm:$0xff]
    %v194 = vld [vmem:[#allocation5 + $0x1a8] sm:$0xff]
    %v195 = vld [vmem:[#allocation5 + $0x1b0] sm:$0xff]
    %v196 = vld [vmem:[#allocation5 + $0x1b8] sm:$0xff]
    %v197 = vld [vmem:[#allocation5 + $0x1c0] sm:$0xff]
    %v198 = vld [vmem:[#allocation5 + $0x1c8] sm:$0xff]
    %v199 = vld [vmem:[#allocation5 + $0x1d0] sm:$0xff]
    %v200 = vld [vmem:[#allocation5 + $0x1d8] sm:$0xff]
    %v201 = vld [vmem:[#allocation5 + $0x1e0] sm:$0xff]
    %v202 = vld [vmem:[#allocation5 + $0x1e8] sm:$0xff]
    %v203 = vld [vmem:[#allocation5 + $0x1f0] sm:$0xff]
    %v204 = vld [vmem:[#allocation5 + $0x1f8] sm:$0xff]
    %v205 = vld [vmem:[#allocation5 + $0x200] sm:$0xff]
    %v206 = vld [vmem:[#allocation5 + $0x208] sm:$0xff]
    %v207 = vld [vmem:[#allocation5 + $0x210] sm:$0xff]
    %v208 = vld [vmem:[#allocation5 + $0x218] sm:$0xff]
    %v209 = vld [vmem:[#allocation5 + $0x220] sm:$0xff]
    %v210 = vld [vmem:[#allocation5 + $0x228] sm:$0xff]
    %v211 = vld [vmem:[#allocation5 + $0x230] sm:$0xff]
    %v212 = vld [vmem:[#allocation5 + $0x238] sm:$0xff]
    %v213 = vld [vmem:[#allocation5 + $0x240] sm:$0xff]
    %v214 = vld [vmem:[#allocation5 + $0x248] sm:$0xff]
    %v215 = vld [vmem:[#allocation5 + $0x250] sm:$0xff]
    %v216 = vld [vmem:[#allocation5 + $0x258] sm:$0xff]
    %v217 = vld [vmem:[#allocation5 + $0x260] sm:$0xff]
    %v218 = vld [vmem:[#allocation5 + $0x268] sm:$0xff]
    %v219 = vld [vmem:[#allocation5 + $0x270] sm:$0xff]
    %v220 = vld [vmem:[#allocation5 + $0x278] sm:$0xff]
    %v221 = vld [vmem:[#allocation5 + $0x280] sm:$0xff]
    %v222 = vld [vmem:[#allocation5 + $0x288] sm:$0xff]
    %v223 = vld [vmem:[#allocation5 + $0x290] sm:$0xff]
    %v224 = vld [vmem:[#allocation5 + $0x298] sm:$0xff]
    %v225 = vld [vmem:[#allocation5 + $0x2a0] sm:$0xff]
    %v226 = vld [vmem:[#allocation5 + $0x2a8] sm:$0xff]
    %v227 = vld [vmem:[#allocation5 + $0x2b0] sm:$0xff]
    %v228 = vld [vmem:[#allocation5 + $0x2b8] sm:$0xff]
    %v229 = vld [vmem:[#allocation5 + $0x2c0] sm:$0xff]
    %v230 = vld [vmem:[#allocation5 + $0x2c8] sm:$0xff]
    %v231 = vld [vmem:[#allocation5 + $0x2d0] sm:$0xff]
    %v232 = vld [vmem:[#allocation5 + $0x2d8] sm:$0xff]
    %v233 = vld [vmem:[#allocation5 + $0x2e0] sm:$0xff]
    %v234 = vld [vmem:[#allocation5 + $0x2e8] sm:$0xff]
    %v235 = vld [vmem:[#allocation5 + $0x2f0] sm:$0xff]
    %v236 = vld [vmem:[#allocation5 + $0x2f8] sm:$0xff]
    %v237 = vld [vmem:[#allocation5 + $0x300] sm:$0xff]
    %v238 = vld [vmem:[#allocation5 + $0x308] sm:$0xff]
    %v239 = vld [vmem:[#allocation5 + $0x310] sm:$0xff]
    %v240 = vld [vmem:[#allocation5 + $0x318] sm:$0xff]
    %v241 = vld [vmem:[#allocation5 + $0x320] sm:$0xff]
    %v242 = vld [vmem:[#allocation5 + $0x328] sm:$0xff]
    %v243 = vld [vmem:[#allocation5 + $0x330] sm:$0xff]
    %v244 = vld [vmem:[#allocation5 + $0x338] sm:$0xff]
    %v245 = vld [vmem:[#allocation5 + $0x340] sm:$0xff]
    %v246 = vld [vmem:[#allocation5 + $0x348] sm:$0xff]
    %v247 = vld [vmem:[#allocation5 + $0x350] sm:$0xff]
    %v248 = vld [vmem:[#allocation5 + $0x358] sm:$0xff]
    %v249 = vld [vmem:[#allocation5 + $0x360] sm:$0xff]
    %v250 = vld [vmem:[#allocation5 + $0x368] sm:$0xff]
    %v251 = vld [vmem:[#allocation5 + $0x370] sm:$0xff]
    %v252 = vld [vmem:[#allocation5 + $0x378] sm:$0xff]
    %v253 = vld [vmem:[#allocation5 + $0x380] sm:$0xff]
    %v254 = vld [vmem:[#allocation5 + $0x388] sm:$0xff]
    %v255 = vld [vmem:[#allocation5 + $0x390] sm:$0xff]
    %v256 = vld [vmem:[#allocation5 + $0x398] sm:$0xff]
    %v257 = vld [vmem:[#allocation5 + $0x3a0] sm:$0xff]
    %v258 = vld [vmem:[#allocation5 + $0x3a8] sm:$0xff]
    %v259 = vld [vmem:[#allocation5 + $0x3b0] sm:$0xff]
    %v260 = vld [vmem:[#allocation5 + $0x3b8] sm:$0xff]
    %v261 = vld [vmem:[#allocation5 + $0x3c0] sm:$0xff]
    %v262 = vld [vmem:[#allocation5 + $0x3c8] sm:$0xff]
    %v263 = vld [vmem:[#allocation5 + $0x3d0] sm:$0xff]
    %v264 = vld [vmem:[#allocation5 + $0x3d8] sm:$0xff]
    %v265 = vld [vmem:[#allocation5 + $0x3e0] sm:$0xff]
    %v266 = vld [vmem:[#allocation5 + $0x3e8] sm:$0xff]
    %v267 = vld [vmem:[#allocation5 + $0x3f0] sm:$0xff]
    %v268 = vld [vmem:[#allocation5 + $0x3f8] sm:$0xff]
    %v269 = vld [vmem:[%s2] sm:$0xff]
    %v270 = vld [vmem:[%s2 + $0x8] sm:$0xf]
    %v271 = vld [vmem:[%s3] sm:$0xff]
    %v272 = vld [vmem:[%s3 + $0x8] sm:$0xf]
    %v273 = vunpack.c.l.bf16 %v141
    %v274 = vunpack.c.h.bf16 %v141
    %v275 = vunpack.c.l.bf16 %v142
    %v276 = vunpack.c.h.bf16 %v142
    %v277 = vunpack.c.l.bf16 %v143
    %v278 = vunpack.c.h.bf16 %v143
    %v279 = vunpack.c.l.bf16 %v144
    %v280 = vunpack.c.h.bf16 %v144
    %v281 = vunpack.c.l.bf16 %v145
    %v282 = vunpack.c.h.bf16 %v145
    %v283 = vunpack.c.l.bf16 %v146
    %v284 = vunpack.c.h.bf16 %v146
    %v285 = vunpack.c.l.bf16 %v147
    %v286 = vunpack.c.h.bf16 %v147
    %v287 = vunpack.c.l.bf16 %v148
    %v288 = vunpack.c.h.bf16 %v148
    %v289 = vunpack.c.l.bf16 %v149
    %v290 = vunpack.c.h.bf16 %v149
    %v291 = vunpack.c.l.bf16 %v150
    %v292 = vunpack.c.h.bf16 %v150
    %v293 = vunpack.c.l.bf16 %v151
    %v294 = vunpack.c.h.bf16 %v151
    %v295 = vunpack.c.l.bf16 %v152
    %v296 = vunpack.c.h.bf16 %v152
    %v297 = vunpack.c.l.bf16 %v153
    %v298 = vunpack.c.h.bf16 %v153
    %v299 = vunpack.c.l.bf16 %v154
    %v300 = vunpack.c.h.bf16 %v154
    %v301 = vunpack.c.l.bf16 %v155
    %v302 = vunpack.c.h.bf16 %v155
    %v303 = vunpack.c.l.bf16 %v156
    %v304 = vunpack.c.h.bf16 %v156
    %v305 = vunpack.c.l.bf16 %v157
    %v306 = vunpack.c.h.bf16 %v157
    %v307 = vunpack.c.l.bf16 %v158
    %v308 = vunpack.c.h.bf16 %v158
    %v309 = vunpack.c.l.bf16 %v159
    %v310 = vunpack.c.h.bf16 %v159
    %v311 = vunpack.c.l.bf16 %v160
    %v312 = vunpack.c.h.bf16 %v160
    %v313 = vunpack.c.l.bf16 %v161
    %v314 = vunpack.c.h.bf16 %v161
    %v315 = vunpack.c.l.bf16 %v162
    %v316 = vunpack.c.h.bf16 %v162
    %v317 = vunpack.c.l.bf16 %v163
    %v318 = vunpack.c.h.bf16 %v163
    %v319 = vunpack.c.l.bf16 %v164
    %v320 = vunpack.c.h.bf16 %v164
    %v321 = vunpack.c.l.bf16 %v165
    %v322 = vunpack.c.h.bf16 %v165
    %v323 = vunpack.c.l.bf16 %v166
    %v324 = vunpack.c.h.bf16 %v166
    %v325 = vunpack.c.l.bf16 %v167
    %v326 = vunpack.c.h.bf16 %v167
    %v327 = vunpack.c.l.bf16 %v168
    %v328 = vunpack.c.h.bf16 %v168
    %v329 = vunpack.c.l.bf16 %v169
    %v330 = vunpack.c.h.bf16 %v169
    %v331 = vunpack.c.l.bf16 %v170
    %v332 = vunpack.c.h.bf16 %v170
    %v333 = vunpack.c.l.bf16 %v171
    %v334 = vunpack.c.h.bf16 %v171
    %v335 = vunpack.c.l.bf16 %v172
    %v336 = vunpack.c.h.bf16 %v172
    %v337 = vunpack.c.l.bf16 %v173
    %v338 = vunpack.c.h.bf16 %v173
    %v339 = vunpack.c.l.bf16 %v174
    %v340 = vunpack.c.h.bf16 %v174
    %v341 = vunpack.c.l.bf16 %v175
    %v342 = vunpack.c.h.bf16 %v175
    %v343 = vunpack.c.l.bf16 %v176
    %v344 = vunpack.c.h.bf16 %v176
    %v345 = vunpack.c.l.bf16 %v177
    %v346 = vunpack.c.h.bf16 %v177
    %v347 = vunpack.c.l.bf16 %v178
    %v348 = vunpack.c.h.bf16 %v178
    %v349 = vunpack.c.l.bf16 %v179
    %v350 = vunpack.c.h.bf16 %v179
    %v351 = vunpack.c.l.bf16 %v180
    %v352 = vunpack.c.h.bf16 %v180
    %v353 = vunpack.c.l.bf16 %v181
    %v354 = vunpack.c.h.bf16 %v181
    %v355 = vunpack.c.l.bf16 %v182
    %v356 = vunpack.c.h.bf16 %v182
    %v357 = vunpack.c.l.bf16 %v183
    %v358 = vunpack.c.h.bf16 %v183
    %v359 = vunpack.c.l.bf16 %v184
    %v360 = vunpack.c.h.bf16 %v184
    %v361 = vunpack.c.l.bf16 %v185
    %v362 = vunpack.c.h.bf16 %v185
    %v363 = vunpack.c.l.bf16 %v186
    %v364 = vunpack.c.h.bf16 %v186
    %v365 = vunpack.c.l.bf16 %v187
    %v366 = vunpack.c.h.bf16 %v187
    %v367 = vunpack.c.l.bf16 %v188
    %v368 = vunpack.c.h.bf16 %v188
    %v369 = vunpack.c.l.bf16 %v189
    %v370 = vunpack.c.h.bf16 %v189
    %v371 = vunpack.c.l.bf16 %v190
    %v372 = vunpack.c.h.bf16 %v190
    %v373 = vunpack.c.l.bf16 %v191
    %v374 = vunpack.c.h.bf16 %v191
    %v375 = vunpack.c.l.bf16 %v192
    %v376 = vunpack.c.h.bf16 %v192
    %v377 = vunpack.c.l.bf16 %v193
    %v378 = vunpack.c.h.bf16 %v193
    %v379 = vunpack.c.l.bf16 %v194
    %v380 = vunpack.c.h.bf16 %v194
    %v381 = vunpack.c.l.bf16 %v195
    %v382 = vunpack.c.h.bf16 %v195
    %v383 = vunpack.c.l.bf16 %v196
    %v384 = vunpack.c.h.bf16 %v196
    %v385 = vunpack.c.l.bf16 %v197
    %v386 = vunpack.c.h.bf16 %v197
    %v387 = vunpack.c.l.bf16 %v198
    %v388 = vunpack.c.h.bf16 %v198
    %v389 = vunpack.c.l.bf16 %v199
    %v390 = vunpack.c.h.bf16 %v199
    %v391 = vunpack.c.l.bf16 %v200
    %v392 = vunpack.c.h.bf16 %v200
    %v393 = vunpack.c.l.bf16 %v201
    %v394 = vunpack.c.h.bf16 %v201
    %v395 = vunpack.c.l.bf16 %v202
    %v396 = vunpack.c.h.bf16 %v202
    %v397 = vunpack.c.l.bf16 %v203
    %v398 = vunpack.c.h.bf16 %v203
    %v399 = vunpack.c.l.bf16 %v204
    %v400 = vunpack.c.h.bf16 %v204
    %v401 = vunpack.c.l.bf16 %v205
    %v402 = vunpack.c.h.bf16 %v205
    %v403 = vunpack.c.l.bf16 %v206
    %v404 = vunpack.c.h.bf16 %v206
    %v405 = vunpack.c.l.bf16 %v207
    %v406 = vunpack.c.h.bf16 %v207
    %v407 = vunpack.c.l.bf16 %v208
    %v408 = vunpack.c.h.bf16 %v208
    %v409 = vunpack.c.l.bf16 %v209
    %v410 = vunpack.c.h.bf16 %v209
    %v411 = vunpack.c.l.bf16 %v210
    %v412 = vunpack.c.h.bf16 %v210
    %v413 = vunpack.c.l.bf16 %v211
    %v414 = vunpack.c.h.bf16 %v211
    %v415 = vunpack.c.l.bf16 %v212
    %v416 = vunpack.c.h.bf16 %v212
    %v417 = vunpack.c.l.bf16 %v213
    %v418 = vunpack.c.h.bf16 %v213
    %v419 = vunpack.c.l.bf16 %v214
    %v420 = vunpack.c.h.bf16 %v214
    %v421 = vunpack.c.l.bf16 %v215
    %v422 = vunpack.c.h.bf16 %v215
    %v423 = vunpack.c.l.bf16 %v216
    %v424 = vunpack.c.h.bf16 %v216
    %v425 = vunpack.c.l.bf16 %v217
    %v426 = vunpack.c.h.bf16 %v217
    %v427 = vunpack.c.l.bf16 %v218
    %v428 = vunpack.c.h.bf16 %v218
    %v429 = vunpack.c.l.bf16 %v219
    %v430 = vunpack.c.h.bf16 %v219
    %v431 = vunpack.c.l.bf16 %v220
    %v432 = vunpack.c.h.bf16 %v220
    %v433 = vunpack.c.l.bf16 %v221
    %v434 = vunpack.c.h.bf16 %v221
    %v435 = vunpack.c.l.bf16 %v222
    %v436 = vunpack.c.h.bf16 %v222
    %v437 = vunpack.c.l.bf16 %v223
    %v438 = vunpack.c.h.bf16 %v223
    %v439 = vunpack.c.l.bf16 %v224
    %v440 = vunpack.c.h.bf16 %v224
    %v441 = vunpack.c.l.bf16 %v225
    %v442 = vunpack.c.h.bf16 %v225
    %v443 = vunpack.c.l.bf16 %v226
    %v444 = vunpack.c.h.bf16 %v226
    %v445 = vunpack.c.l.bf16 %v227
    %v446 = vunpack.c.h.bf16 %v227
    %v447 = vunpack.c.l.bf16 %v228
    %v448 = vunpack.c.h.bf16 %v228
    %v449 = vunpack.c.l.bf16 %v229
    %v450 = vunpack.c.h.bf16 %v229
    %v451 = vunpack.c.l.bf16 %v230
    %v452 = vunpack.c.h.bf16 %v230
    %v453 = vunpack.c.l.bf16 %v231
    %v454 = vunpack.c.h.bf16 %v231
    %v455 = vunpack.c.l.bf16 %v232
    %v456 = vunpack.c.h.bf16 %v232
    %v457 = vunpack.c.l.bf16 %v233
    %v458 = vunpack.c.h.bf16 %v233
    %v459 = vunpack.c.l.bf16 %v234
    %v460 = vunpack.c.h.bf16 %v234
    %v461 = vunpack.c.l.bf16 %v235
    %v462 = vunpack.c.h.bf16 %v235
    %v463 = vunpack.c.l.bf16 %v236
    %v464 = vunpack.c.h.bf16 %v236
    %v465 = vunpack.c.l.bf16 %v237
    %v466 = vunpack.c.h.bf16 %v237
    %v467 = vunpack.c.l.bf16 %v238
    %v468 = vunpack.c.h.bf16 %v238
    %v469 = vunpack.c.l.bf16 %v239
    %v470 = vunpack.c.h.bf16 %v239
    %v471 = vunpack.c.l.bf16 %v240
    %v472 = vunpack.c.h.bf16 %v240
    %v473 = vunpack.c.l.bf16 %v241
    %v474 = vunpack.c.h.bf16 %v241
    %v475 = vunpack.c.l.bf16 %v242
    %v476 = vunpack.c.h.bf16 %v242
    %v477 = vunpack.c.l.bf16 %v243
    %v478 = vunpack.c.h.bf16 %v243
    %v479 = vunpack.c.l.bf16 %v244
    %v480 = vunpack.c.h.bf16 %v244
    %v481 = vunpack.c.l.bf16 %v245
    %v482 = vunpack.c.h.bf16 %v245
    %v483 = vunpack.c.l.bf16 %v246
    %v484 = vunpack.c.h.bf16 %v246
    %v485 = vunpack.c.l.bf16 %v247
    %v486 = vunpack.c.h.bf16 %v247
    %v487 = vunpack.c.l.bf16 %v248
    %v488 = vunpack.c.h.bf16 %v248
    %v489 = vunpack.c.l.bf16 %v249
    %v490 = vunpack.c.h.bf16 %v249
    %v491 = vunpack.c.l.bf16 %v250
    %v492 = vunpack.c.h.bf16 %v250
    %v493 = vunpack.c.l.bf16 %v251
    %v494 = vunpack.c.h.bf16 %v251
    %v495 = vunpack.c.l.bf16 %v252
    %v496 = vunpack.c.h.bf16 %v252
    %v497 = vunpack.c.l.bf16 %v253
    %v498 = vunpack.c.h.bf16 %v253
    %v499 = vunpack.c.l.bf16 %v254
    %v500 = vunpack.c.h.bf16 %v254
    %v501 = vunpack.c.l.bf16 %v255
    %v502 = vunpack.c.h.bf16 %v255
    %v503 = vunpack.c.l.bf16 %v256
    %v504 = vunpack.c.h.bf16 %v256
    %v505 = vunpack.c.l.bf16 %v257
    %v506 = vunpack.c.h.bf16 %v257
    %v507 = vunpack.c.l.bf16 %v258
    %v508 = vunpack.c.h.bf16 %v258
    %v509 = vunpack.c.l.bf16 %v259
    %v510 = vunpack.c.h.bf16 %v259
    %v511 = vunpack.c.l.bf16 %v260
    %v512 = vunpack.c.h.bf16 %v260
    %v513 = vunpack.c.l.bf16 %v261
    %v514 = vunpack.c.h.bf16 %v261
    %v515 = vunpack.c.l.bf16 %v262
    %v516 = vunpack.c.h.bf16 %v262
    %v517 = vunpack.c.l.bf16 %v263
    %v518 = vunpack.c.h.bf16 %v263
    %v519 = vunpack.c.l.bf16 %v264
    %v520 = vunpack.c.h.bf16 %v264
    %v521 = vunpack.c.l.bf16 %v265
    %v522 = vunpack.c.h.bf16 %v265
    %v523 = vunpack.c.l.bf16 %v266
    %v524 = vunpack.c.h.bf16 %v266
    %v525 = vunpack.c.l.bf16 %v267
    %v526 = vunpack.c.h.bf16 %v267
    %v527 = vunpack.c.l.bf16 %v268
    %v528 = vunpack.c.h.bf16 %v268
    %529 = vmatprep.subr.mxu0 %v394
    %530 = vmatpush1.msra.mxu0 %v393
    %531 = vmatprep.subr.mxu0 %v386
    %532 = vmatpush1.msra.mxu0 %v385
    %533 = vmatprep.subr.mxu0 %v378
    %534 = vmatpush1.msra.mxu0 %v377
    %535 = vmatprep.subr.mxu0 %v370
    %536 = vmatpush1.msra.mxu0 %v369
    %537 = vmatprep.subr.mxu0 %v362
    %538 = vmatpush1.msra.mxu0 %v361
    %539 = vmatprep.subr.mxu0 %v354
    %540 = vmatpush1.msra.mxu0 %v353
    %541 = vmatprep.subr.mxu0 %v346
    %542 = vmatpush1.msra.mxu0 %v345
    %543 = vmatprep.subr.mxu0 %v338
    %544 = vmatpush1.msra.mxu0 %v337
    %545 = vmatprep.subr.mxu0 %v330
    %546 = vmatpush1.msra.mxu0 %v329
    %547 = vmatprep.subr.mxu0 %v322
    %548 = vmatpush1.msra.mxu0 %v321
    %549 = vmatprep.subr.mxu0 %v314
    %550 = vmatpush1.msra.mxu0 %v313
    %551 = vmatprep.subr.mxu0 %v306
    %552 = vmatpush1.msra.mxu0 %v305
    %553 = vmatprep.subr.mxu0 %v298
    %554 = vmatpush1.msra.mxu0 %v297
    %555 = vmatprep.subr.mxu0 %v290
    %556 = vmatpush1.msra.mxu0 %v289
    %557 = vmatprep.subr.mxu0 %v282
    %558 = vmatpush1.msra.mxu0 %v281
    %559 = vmatprep.subr.mxu0 %v274
    %560 = vmatpush1.msra.mxu0 %v273
    %561 = vmatprep.subr.mxu0 %v522
    %562 = vmatpush2.msra.mxu0 %v521
    %563 = vmatprep.subr.mxu0 %v514
    %564 = vmatpush2.msra.mxu0 %v513
    %565 = vmatprep.subr.mxu0 %v506
    %566 = vmatpush2.msra.mxu0 %v505
    %567 = vmatprep.subr.mxu0 %v498
    %568 = vmatpush2.msra.mxu0 %v497
    %569 = vmatprep.subr.mxu0 %v490
    %570 = vmatpush2.msra.mxu0 %v489
    %571 = vmatprep.subr.mxu0 %v482
    %572 = vmatpush2.msra.mxu0 %v481
    %573 = vmatprep.subr.mxu0 %v474
    %574 = vmatpush2.msra.mxu0 %v473
    %575 = vmatprep.subr.mxu0 %v466
    %576 = vmatpush2.msra.mxu0 %v465
    %577 = vmatprep.subr.mxu0 %v458
    %578 = vmatpush2.msra.mxu0 %v457
    %579 = vmatprep.subr.mxu0 %v450
    %580 = vmatpush2.msra.mxu0 %v449
    %581 = vmatprep.subr.mxu0 %v442
    %582 = vmatpush2.msra.mxu0 %v441
    %583 = vmatprep.subr.mxu0 %v434
    %584 = vmatpush2.msra.mxu0 %v433
    %585 = vmatprep.subr.mxu0 %v426
    %586 = vmatpush2.msra.mxu0 %v425
    %587 = vmatprep.subr.mxu0 %v418
    %588 = vmatpush2.msra.mxu0 %v417
    %589 = vmatprep.subr.mxu0 %v410
    %590 = vmatpush2.msra.mxu0 %v409
    %591 = vmatprep.subr.mxu0 %v402
    %592 = vmatpush2.msra.mxu0 %v401
    %593 = vmatprep.mubr.f32.mxu0 %v140
    %594 = vmatmul.mubr.f32.gmra.mxu0 %v139
    %v595 = vpop.f32.mrf.mxu0
    %v596 = vadd.f32 0.0, %v595
    %v597 = vpop.f32.mrf.mxu0
    %v598 = vadd.f32 0.0, %v597
    %599 = vdwg.mxu0
    %600 = vmatprep.subr.mxu0 %v396
    %601 = vmatpush1.msra.mxu0 %v395
    %602 = vmatprep.subr.mxu0 %v388
    %603 = vmatpush1.msra.mxu0 %v387
    %604 = vmatprep.subr.mxu0 %v380
    %605 = vmatpush1.msra.mxu0 %v379
    %606 = vmatprep.subr.mxu0 %v372
    %607 = vmatpush1.msra.mxu0 %v371
    %608 = vmatprep.subr.mxu0 %v364
    %609 = vmatpush1.msra.mxu0 %v363
    %610 = vmatprep.subr.mxu0 %v356
    %611 = vmatpush1.msra.mxu0 %v355
    %612 = vmatprep.subr.mxu0 %v348
    %613 = vmatpush1.msra.mxu0 %v347
    %614 = vmatprep.subr.mxu0 %v340
    %615 = vmatpush1.msra.mxu0 %v339
    %616 = vmatprep.subr.mxu0 %v332
    %617 = vmatpush1.msra.mxu0 %v331
    %618 = vmatprep.subr.mxu0 %v324
    %619 = vmatpush1.msra.mxu0 %v323
    %620 = vmatprep.subr.mxu0 %v316
    %621 = vmatpush1.msra.mxu0 %v315
    %622 = vmatprep.subr.mxu0 %v308
    %623 = vmatpush1.msra.mxu0 %v307
    %624 = vmatprep.subr.mxu0 %v300
    %625 = vmatpush1.msra.mxu0 %v299
    %626 = vmatprep.subr.mxu0 %v292
    %627 = vmatpush1.msra.mxu0 %v291
    %628 = vmatprep.subr.mxu0 %v284
    %629 = vmatpush1.msra.mxu0 %v283
    %630 = vmatprep.subr.mxu0 %v276
    %631 = vmatpush1.msra.mxu0 %v275
    %632 = vmatprep.subr.mxu0 %v524
    %633 = vmatpush2.msra.mxu0 %v523
    %634 = vmatprep.subr.mxu0 %v516
    %635 = vmatpush2.msra.mxu0 %v515
    %636 = vmatprep.subr.mxu0 %v508
    %637 = vmatpush2.msra.mxu0 %v507
    %638 = vmatprep.subr.mxu0 %v500
    %639 = vmatpush2.msra.mxu0 %v499
    %640 = vmatprep.subr.mxu0 %v492
    %641 = vmatpush2.msra.mxu0 %v491
    %642 = vmatprep.subr.mxu0 %v484
    %643 = vmatpush2.msra.mxu0 %v483
    %644 = vmatprep.subr.mxu0 %v476
    %645 = vmatpush2.msra.mxu0 %v475
    %646 = vmatprep.subr.mxu0 %v468
    %647 = vmatpush2.msra.mxu0 %v467
    %648 = vmatprep.subr.mxu0 %v460
    %649 = vmatpush2.msra.mxu0 %v459
    %650 = vmatprep.subr.mxu0 %v452
    %651 = vmatpush2.msra.mxu0 %v451
    %652 = vmatprep.subr.mxu0 %v444
    %653 = vmatpush2.msra.mxu0 %v443
    %654 = vmatprep.subr.mxu0 %v436
    %655 = vmatpush2.msra.mxu0 %v435
    %656 = vmatprep.subr.mxu0 %v428
    %657 = vmatpush2.msra.mxu0 %v427
    %658 = vmatprep.subr.mxu0 %v420
    %659 = vmatpush2.msra.mxu0 %v419
    %660 = vmatprep.subr.mxu0 %v412
    %661 = vmatpush2.msra.mxu0 %v411
    %662 = vmatprep.subr.mxu0 %v404
    %663 = vmatpush2.msra.mxu0 %v403
    %664 = vmatprep.mubr.f32.mxu0 %v140
    %665 = vmatmul.mubr.f32.gmra.mxu0 %v139
    %v666 = vpop.f32.mrf.mxu0
    %v667 = vadd.f32 0.0, %v666
    %v668 = vpop.f32.mrf.mxu0
    %v669 = vadd.f32 0.0, %v668
    %670 = vdwg.mxu0
    %671 = vmatprep.subr.mxu0 %v398
    %672 = vmatpush1.msra.mxu0 %v397
    %673 = vmatprep.subr.mxu0 %v390
    %674 = vmatpush1.msra.mxu0 %v389
    %675 = vmatprep.subr.mxu0 %v382
    %676 = vmatpush1.msra.mxu0 %v381
    %677 = vmatprep.subr.mxu0 %v374
    %678 = vmatpush1.msra.mxu0 %v373
    %679 = vmatprep.subr.mxu0 %v366
    %680 = vmatpush1.msra.mxu0 %v365
    %681 = vmatprep.subr.mxu0 %v358
    %682 = vmatpush1.msra.mxu0 %v357
    %683 = vmatprep.subr.mxu0 %v350
    %684 = vmatpush1.msra.mxu0 %v349
    %685 = vmatprep.subr.mxu0 %v342
    %686 = vmatpush1.msra.mxu0 %v341
    %687 = vmatprep.subr.mxu0 %v334
    %688 = vmatpush1.msra.mxu0 %v333
    %689 = vmatprep.subr.mxu0 %v326
    %690 = vmatpush1.msra.mxu0 %v325
    %691 = vmatprep.subr.mxu0 %v318
    %692 = vmatpush1.msra.mxu0 %v317
    %693 = vmatprep.subr.mxu0 %v310
    %694 = vmatpush1.msra.mxu0 %v309
    %695 = vmatprep.subr.mxu0 %v302
    %696 = vmatpush1.msra.mxu0 %v301
    %697 = vmatprep.subr.mxu0 %v294
    %698 = vmatpush1.msra.mxu0 %v293
    %699 = vmatprep.subr.mxu0 %v286
    %700 = vmatpush1.msra.mxu0 %v285
    %701 = vmatprep.subr.mxu0 %v278
    %702 = vmatpush1.msra.mxu0 %v277
    %703 = vmatprep.subr.mxu0 %v526
    %704 = vmatpush2.msra.mxu0 %v525
    %705 = vmatprep.subr.mxu0 %v518
    %706 = vmatpush2.msra.mxu0 %v517
    %707 = vmatprep.subr.mxu0 %v510
    %708 = vmatpush2.msra.mxu0 %v509
    %709 = vmatprep.subr.mxu0 %v502
    %710 = vmatpush2.msra.mxu0 %v501
    %711 = vmatprep.subr.mxu0 %v494
    %712 = vmatpush2.msra.mxu0 %v493
    %713 = vmatprep.subr.mxu0 %v486
    %714 = vmatpush2.msra.mxu0 %v485
    %715 = vmatprep.subr.mxu0 %v478
    %716 = vmatpush2.msra.mxu0 %v477
    %717 = vmatprep.subr.mxu0 %v470
    %718 = vmatpush2.msra.mxu0 %v469
    %719 = vmatprep.subr.mxu0 %v462
    %720 = vmatpush2.msra.mxu0 %v461
    %721 = vmatprep.subr.mxu0 %v454
    %722 = vmatpush2.msra.mxu0 %v453
    %723 = vmatprep.subr.mxu0 %v446
    %724 = vmatpush2.msra.mxu0 %v445
    %725 = vmatprep.subr.mxu0 %v438
    %726 = vmatpush2.msra.mxu0 %v437
    %727 = vmatprep.subr.mxu0 %v430
    %728 = vmatpush2.msra.mxu0 %v429
    %729 = vmatprep.subr.mxu0 %v422
    %730 = vmatpush2.msra.mxu0 %v421
    %731 = vmatprep.subr.mxu0 %v414
    %732 = vmatpush2.msra.mxu0 %v413
    %733 = vmatprep.subr.mxu0 %v406
    %734 = vmatpush2.msra.mxu0 %v405
    %735 = vmatprep.mubr.f32.mxu0 %v140
    %736 = vmatmul.mubr.f32.gmra.mxu0 %v139
    %v737 = vpop.f32.mrf.mxu0
    %v738 = vadd.f32 0.0, %v737
    %v739 = vpop.f32.mrf.mxu0
    %v740 = vadd.f32 0.0, %v739
    %741 = vdwg.mxu0
    %742 = vmatprep.subr.mxu0 %v400
    %743 = vmatpush1.msra.mxu0 %v399
    %744 = vmatprep.subr.mxu0 %v392
    %745 = vmatpush1.msra.mxu0 %v391
    %746 = vmatprep.subr.mxu0 %v384
    %747 = vmatpush1.msra.mxu0 %v383
    %748 = vmatprep.subr.mxu0 %v376
    %749 = vmatpush1.msra.mxu0 %v375
    %750 = vmatprep.subr.mxu0 %v368
    %751 = vmatpush1.msra.mxu0 %v367
    %752 = vmatprep.subr.mxu0 %v360
    %753 = vmatpush1.msra.mxu0 %v359
    %754 = vmatprep.subr.mxu0 %v352
    %755 = vmatpush1.msra.mxu0 %v351
    %756 = vmatprep.subr.mxu0 %v344
    %757 = vmatpush1.msra.mxu0 %v343
    %758 = vmatprep.subr.mxu0 %v336
    %759 = vmatpush1.msra.mxu0 %v335
    %760 = vmatprep.subr.mxu0 %v328
    %761 = vmatpush1.msra.mxu0 %v327
    %762 = vmatprep.subr.mxu0 %v320
    %763 = vmatpush1.msra.mxu0 %v319
    %764 = vmatprep.subr.mxu0 %v312
    %765 = vmatpush1.msra.mxu0 %v311
    %766 = vmatprep.subr.mxu0 %v304
    %767 = vmatpush1.msra.mxu0 %v303
    %768 = vmatprep.subr.mxu0 %v296
    %769 = vmatpush1.msra.mxu0 %v295
    %770 = vmatprep.subr.mxu0 %v288
    %771 = vmatpush1.msra.mxu0 %v287
    %772 = vmatprep.subr.mxu0 %v280
    %773 = vmatpush1.msra.mxu0 %v279
    %774 = vmatprep.subr.mxu0 %v528
    %775 = vmatpush2.msra.mxu0 %v527
    %776 = vmatprep.subr.mxu0 %v520
    %777 = vmatpush2.msra.mxu0 %v519
    %778 = vmatprep.subr.mxu0 %v512
    %779 = vmatpush2.msra.mxu0 %v511
    %780 = vmatprep.subr.mxu0 %v504
    %781 = vmatpush2.msra.mxu0 %v503
    %782 = vmatprep.subr.mxu0 %v496
    %783 = vmatpush2.msra.mxu0 %v495
    %784 = vmatprep.subr.mxu0 %v488
    %785 = vmatpush2.msra.mxu0 %v487
    %786 = vmatprep.subr.mxu0 %v480
    %787 = vmatpush2.msra.mxu0 %v479
    %788 = vmatprep.subr.mxu0 %v472
    %789 = vmatpush2.msra.mxu0 %v471
    %790 = vmatprep.subr.mxu0 %v464
    %791 = vmatpush2.msra.mxu0 %v463
    %792 = vmatprep.subr.mxu0 %v456
    %793 = vmatpush2.msra.mxu0 %v455
    %794 = vmatprep.subr.mxu0 %v448
    %795 = vmatpush2.msra.mxu0 %v447
    %796 = vmatprep.subr.mxu0 %v440
    %797 = vmatpush2.msra.mxu0 %v439
    %798 = vmatprep.subr.mxu0 %v432
    %799 = vmatpush2.msra.mxu0 %v431
    %800 = vmatprep.subr.mxu0 %v424
    %801 = vmatpush2.msra.mxu0 %v423
    %802 = vmatprep.subr.mxu0 %v416
    %803 = vmatpush2.msra.mxu0 %v415
    %804 = vmatprep.subr.mxu0 %v408
    %805 = vmatpush2.msra.mxu0 %v407
    %806 = vmatprep.mubr.f32.mxu0 %v140
    %807 = vmatmul.mubr.f32.gmra.mxu0 %v139
    %v808 = vpop.f32.mrf.mxu0
    %v809 = vadd.f32 0.0, %v808
    %v810 = vpop.f32.mrf.mxu0
    %v811 = vadd.f32 0.0, %v810
    %812 = vdwg.mxu0
    %v814 = vrot.slane %v596, 2
    %815 = vrot.lane.b32.xlu0 %v814, 64
    %v816 = vpop.permute.xlu0 %815
    %v819 = vrot.slane %v598, 4
    %v821 = vrot.slane %v598, 6
    %822 = vrot.lane.b32.xlu0 %v821, 64
    %v823 = vpop.permute.xlu0 %822
    %v826 = vrot.slane %v667, 2
    %827 = vrot.lane.b32.xlu0 %v826, 64
    %v828 = vpop.permute.xlu0 %827
    %v831 = vrot.slane %v669, 4
    %v833 = vrot.slane %v669, 6
    %834 = vrot.lane.b32.xlu0 %v833, 64
    %v835 = vpop.permute.xlu0 %834
    %v838 = vrot.slane %v738, 2
    %839 = vrot.lane.b32.xlu0 %v838, 64
    %v840 = vpop.permute.xlu0 %839
    %v843 = vrot.slane %v740, 4
    %v845 = vrot.slane %v740, 6
    %846 = vrot.lane.b32.xlu0 %v845, 64
    %v847 = vpop.permute.xlu0 %846
    %v850 = vrot.slane %v809, 2
    %851 = vrot.lane.b32.xlu0 %v850, 64
    %v852 = vpop.permute.xlu0 %851
    %v855 = vrot.slane %v811, 4
    %v857 = vrot.slane %v811, 6
    %858 = vrot.lane.b32.xlu0 %v857, 64
    %v859 = vpop.permute.xlu0 %858
    %vm861 = vcmask 1045504
    %v862 = vsel %vm861, %v596, %v816
    %vm863 = vcmask 1043456
    %v864 = vsel %vm863, %v816, %v819
    %vm865 = vcmask 1041408
    %v866 = vsel %vm865, %v819, %v823
    %v867 = vsel %vm861, %v667, %v828
    %v868 = vsel %vm863, %v828, %v831
    %v869 = vsel %vm865, %v831, %v835
    %v870 = vsel %vm861, %v738, %v840
    %v871 = vsel %vm863, %v840, %v843
    %v872 = vsel %vm865, %v843, %v847
    %v873 = vsel %vm861, %v809, %v852
    %v874 = vsel %vm863, %v852, %v855
    %v875 = vsel %vm865, %v855, %v859
    %877 = vset.pattern.permute.xlu0 0
    %878 = vperm.xlu0 %877, %v271
    %v879 = vpop.permute.xlu0 %878
    %882 = vset.pattern.permute.xlu0 0
    %883 = vperm.xlu0 %882, %v272
    %v884 = vpop.permute.xlu0 %883
    %vm886 = vcmask 785408
    %v888 = vsel %vm886, %v269, 0
    %v891 = vsel %vm886, %v270, 0
    %893 = vmatprep.subr.mxu0 0.0
    %894 = vmatpush1.msra.mxu0 0.0
    %895 = vmatprep.subr.mxu0 0.0
    %896 = vmatpush1.msra.mxu0 0.0
    %897 = vmatprep.subr.mxu0 0.0
    %898 = vmatpush1.msra.mxu0 0.0
    %899 = vmatprep.subr.mxu0 0.0
    %900 = vmatpush1.msra.mxu0 0.0
    %901 = vmatprep.subr.mxu0 0.0
    %902 = vmatpush1.msra.mxu0 %v875
    %903 = vmatprep.subr.mxu0 0.0
    %904 = vmatpush1.msra.mxu0 %v874
    %905 = vmatprep.subr.mxu0 0.0
    %906 = vmatpush1.msra.mxu0 %v873
    %907 = vmatprep.subr.mxu0 0.0
    %908 = vmatpush1.msra.mxu0 %v872
    %909 = vmatprep.subr.mxu0 0.0
    %910 = vmatpush1.msra.mxu0 %v871
    %911 = vmatprep.subr.mxu0 0.0
    %912 = vmatpush1.msra.mxu0 %v870
    %913 = vmatprep.subr.mxu0 0.0
    %914 = vmatpush1.msra.mxu0 %v869
    %915 = vmatprep.subr.mxu0 0.0
    %916 = vmatpush1.msra.mxu0 %v868
    %917 = vmatprep.subr.mxu0 0.0
    %918 = vmatpush1.msra.mxu0 %v867
    %919 = vmatprep.subr.mxu0 0.0
    %920 = vmatpush1.msra.mxu0 %v866
    %921 = vmatprep.subr.mxu0 0.0
    %922 = vmatpush1.msra.mxu0 %v864
    %923 = vmatprep.subr.mxu0 0.0
    %924 = vmatpush1.msra.mxu0 %v862
    %925 = vmatprep.subr.mxu0 0.0
    %926 = vmatpush2.msra.mxu0 0.0
    %927 = vmatprep.subr.mxu0 0.0
    %928 = vmatpush2.msra.mxu0 0.0
    %929 = vmatprep.subr.mxu0 0.0
    %930 = vmatpush2.msra.mxu0 0.0
    %931 = vmatprep.subr.mxu0 0.0
    %932 = vmatpush2.msra.mxu0 0.0
    %933 = vmatprep.subr.mxu0 0.0
    %934 = vmatpush2.msra.mxu0 0.0
    %935 = vmatprep.subr.mxu0 0.0
    %936 = vmatpush2.msra.mxu0 0.0
    %937 = vmatprep.subr.mxu0 0.0
    %938 = vmatpush2.msra.mxu0 0.0
    %939 = vmatprep.subr.mxu0 0.0
    %940 = vmatpush2.msra.mxu0 0.0
    %941 = vmatprep.subr.mxu0 0.0
    %942 = vmatpush2.msra.mxu0 0.0
    %943 = vmatprep.subr.mxu0 0.0
    %944 = vmatpush2.msra.mxu0 0.0
    %945 = vmatprep.subr.mxu0 0.0
    %946 = vmatpush2.msra.mxu0 0.0
    %947 = vmatprep.subr.mxu0 0.0
    %948 = vmatpush2.msra.mxu0 0.0
    %949 = vmatprep.subr.mxu0 0.0
    %950 = vmatpush2.msra.mxu0 0.0
    %951 = vmatprep.subr.mxu0 0.0
    %952 = vmatpush2.msra.mxu0 0.0
    %953 = vmatprep.subr.mxu0 0.0
    %954 = vmatpush2.msra.mxu0 0.0
    %955 = vmatprep.subr.mxu0 0.0
    %956 = vmatpush2.msra.mxu0 0.0
    %957 = vmatprep.mubr.f32.mxu0 0.0
    %958 = vmatmul.mubr.f32.gmra.mxu0 %v888
    %v959 = vpop.f32.mrf.mxu0
    %v960 = vadd.f32 %v879, %v959
    %v961 = vpop.f32.mrf.mxu0
    %962 = vmatprep.mubr.f32.mxu0 0.0
    %963 = vmatmul.mubr.f32.gmra.mxu0 %v891
    %v964 = vpop.f32.mrf.mxu0
    %v965 = vadd.f32 %v884, %v964
    %v966 = vpop.f32.mrf.mxu0
    %967 = vdwg.mxu0
    %v968 = vmax.f32 %v960, 0.0
    %v969 = vmax.f32 %v965, 0.0
    %v970 = vld [vmem:[%s4] sm:$0xff]
    %v971 = vld [vmem:[%s4 + $0x8] sm:$0xff]
    %v972 = vld [vmem:[%s4 + $0x10] sm:$0xff]
    %v973 = vld [vmem:[%s4 + $0x18] sm:$0xff]
    %v974 = vld [vmem:[%s4 + $0x20] sm:$0xff]
    %v975 = vld [vmem:[%s4 + $0x28] sm:$0xff]
    %v976 = vld [vmem:[%s4 + $0x30] sm:$0xff]
    %v977 = vld [vmem:[%s4 + $0x38] sm:$0xff]
    %v978 = vld [vmem:[%s5] sm:$0xff]
    %v979 = vld [vmem:[%s5 + $0x8] sm:$0xff]
    %v980 = vld [vmem:[%s5 + $0x10] sm:$0xff]
    %v981 = vld [vmem:[%s5 + $0x18] sm:$0xff]
    %v982 = vld [vmem:[%s5 + $0x20] sm:$0xf]
    %v983 = vld [vmem:[%s5 + $0x28] sm:$0xf]
    %v984 = vld [vmem:[%s6] sm:$0xff]
    %v985 = vld [vmem:[%s6 + $0x8] sm:$0xff]
    %v986 = vld [vmem:[%s6 + $0x10] sm:$0xf]
    %v987 = vunpack.c.l.bf16 %v970
    %v988 = vunpack.c.h.bf16 %v970
    %v989 = vunpack.c.l.bf16 %v971
    %v990 = vunpack.c.h.bf16 %v971
    %v991 = vunpack.c.l.bf16 %v972
    %v992 = vunpack.c.h.bf16 %v972
    %v993 = vunpack.c.l.bf16 %v973
    %v994 = vunpack.c.h.bf16 %v973
    %v995 = vunpack.c.l.bf16 %v974
    %v996 = vunpack.c.h.bf16 %v974
    %v997 = vunpack.c.l.bf16 %v975
    %v998 = vunpack.c.h.bf16 %v975
    %v999 = vunpack.c.l.bf16 %v976
    %v1000 = vunpack.c.h.bf16 %v976
    %v1001 = vunpack.c.l.bf16 %v977
    %v1002 = vunpack.c.h.bf16 %v977
    %vm1003 = vcmask 523264
    %v1005 = vsel %vm1003, %v968, 0
    %v1008 = vsel %vm1003, %v969, 0
    %1010 = vmatprep.subr.mxu0 0.0
    %1011 = vmatpush1.msra.mxu0 0.0
    %1012 = vmatprep.subr.mxu0 0.0
    %1013 = vmatpush1.msra.mxu0 0.0
    %1014 = vmatprep.subr.mxu0 0.0
    %1015 = vmatpush1.msra.mxu0 0.0
    %1016 = vmatprep.subr.mxu0 0.0
    %1017 = vmatpush1.msra.mxu0 0.0
    %1018 = vmatprep.subr.mxu0 0.0
    %1019 = vmatpush1.msra.mxu0 0.0
    %1020 = vmatprep.subr.mxu0 0.0
    %1021 = vmatpush1.msra.mxu0 0.0
    %1022 = vmatprep.subr.mxu0 0.0
    %1023 = vmatpush1.msra.mxu0 0.0
    %1024 = vmatprep.subr.mxu0 0.0
    %1025 = vmatpush1.msra.mxu0 0.0
    %1026 = vmatprep.subr.mxu0 %v1002
    %1027 = vmatpush1.msra.mxu0 %v1001
    %1028 = vmatprep.subr.mxu0 %v1000
    %1029 = vmatpush1.msra.mxu0 %v999
    %1030 = vmatprep.subr.mxu0 %v998
    %1031 = vmatpush1.msra.mxu0 %v997
    %1032 = vmatprep.subr.mxu0 %v996
    %1033 = vmatpush1.msra.mxu0 %v995
    %1034 = vmatprep.subr.mxu0 %v994
    %1035 = vmatpush1.msra.mxu0 %v993
    %1036 = vmatprep.subr.mxu0 %v992
    %1037 = vmatpush1.msra.mxu0 %v991
    %1038 = vmatprep.subr.mxu0 %v990
    %1039 = vmatpush1.msra.mxu0 %v989
    %1040 = vmatprep.subr.mxu0 %v988
    %1041 = vmatpush1.msra.mxu0 %v987
    %1042 = vmatprep.subr.mxu0 0.0
    %1043 = vmatpush2.msra.mxu0 0.0
    %1044 = vmatprep.subr.mxu0 0.0
    %1045 = vmatpush2.msra.mxu0 0.0
    %1046 = vmatprep.subr.mxu0 0.0
    %1047 = vmatpush2.msra.mxu0 0.0
    %1048 = vmatprep.subr.mxu0 0.0
    %1049 = vmatpush2.msra.mxu0 0.0
    %1050 = vmatprep.subr.mxu0 0.0
    %1051 = vmatpush2.msra.mxu0 0.0
    %1052 = vmatprep.subr.mxu0 0.0
    %1053 = vmatpush2.msra.mxu0 0.0
    %1054 = vmatprep.subr.mxu0 0.0
    %1055 = vmatpush2.msra.mxu0 0.0
    %1056 = vmatprep.subr.mxu0 0.0
    %1057 = vmatpush2.msra.mxu0 0.0
    %1058 = vmatprep.subr.mxu0 0.0
    %1059 = vmatpush2.msra.mxu0 0.0
    %1060 = vmatprep.subr.mxu0 0.0
    %1061 = vmatpush2.msra.mxu0 0.0
    %1062 = vmatprep.subr.mxu0 0.0
    %1063 = vmatpush2.msra.mxu0 0.0
    %1064 = vmatprep.subr.mxu0 0.0
    %1065 = vmatpush2.msra.mxu0 0.0
    %1066 = vmatprep.subr.mxu0 0.0
    %1067 = vmatpush2.msra.mxu0 0.0
    %1068 = vmatprep.subr.mxu0 0.0
    %1069 = vmatpush2.msra.mxu0 0.0
    %1070 = vmatprep.subr.mxu0 0.0
    %1071 = vmatpush2.msra.mxu0 0.0
    %1072 = vmatprep.subr.mxu0 0.0
    %1073 = vmatpush2.msra.mxu0 0.0
    %1074 = vmatprep.mubr.f32.mxu0 0.0
    %1075 = vmatmul.mubr.f32.gmra.mxu0 %v1005
    %v1076 = vpop.f32.mrf.mxu0
    %v1077 = vadd.f32 0.0, %v1076
    %v1078 = vpop.f32.mrf.mxu0
    %v1079 = vadd.f32 0.0, %v1078
    %1080 = vmatprep.mubr.f32.mxu0 0.0
    %1081 = vmatmul.mubr.f32.gmra.mxu0 %v1008
    %v1082 = vpop.f32.mrf.mxu0
    %v1083 = vadd.f32 0.0, %v1082
    %v1084 = vpop.f32.mrf.mxu0
    %v1085 = vadd.f32 0.0, %v1084
    %1086 = vdwg.mxu0
    %v1089 = vrot.slane %v1077, 4
    %v1090 = vrot.slane %v1083, 4
    %v1091 = vsel %vm863, %v1089, %v1090
    %1092 = vrot.lane.b32.xlu0 %v1089, 112
    %v1093 = vpop.permute.xlu0 %1092
    %1094 = vrot.lane.b32.xlu0 %v1091, 112
    %v1095 = vpop.permute.xlu0 %1094
    %1098 = vrot.lane.b32.xlu0 %v1077, 96
    %v1099 = vpop.permute.xlu0 %1098
    %1100 = vrot.lane.b32.xlu0 %v1083, 96
    %v1101 = vpop.permute.xlu0 %1100
    %1104 = vrot.lane.b32.xlu0 %v1089, 80
    %v1105 = vpop.permute.xlu0 %1104
    %1106 = vrot.lane.b32.xlu0 %v1091, 80
    %v1107 = vpop.permute.xlu0 %1106
    %1110 = vrot.lane.b32.xlu0 %v1077, 64
    %v1111 = vpop.permute.xlu0 %1110
    %1112 = vrot.lane.b32.xlu0 %v1083, 64
    %v1113 = vpop.permute.xlu0 %1112
    %1116 = vrot.lane.b32.xlu0 %v1089, 48
    %v1117 = vpop.permute.xlu0 %1116
    %1118 = vrot.lane.b32.xlu0 %v1091, 48
    %v1119 = vpop.permute.xlu0 %1118
    %1122 = vrot.lane.b32.xlu0 %v1077, 32
    %v1123 = vpop.permute.xlu0 %1122
    %1124 = vrot.lane.b32.xlu0 %v1083, 32
    %v1125 = vpop.permute.xlu0 %1124
    %1128 = vrot.lane.b32.xlu0 %v1089, 16
    %v1129 = vpop.permute.xlu0 %1128
    %1130 = vrot.lane.b32.xlu0 %v1091, 16
    %v1131 = vpop.permute.xlu0 %1130
    %v1136 = vrot.slane %v1079, 4
    %v1137 = vrot.slane %v1085, 4
    %v1138 = vsel %vm863, %v1136, %v1137
    %1139 = vrot.lane.b32.xlu0 %v1136, 112
    %v1140 = vpop.permute.xlu0 %1139
    %1141 = vrot.lane.b32.xlu0 %v1138, 112
    %v1142 = vpop.permute.xlu0 %1141
    %1145 = vrot.lane.b32.xlu0 %v1079, 96
    %v1146 = vpop.permute.xlu0 %1145
    %1147 = vrot.lane.b32.xlu0 %v1085, 96
    %v1148 = vpop.permute.xlu0 %1147
    %1151 = vrot.lane.b32.xlu0 %v1136, 80
    %v1152 = vpop.permute.xlu0 %1151
    %1153 = vrot.lane.b32.xlu0 %v1138, 80
    %v1154 = vpop.permute.xlu0 %1153
    %1157 = vrot.lane.b32.xlu0 %v1079, 64
    %v1158 = vpop.permute.xlu0 %1157
    %1159 = vrot.lane.b32.xlu0 %v1085, 64
    %v1160 = vpop.permute.xlu0 %1159
    %1163 = vrot.lane.b32.xlu0 %v1136, 48
    %v1164 = vpop.permute.xlu0 %1163
    %1165 = vrot.lane.b32.xlu0 %v1138, 48
    %v1166 = vpop.permute.xlu0 %1165
    %1169 = vrot.lane.b32.xlu0 %v1079, 32
    %v1170 = vpop.permute.xlu0 %1169
    %1171 = vrot.lane.b32.xlu0 %v1085, 32
    %v1172 = vpop.permute.xlu0 %1171
    %1175 = vrot.lane.b32.xlu0 %v1136, 16
    %v1176 = vpop.permute.xlu0 %1175
    %1177 = vrot.lane.b32.xlu0 %v1138, 16
    %v1178 = vpop.permute.xlu0 %1177
    %v1181 = vsel %vm863, %v1083, %v1093
    %v1182 = vsel %vm863, %v1101, %v1105
    %v1183 = vsel %vm863, %v1113, %v1117
    %v1184 = vsel %vm863, %v1125, %v1129
    %v1185 = vsel %vm863, %v1085, %v1140
    %v1186 = vsel %vm863, %v1148, %v1152
    %v1187 = vsel %vm863, %v1160, %v1164
    %v1188 = vsel %vm863, %v1172, %v1176
    %1190 = vset.pattern.permute.xlu0 0
    %1191 = vperm.xlu0 %1190, %v984
    %v1192 = vpop.permute.xlu0 %1191
    %1195 = vset.pattern.permute.xlu0 0
    %1196 = vperm.xlu0 %1195, %v985
    %v1197 = vpop.permute.xlu0 %1196
    %1200 = vset.pattern.permute.xlu0 0
    %1201 = vperm.xlu0 %1200, %v986
    %v1202 = vpop.permute.xlu0 %1201
    %v1205 = vsel %vm1003, %v979, 0
    %v1208 = vsel %vm1003, %v981, 0
    %v1211 = vsel %vm1003, %v983, 0
    %1213 = vmatprep.subr.mxu0 0.0
    %1214 = vmatpush1.msra.mxu0 %v1146
    %1215 = vmatprep.subr.mxu0 0.0
    %1216 = vmatpush1.msra.mxu0 %v1142
    %1217 = vmatprep.subr.mxu0 0.0
    %1218 = vmatpush1.msra.mxu0 %v1185
    %1219 = vmatprep.subr.mxu0 0.0
    %1220 = vmatpush1.msra.mxu0 %v1079
    %1221 = vmatprep.subr.mxu0 0.0
    %1222 = vmatpush1.msra.mxu0 %v1131
    %1223 = vmatprep.subr.mxu0 0.0
    %1224 = vmatpush1.msra.mxu0 %v1184
    %1225 = vmatprep.subr.mxu0 0.0
    %1226 = vmatpush1.msra.mxu0 %v1123
    %1227 = vmatprep.subr.mxu0 0.0
    %1228 = vmatpush1.msra.mxu0 %v1119
    %1229 = vmatprep.subr.mxu0 0.0
    %1230 = vmatpush1.msra.mxu0 %v1183
    %1231 = vmatprep.subr.mxu0 0.0
    %1232 = vmatpush1.msra.mxu0 %v1111
    %1233 = vmatprep.subr.mxu0 0.0
    %1234 = vmatpush1.msra.mxu0 %v1107
    %1235 = vmatprep.subr.mxu0 0.0
    %1236 = vmatpush1.msra.mxu0 %v1182
    %1237 = vmatprep.subr.mxu0 0.0
    %1238 = vmatpush1.msra.mxu0 %v1099
    %1239 = vmatprep.subr.mxu0 0.0
    %1240 = vmatpush1.msra.mxu0 %v1095
    %1241 = vmatprep.subr.mxu0 0.0
    %1242 = vmatpush1.msra.mxu0 %v1181
    %1243 = vmatprep.subr.mxu0 0.0
    %1244 = vmatpush1.msra.mxu0 %v1077
    %1245 = vmatprep.subr.mxu0 0.0
    %1246 = vmatpush2.msra.mxu0 0.0
    %1247 = vmatprep.subr.mxu0 0.0
    %1248 = vmatpush2.msra.mxu0 0.0
    %1249 = vmatprep.subr.mxu0 0.0
    %1250 = vmatpush2.msra.mxu0 0.0
    %1251 = vmatprep.subr.mxu0 0.0
    %1252 = vmatpush2.msra.mxu0 0.0
    %1253 = vmatprep.subr.mxu0 0.0
    %1254 = vmatpush2.msra.mxu0 0.0
    %1255 = vmatprep.subr.mxu0 0.0
    %1256 = vmatpush2.msra.mxu0 0.0
    %1257 = vmatprep.subr.mxu0 0.0
    %1258 = vmatpush2.msra.mxu0 0.0
    %1259 = vmatprep.subr.mxu0 0.0
    %1260 = vmatpush2.msra.mxu0 0.0
    %1261 = vmatprep.subr.mxu0 0.0
    %1262 = vmatpush2.msra.mxu0 %v1178
    %1263 = vmatprep.subr.mxu0 0.0
    %1264 = vmatpush2.msra.mxu0 %v1188
    %1265 = vmatprep.subr.mxu0 0.0
    %1266 = vmatpush2.msra.mxu0 %v1170
    %1267 = vmatprep.subr.mxu0 0.0
    %1268 = vmatpush2.msra.mxu0 %v1166
    %1269 = vmatprep.subr.mxu0 0.0
    %1270 = vmatpush2.msra.mxu0 %v1187
    %1271 = vmatprep.subr.mxu0 0.0
    %1272 = vmatpush2.msra.mxu0 %v1158
    %1273 = vmatprep.subr.mxu0 0.0
    %1274 = vmatpush2.msra.mxu0 %v1154
    %1275 = vmatprep.subr.mxu0 0.0
    %1276 = vmatpush2.msra.mxu0 %v1186
    %1277 = vmatprep.mubr.f32.mxu0 %v1205
    %1278 = vmatmul.mubr.f32.gmra.mxu0 %v978
    %v1279 = vpop.f32.mrf.mxu0
    %v1280 = vadd.f32 %v1192, %v1279
    %v1281 = vpop.f32.mrf.mxu0
    %1282 = vmatprep.mubr.f32.mxu0 %v1208
    %1283 = vmatmul.mubr.f32.gmra.mxu0 %v980
    %v1284 = vpop.f32.mrf.mxu0
    %v1285 = vadd.f32 %v1197, %v1284
    %v1286 = vpop.f32.mrf.mxu0
    %1287 = vmatprep.mubr.f32.mxu0 %v1211
    %1288 = vmatmul.mubr.f32.gmra.mxu0 %v982
    %v1289 = vpop.f32.mrf.mxu0
    %v1290 = vadd.f32 %v1202, %v1289
    %v1291 = vpop.f32.mrf.mxu0
    %1292 = vdwg.mxu0
    %v1293 = vmax.f32 %v1280, 0.0
    %v1294 = vmax.f32 %v1285, 0.0
    %v1295 = vmax.f32 %v1290, 0.0
    %s1296 = smul.u32 4, 32
    %s1297 = smul.u32 %s1296, 1
    %s1298 = sshll.u32 %s1297, 4
    %1299 = dma.done [#allocation4], %s1298
    %v1300 = vld [vmem:[%s7] sm:$0xff]
    %v1301 = vld [vmem:[%s7 + $0x8] sm:$0xff]
    %v1302 = vld [vmem:[%s7 + $0x10] sm:$0xff]
    %v1303 = vld [vmem:[%s7 + $0x18] sm:$0xff]
    %v1304 = vld [vmem:[%s7 + $0x20] sm:$0xff]
    %v1305 = vld [vmem:[%s7 + $0x28] sm:$0xff]
    %v1306 = vld [vmem:[%s7 + $0x30] sm:$0xff]
    %v1307 = vld [vmem:[%s7 + $0x38] sm:$0xff]
    %v1308 = vld [vmem:[%s7 + $0x40] sm:$0xff]
    %v1309 = vld [vmem:[%s7 + $0x48] sm:$0xff]
    %v1310 = vld [vmem:[%s7 + $0x50] sm:$0xff]
    %v1311 = vld [vmem:[%s7 + $0x58] sm:$0xff]
    %v1312 = vld [vmem:[%s7 + $0x60] sm:$0xff]
    %v1313 = vld [vmem:[%s7 + $0x68] sm:$0xff]
    %v1314 = vld [vmem:[%s7 + $0x70] sm:$0xff]
    %v1315 = vld [vmem:[%s7 + $0x78] sm:$0xff]
    %v1316 = vld [vmem:[%s7 + $0x80] sm:$0xff]
    %v1317 = vld [vmem:[%s7 + $0x88] sm:$0xff]
    %v1318 = vld [vmem:[%s7 + $0x90] sm:$0xff]
    %v1319 = vld [vmem:[%s7 + $0x98] sm:$0xff]
    %v1320 = vld [vmem:[%s7 + $0xa0] sm:$0xff]
    %v1321 = vld [vmem:[%s7 + $0xa8] sm:$0xff]
    %v1322 = vld [vmem:[%s7 + $0xb0] sm:$0xff]
    %v1323 = vld [vmem:[%s7 + $0xb8] sm:$0xff]
    %v1324 = vld [vmem:[#allocation2] sm:$0xf]
    %v1325 = vld [vmem:[#allocation2 + $0x4] sm:$0xf]
    %v1326 = vld [vmem:[#allocation2 + $0x8] sm:$0xf]
    %v1327 = vld [vmem:[#allocation2 + $0xc] sm:$0xf]
    %v1328 = vld [vmem:[#allocation2 + $0x10] sm:$0xf]
    %v1329 = vld [vmem:[#allocation2 + $0x14] sm:$0xf]
    %v1330 = vld [vmem:[#allocation2 + $0x18] sm:$0xf]
    %v1331 = vld [vmem:[#allocation2 + $0x1c] sm:$0xf]
    %v1332 = vld [vmem:[#allocation2 + $0x20] sm:$0xf]
    %v1333 = vld [vmem:[#allocation2 + $0x24] sm:$0xf]
    %v1334 = vld [vmem:[#allocation2 + $0x28] sm:$0xf]
    %v1335 = vld [vmem:[#allocation2 + $0x2c] sm:$0xf]
    %v1336 = vld [vmem:[#allocation2 + $0x30] sm:$0xf]
    %v1337 = vld [vmem:[#allocation2 + $0x34] sm:$0xf]
    %v1338 = vld [vmem:[#allocation2 + $0x38] sm:$0xf]
    %v1339 = vld [vmem:[#allocation2 + $0x3c] sm:$0xf]
    %v1340 = vld [vmem:[#allocation2 + $0x40] sm:$0xf]
    %v1341 = vld [vmem:[#allocation2 + $0x44] sm:$0xf]
    %v1342 = vld [vmem:[#allocation2 + $0x48] sm:$0xf]
    %v1343 = vld [vmem:[#allocation2 + $0x4c] sm:$0xf]
    %v1344 = vld [vmem:[#allocation2 + $0x50] sm:$0xf]
    %v1345 = vld [vmem:[#allocation2 + $0x54] sm:$0xf]
    %v1346 = vld [vmem:[#allocation2 + $0x58] sm:$0xf]
    %v1347 = vld [vmem:[#allocation2 + $0x5c] sm:$0xf]
    %v1348 = vld [vmem:[#allocation2 + $0x60] sm:$0xf]
    %v1349 = vld [vmem:[#allocation2 + $0x64] sm:$0xf]
    %v1350 = vld [vmem:[#allocation2 + $0x68] sm:$0xf]
    %v1351 = vld [vmem:[#allocation2 + $0x6c] sm:$0xf]
    %v1352 = vld [vmem:[#allocation2 + $0x70] sm:$0xf]
    %v1353 = vld [vmem:[#allocation2 + $0x74] sm:$0xf]
    %v1354 = vld [vmem:[#allocation2 + $0x78] sm:$0xf]
    %v1355 = vld [vmem:[#allocation2 + $0x7c] sm:$0xf]
    %v1356 = vld [vmem:[%s8] sm:$0xff]
    %v1357 = vld [vmem:[%s8 + $0x8] sm:$0xf]
    %vm1358 = vcmask 162816
    %v1360 = vsel %vm1358, %v1300, 0
    %v1363 = vsel %vm1358, %v1301, 0
    %v1366 = vsel %vm1358, %v1302, 0
    %v1369 = vsel %vm1358, %v1303, 0
    %v1372 = vsel %vm1358, %v1304, 0
    %v1375 = vsel %vm1358, %v1305, 0
    %v1378 = vsel %vm1358, %v1306, 0
    %v1381 = vsel %vm1358, %v1307, 0
    %v1384 = vsel %vm1358, %v1308, 0
    %v1387 = vsel %vm1358, %v1309, 0
    %v1390 = vsel %vm1358, %v1310, 0
    %v1393 = vsel %vm1358, %v1311, 0
    %v1396 = vsel %vm1358, %v1312, 0
    %v1399 = vsel %vm1358, %v1313, 0
    %v1402 = vsel %vm1358, %v1314, 0
    %v1405 = vsel %vm1358, %v1315, 0
    %v1408 = vsel %vm1358, %v1316, 0
    %v1411 = vsel %vm1358, %v1317, 0
    %v1414 = vsel %vm1358, %v1318, 0
    %v1417 = vsel %vm1358, %v1319, 0
    %v1420 = vsel %vm1358, %v1320, 0
    %v1423 = vsel %vm1358, %v1321, 0
    %v1426 = vsel %vm1358, %v1322, 0
    %v1429 = vsel %vm1358, %v1323, 0
    %v1432 = vsel %vm863, %v1295, 0
    %1434 = vmatprep.subr.mxu0 0.0
    %1435 = vmatpush1.msra.mxu0 0.0
    %1436 = vmatprep.subr.mxu0 0.0
    %1437 = vmatpush1.msra.mxu0 0.0
    %1438 = vmatprep.subr.mxu0 0.0
    %1439 = vmatpush1.msra.mxu0 0.0
    %1440 = vmatprep.subr.mxu0 0.0
    %1441 = vmatpush1.msra.mxu0 0.0
    %1442 = vmatprep.subr.mxu0 0.0
    %1443 = vmatpush1.msra.mxu0 0.0
    %1444 = vmatprep.subr.mxu0 0.0
    %1445 = vmatpush1.msra.mxu0 0.0
    %1446 = vmatprep.subr.mxu0 0.0
    %1447 = vmatpush1.msra.mxu0 0.0
    %1448 = vmatprep.subr.mxu0 0.0
    %1449 = vmatpush1.msra.mxu0 0.0
    %1450 = vmatprep.subr.mxu0 0.0
    %1451 = vmatpush1.msra.mxu0 0.0
    %1452 = vmatprep.subr.mxu0 0.0
    %1453 = vmatpush1.msra.mxu0 0.0
    %1454 = vmatprep.subr.mxu0 0.0
    %1455 = vmatpush1.msra.mxu0 0.0
    %1456 = vmatprep.subr.mxu0 0.0
    %1457 = vmatpush1.msra.mxu0 0.0
    %1458 = vmatprep.subr.mxu0 0.0
    %1459 = vmatpush1.msra.mxu0 0.0
    %1460 = vmatprep.subr.mxu0 0.0
    %1461 = vmatpush1.msra.mxu0 %v1432
    %1462 = vmatprep.subr.mxu0 0.0
    %1463 = vmatpush1.msra.mxu0 %v1294
    %1464 = vmatprep.subr.mxu0 0.0
    %1465 = vmatpush1.msra.mxu0 %v1293
    %1466 = vmatprep.subr.mxu0 0.0
    %1467 = vmatpush2.msra.mxu0 0.0
    %1468 = vmatprep.subr.mxu0 0.0
    %1469 = vmatpush2.msra.mxu0 0.0
    %1470 = vmatprep.subr.mxu0 0.0
    %1471 = vmatpush2.msra.mxu0 0.0
    %1472 = vmatprep.subr.mxu0 0.0
    %1473 = vmatpush2.msra.mxu0 0.0
    %1474 = vmatprep.subr.mxu0 0.0
    %1475 = vmatpush2.msra.mxu0 0.0
    %1476 = vmatprep.subr.mxu0 0.0
    %1477 = vmatpush2.msra.mxu0 0.0
    %1478 = vmatprep.subr.mxu0 0.0
    %1479 = vmatpush2.msra.mxu0 0.0
    %1480 = vmatprep.subr.mxu0 0.0
    %1481 = vmatpush2.msra.mxu0 0.0
    %1482 = vmatprep.subr.mxu0 0.0
    %1483 = vmatpush2.msra.mxu0 0.0
    %1484 = vmatprep.subr.mxu0 0.0
    %1485 = vmatpush2.msra.mxu0 0.0
    %1486 = vmatprep.subr.mxu0 0.0
    %1487 = vmatpush2.msra.mxu0 0.0
    %1488 = vmatprep.subr.mxu0 0.0
    %1489 = vmatpush2.msra.mxu0 0.0
    %1490 = vmatprep.subr.mxu0 0.0
    %1491 = vmatpush2.msra.mxu0 0.0
    %1492 = vmatprep.subr.mxu0 0.0
    %1493 = vmatpush2.msra.mxu0 0.0
    %1494 = vmatprep.subr.mxu0 0.0
    %1495 = vmatpush2.msra.mxu0 0.0
    %1496 = vmatprep.subr.mxu0 0.0
    %1497 = vmatpush2.msra.mxu0 0.0
    %1498 = vmatprep.mubr.f32.mxu0 0.0
    %1499 = vmatmul.mubr.f32.gmra.mxu0 %v1360
    %v1500 = vpop.f32.mrf.mxu0
    %v1501 = vadd.f32 0.0, %v1500
    %v1502 = vpop.f32.mrf.mxu0
    %1503 = vmatprep.mubr.f32.mxu0 0.0
    %1504 = vmatmul.mubr.f32.gmra.mxu0 %v1363
    %v1505 = vpop.f32.mrf.mxu0
    %v1506 = vadd.f32 0.0, %v1505
    %v1507 = vpop.f32.mrf.mxu0
    %1508 = vmatprep.mubr.f32.mxu0 0.0
    %1509 = vmatmul.mubr.f32.gmra.mxu0 %v1366
    %v1510 = vpop.f32.mrf.mxu0
    %v1511 = vadd.f32 0.0, %v1510
    %v1512 = vpop.f32.mrf.mxu0
    %1513 = vmatprep.mubr.f32.mxu0 0.0
    %1514 = vmatmul.mubr.f32.gmra.mxu0 %v1369
    %v1515 = vpop.f32.mrf.mxu0
    %v1516 = vadd.f32 0.0, %v1515
    %v1517 = vpop.f32.mrf.mxu0
    %1518 = vmatprep.mubr.f32.mxu0 0.0
    %1519 = vmatmul.mubr.f32.gmra.mxu0 %v1372
    %v1520 = vpop.f32.mrf.mxu0
    %v1521 = vadd.f32 0.0, %v1520
    %v1522 = vpop.f32.mrf.mxu0
    %1523 = vmatprep.mubr.f32.mxu0 0.0
    %1524 = vmatmul.mubr.f32.gmra.mxu0 %v1375
    %v1525 = vpop.f32.mrf.mxu0
    %v1526 = vadd.f32 0.0, %v1525
    %v1527 = vpop.f32.mrf.mxu0
    %1528 = vmatprep.mubr.f32.mxu0 0.0
    %1529 = vmatmul.mubr.f32.gmra.mxu0 %v1378
    %v1530 = vpop.f32.mrf.mxu0
    %v1531 = vadd.f32 0.0, %v1530
    %v1532 = vpop.f32.mrf.mxu0
    %1533 = vmatprep.mubr.f32.mxu0 0.0
    %1534 = vmatmul.mubr.f32.gmra.mxu0 %v1381
    %v1535 = vpop.f32.mrf.mxu0
    %v1536 = vadd.f32 0.0, %v1535
    %v1537 = vpop.f32.mrf.mxu0
    %1538 = vmatprep.mubr.f32.mxu0 0.0
    %1539 = vmatmul.mubr.f32.gmra.mxu0 %v1384
    %v1540 = vpop.f32.mrf.mxu0
    %v1541 = vadd.f32 0.0, %v1540
    %v1542 = vpop.f32.mrf.mxu0
    %1543 = vmatprep.mubr.f32.mxu0 0.0
    %1544 = vmatmul.mubr.f32.gmra.mxu0 %v1387
    %v1545 = vpop.f32.mrf.mxu0
    %v1546 = vadd.f32 0.0, %v1545
    %v1547 = vpop.f32.mrf.mxu0
    %1548 = vmatprep.mubr.f32.mxu0 0.0
    %1549 = vmatmul.mubr.f32.gmra.mxu0 %v1390
    %v1550 = vpop.f32.mrf.mxu0
    %v1551 = vadd.f32 0.0, %v1550
    %v1552 = vpop.f32.mrf.mxu0
    %1553 = vmatprep.mubr.f32.mxu0 0.0
    %1554 = vmatmul.mubr.f32.gmra.mxu0 %v1393
    %v1555 = vpop.f32.mrf.mxu0
    %v1556 = vadd.f32 0.0, %v1555
    %v1557 = vpop.f32.mrf.mxu0
    %1558 = vmatprep.mubr.f32.mxu0 0.0
    %1559 = vmatmul.mubr.f32.gmra.mxu0 %v1396
    %v1560 = vpop.f32.mrf.mxu0
    %v1561 = vadd.f32 0.0, %v1560
    %v1562 = vpop.f32.mrf.mxu0
    %1563 = vmatprep.mubr.f32.mxu0 0.0
    %1564 = vmatmul.mubr.f32.gmra.mxu0 %v1399
    %v1565 = vpop.f32.mrf.mxu0
    %v1566 = vadd.f32 0.0, %v1565
    %v1567 = vpop.f32.mrf.mxu0
    %1568 = vmatprep.mubr.f32.mxu0 0.0
    %1569 = vmatmul.mubr.f32.gmra.mxu0 %v1402
    %v1570 = vpop.f32.mrf.mxu0
    %v1571 = vadd.f32 0.0, %v1570
    %v1572 = vpop.f32.mrf.mxu0
    %1573 = vmatprep.mubr.f32.mxu0 0.0
    %1574 = vmatmul.mubr.f32.gmra.mxu0 %v1405
    %v1575 = vpop.f32.mrf.mxu0
    %v1576 = vadd.f32 0.0, %v1575
    %v1577 = vpop.f32.mrf.mxu0
    %1578 = vmatprep.mubr.f32.mxu0 0.0
    %1579 = vmatmul.mubr.f32.gmra.mxu0 %v1408
    %v1580 = vpop.f32.mrf.mxu0
    %v1581 = vadd.f32 0.0, %v1580
    %v1582 = vpop.f32.mrf.mxu0
    %1583 = vmatprep.mubr.f32.mxu0 0.0
    %1584 = vmatmul.mubr.f32.gmra.mxu0 %v1411
    %v1585 = vpop.f32.mrf.mxu0
    %v1586 = vadd.f32 0.0, %v1585
    %v1587 = vpop.f32.mrf.mxu0
    %1588 = vmatprep.mubr.f32.mxu0 0.0
    %1589 = vmatmul.mubr.f32.gmra.mxu0 %v1414
    %v1590 = vpop.f32.mrf.mxu0
    %v1591 = vadd.f32 0.0, %v1590
    %v1592 = vpop.f32.mrf.mxu0
    %1593 = vmatprep.mubr.f32.mxu0 0.0
    %1594 = vmatmul.mubr.f32.gmra.mxu0 %v1417
    %v1595 = vpop.f32.mrf.mxu0
    %v1596 = vadd.f32 0.0, %v1595
    %v1597 = vpop.f32.mrf.mxu0
    %1598 = vmatprep.mubr.f32.mxu0 0.0
    %1599 = vmatmul.mubr.f32.gmra.mxu0 %v1420
    %v1600 = vpop.f32.mrf.mxu0
    %v1601 = vadd.f32 0.0, %v1600
    %v1602 = vpop.f32.mrf.mxu0
    %1603 = vmatprep.mubr.f32.mxu0 0.0
    %1604 = vmatmul.mubr.f32.gmra.mxu0 %v1423
    %v1605 = vpop.f32.mrf.mxu0
    %v1606 = vadd.f32 0.0, %v1605
    %v1607 = vpop.f32.mrf.mxu0
    %1608 = vmatprep.mubr.f32.mxu0 0.0
    %1609 = vmatmul.mubr.f32.gmra.mxu0 %v1426
    %v1610 = vpop.f32.mrf.mxu0
    %v1611 = vadd.f32 0.0, %v1610
    %v1612 = vpop.f32.mrf.mxu0
    %1613 = vmatprep.mubr.f32.mxu0 0.0
    %1614 = vmatmul.mubr.f32.gmra.mxu0 %v1429
    %v1615 = vpop.f32.mrf.mxu0
    %v1616 = vadd.f32 0.0, %v1615
    %v1617 = vpop.f32.mrf.mxu0
    %1618 = vdwg.mxu0
    %v1621 = vrot.slane %v1506, 4
    %v1622 = vrot.slane %v1511, 4
    %v1623 = vsel %vm863, %v1621, %v1622
    %1624 = vrot.lane.b32.xlu0 %v1623, 16
    %v1625 = vpop.permute.xlu0 %1624
    %1626 = vrot.lane.b32.xlu0 %v1622, 16
    %v1627 = vpop.permute.xlu0 %1626
    %1632 = vrot.lane.b32.xlu0 %v1516, 32
    %v1633 = vpop.permute.xlu0 %1632
    %1634 = vrot.lane.b32.xlu0 %v1521, 32
    %v1635 = vpop.permute.xlu0 %1634
    %v1639 = vrot.slane %v1521, 4
    %v1640 = vrot.slane %v1526, 4
    %v1641 = vsel %vm863, %v1639, %v1640
    %1642 = vrot.lane.b32.xlu0 %v1641, 48
    %v1643 = vpop.permute.xlu0 %1642
    %1644 = vrot.lane.b32.xlu0 %v1640, 48
    %v1645 = vpop.permute.xlu0 %1644
    %1650 = vrot.lane.b32.xlu0 %v1531, 64
    %v1651 = vpop.permute.xlu0 %1650
    %1652 = vrot.lane.b32.xlu0 %v1536, 64
    %v1653 = vpop.permute.xlu0 %1652
    %v1657 = vrot.slane %v1536, 4
    %v1658 = vrot.slane %v1541, 4
    %v1659 = vsel %vm863, %v1657, %v1658
    %1660 = vrot.lane.b32.xlu0 %v1659, 80
    %v1661 = vpop.permute.xlu0 %1660
    %1662 = vrot.lane.b32.xlu0 %v1658, 80
    %v1663 = vpop.permute.xlu0 %1662
    %1668 = vrot.lane.b32.xlu0 %v1546, 96
    %v1669 = vpop.permute.xlu0 %1668
    %1670 = vrot.lane.b32.xlu0 %v1551, 96
    %v1671 = vpop.permute.xlu0 %1670
    %v1675 = vrot.slane %v1551, 4
    %v1676 = vrot.slane %v1556, 4
    %v1677 = vsel %vm863, %v1675, %v1676
    %1678 = vrot.lane.b32.xlu0 %v1677, 112
    %v1679 = vpop.permute.xlu0 %1678
    %1680 = vrot.lane.b32.xlu0 %v1676, 112
    %v1681 = vpop.permute.xlu0 %1680
    %v1686 = vrot.slane %v1566, 4
    %v1687 = vrot.slane %v1571, 4
    %v1688 = vsel %vm863, %v1686, %v1687
    %1689 = vrot.lane.b32.xlu0 %v1688, 16
    %v1690 = vpop.permute.xlu0 %1689
    %1691 = vrot.lane.b32.xlu0 %v1687, 16
    %v1692 = vpop.permute.xlu0 %1691
    %1697 = vrot.lane.b32.xlu0 %v1576, 32
    %v1698 = vpop.permute.xlu0 %1697
    %1699 = vrot.lane.b32.xlu0 %v1581, 32
    %v1700 = vpop.permute.xlu0 %1699
    %v1704 = vrot.slane %v1581, 4
    %v1705 = vrot.slane %v1586, 4
    %v1706 = vsel %vm863, %v1704, %v1705
    %1707 = vrot.lane.b32.xlu0 %v1706, 48
    %v1708 = vpop.permute.xlu0 %1707
    %1709 = vrot.lane.b32.xlu0 %v1705, 48
    %v1710 = vpop.permute.xlu0 %1709
    %1715 = vrot.lane.b32.xlu0 %v1591, 64
    %v1716 = vpop.permute.xlu0 %1715
    %1717 = vrot.lane.b32.xlu0 %v1596, 64
    %v1718 = vpop.permute.xlu0 %1717
    %v1722 = vrot.slane %v1596, 4
    %v1723 = vrot.slane %v1601, 4
    %v1724 = vsel %vm863, %v1722, %v1723
    %1725 = vrot.lane.b32.xlu0 %v1724, 80
    %v1726 = vpop.permute.xlu0 %1725
    %1727 = vrot.lane.b32.xlu0 %v1723, 80
    %v1728 = vpop.permute.xlu0 %1727
    %1733 = vrot.lane.b32.xlu0 %v1606, 96
    %v1734 = vpop.permute.xlu0 %1733
    %1735 = vrot.lane.b32.xlu0 %v1611, 96
    %v1736 = vpop.permute.xlu0 %1735
    %v1740 = vrot.slane %v1611, 4
    %v1741 = vrot.slane %v1616, 4
    %v1742 = vsel %vm863, %v1740, %v1741
    %1743 = vrot.lane.b32.xlu0 %v1742, 112
    %v1744 = vpop.permute.xlu0 %1743
    %1745 = vrot.lane.b32.xlu0 %v1741, 112
    %v1746 = vpop.permute.xlu0 %1745
    %vm1749 = vcmask 130048
    %v1750 = vsel %vm1749, %v1501, %v1625
    %v1751 = vsel %vm1749, %v1506, %v1627
    %vm1752 = vcmask 261120
    %v1753 = vsel %vm1752, %v1750, %v1633
    %v1754 = vsel %vm1752, %v1751, %v1635
    %vm1755 = vcmask 392192
    %v1756 = vsel %vm1755, %v1753, %v1643
    %v1757 = vsel %vm1755, %v1754, %v1645
    %v1758 = vsel %vm1003, %v1756, %v1651
    %v1759 = vsel %vm1003, %v1757, %v1653
    %vm1760 = vcmask 654336
    %v1761 = vsel %vm1760, %v1758, %v1661
    %v1762 = vsel %vm1760, %v1759, %v1663
    %v1763 = vsel %vm886, %v1761, %v1669
    %v1764 = vsel %vm886, %v1762, %v1671
    %vm1765 = vcmask 916480
    %v1766 = vsel %vm1765, %v1763, %v1679
    %v1767 = vsel %vm1765, %v1764, %v1681
    %v1768 = vsel %vm1749, %v1561, %v1690
    %v1769 = vsel %vm1749, %v1566, %v1692
    %v1770 = vsel %vm1752, %v1768, %v1698
    %v1771 = vsel %vm1752, %v1769, %v1700
    %v1772 = vsel %vm1755, %v1770, %v1708
    %v1773 = vsel %vm1755, %v1771, %v1710
    %v1774 = vsel %vm1003, %v1772, %v1716
    %v1775 = vsel %vm1003, %v1773, %v1718
    %v1776 = vsel %vm1760, %v1774, %v1726
    %v1777 = vsel %vm1760, %v1775, %v1728
    %v1778 = vsel %vm886, %v1776, %v1734
    %v1779 = vsel %vm886, %v1777, %v1736
    %v1780 = vsel %vm1765, %v1778, %v1744
    %v1781 = vsel %vm1765, %v1779, %v1746
    %v1782 = vunpack.c.l.bf16 %v1324
    %v1783 = vunpack.c.l.bf16 %v1325
    %v1784 = vunpack.c.l.bf16 %v1326
    %v1785 = vunpack.c.l.bf16 %v1327
    %v1786 = vunpack.c.l.bf16 %v1328
    %v1787 = vunpack.c.l.bf16 %v1329
    %v1788 = vunpack.c.l.bf16 %v1330
    %v1789 = vunpack.c.l.bf16 %v1331
    %v1790 = vunpack.c.l.bf16 %v1332
    %v1791 = vunpack.c.l.bf16 %v1333
    %v1792 = vunpack.c.l.bf16 %v1334
    %v1793 = vunpack.c.l.bf16 %v1335
    %v1794 = vunpack.c.l.bf16 %v1336
    %v1795 = vunpack.c.l.bf16 %v1337
    %v1796 = vunpack.c.l.bf16 %v1338
    %v1797 = vunpack.c.l.bf16 %v1339
    %v1798 = vunpack.c.l.bf16 %v1340
    %v1799 = vunpack.c.l.bf16 %v1341
    %v1800 = vunpack.c.l.bf16 %v1342
    %v1801 = vunpack.c.l.bf16 %v1343
    %v1802 = vunpack.c.l.bf16 %v1344
    %v1803 = vunpack.c.l.bf16 %v1345
    %v1804 = vunpack.c.l.bf16 %v1346
    %v1805 = vunpack.c.l.bf16 %v1347
    %v1806 = vunpack.c.l.bf16 %v1348
    %v1807 = vunpack.c.l.bf16 %v1349
    %v1808 = vunpack.c.l.bf16 %v1350
    %v1809 = vunpack.c.l.bf16 %v1351
    %v1810 = vunpack.c.l.bf16 %v1352
    %v1811 = vunpack.c.l.bf16 %v1353
    %v1812 = vunpack.c.l.bf16 %v1354
    %v1813 = vunpack.c.l.bf16 %v1355
    %1815 = vset.pattern.permute.xlu0 0
    %1816 = vperm.xlu0 %1815, %v1356
    %v1817 = vpop.permute.xlu0 %1816
    %1820 = vset.pattern.permute.xlu0 0
    %1821 = vperm.xlu0 %1820, %v1357
    %v1822 = vpop.permute.xlu0 %1821
    %1824 = vmatprep.subr.mxu0 0.0
    %1825 = vmatpush1.msra.mxu0 %v1797
    %1826 = vmatprep.subr.mxu0 0.0
    %1827 = vmatpush1.msra.mxu0 %v1796
    %1828 = vmatprep.subr.mxu0 0.0
    %1829 = vmatpush1.msra.mxu0 %v1795
    %1830 = vmatprep.subr.mxu0 0.0
    %1831 = vmatpush1.msra.mxu0 %v1794
    %1832 = vmatprep.subr.mxu0 0.0
    %1833 = vmatpush1.msra.mxu0 %v1793
    %1834 = vmatprep.subr.mxu0 0.0
    %1835 = vmatpush1.msra.mxu0 %v1792
    %1836 = vmatprep.subr.mxu0 0.0
    %1837 = vmatpush1.msra.mxu0 %v1791
    %1838 = vmatprep.subr.mxu0 0.0
    %1839 = vmatpush1.msra.mxu0 %v1790
    %1840 = vmatprep.subr.mxu0 0.0
    %1841 = vmatpush1.msra.mxu0 %v1789
    %1842 = vmatprep.subr.mxu0 0.0
    %1843 = vmatpush1.msra.mxu0 %v1788
    %1844 = vmatprep.subr.mxu0 0.0
    %1845 = vmatpush1.msra.mxu0 %v1787
    %1846 = vmatprep.subr.mxu0 0.0
    %1847 = vmatpush1.msra.mxu0 %v1786
    %1848 = vmatprep.subr.mxu0 0.0
    %1849 = vmatpush1.msra.mxu0 %v1785
    %1850 = vmatprep.subr.mxu0 0.0
    %1851 = vmatpush1.msra.mxu0 %v1784
    %1852 = vmatprep.subr.mxu0 0.0
    %1853 = vmatpush1.msra.mxu0 %v1783
    %1854 = vmatprep.subr.mxu0 0.0
    %1855 = vmatpush1.msra.mxu0 %v1782
    %1856 = vmatprep.subr.mxu0 0.0
    %1857 = vmatpush2.msra.mxu0 %v1813
    %1858 = vmatprep.subr.mxu0 0.0
    %1859 = vmatpush2.msra.mxu0 %v1812
    %1860 = vmatprep.subr.mxu0 0.0
    %1861 = vmatpush2.msra.mxu0 %v1811
    %1862 = vmatprep.subr.mxu0 0.0
    %1863 = vmatpush2.msra.mxu0 %v1810
    %1864 = vmatprep.subr.mxu0 0.0
    %1865 = vmatpush2.msra.mxu0 %v1809
    %1866 = vmatprep.subr.mxu0 0.0
    %1867 = vmatpush2.msra.mxu0 %v1808
    %1868 = vmatprep.subr.mxu0 0.0
    %1869 = vmatpush2.msra.mxu0 %v1807
    %1870 = vmatprep.subr.mxu0 0.0
    %1871 = vmatpush2.msra.mxu0 %v1806
    %1872 = vmatprep.subr.mxu0 0.0
    %1873 = vmatpush2.msra.mxu0 %v1805
    %1874 = vmatprep.subr.mxu0 0.0
    %1875 = vmatpush2.msra.mxu0 %v1804
    %1876 = vmatprep.subr.mxu0 0.0
    %1877 = vmatpush2.msra.mxu0 %v1803
    %1878 = vmatprep.subr.mxu0 0.0
    %1879 = vmatpush2.msra.mxu0 %v1802
    %1880 = vmatprep.subr.mxu0 0.0
    %1881 = vmatpush2.msra.mxu0 %v1801
    %1882 = vmatprep.subr.mxu0 0.0
    %1883 = vmatpush2.msra.mxu0 %v1800
    %1884 = vmatprep.subr.mxu0 0.0
    %1885 = vmatpush2.msra.mxu0 %v1799
    %1886 = vmatprep.subr.mxu0 0.0
    %1887 = vmatpush2.msra.mxu0 %v1798
    %1888 = vmatprep.mubr.f32.mxu0 %v1780
    %1889 = vmatmul.mubr.f32.gmra.mxu0 %v1766
    %v1890 = vpop.f32.mrf.mxu0
    %v1891 = vadd.f32 %v1817, %v1890
    %v1892 = vpop.f32.mrf.mxu0
    %1893 = vmatprep.mubr.f32.mxu0 %v1781
    %1894 = vmatmul.mubr.f32.gmra.mxu0 %v1767
    %v1895 = vpop.f32.mrf.mxu0
    %v1896 = vadd.f32 %v1822, %v1895
    %v1897 = vpop.f32.mrf.mxu0
    %1898 = vdwg.mxu0
    %v1899 = vmax.f32 %v1891, 0.0
    %v1900 = vmax.f32 %v1896, 0.0
    %s1901 = smul.u32 4, 128
    %s1902 = smul.u32 %s1901, 2
    %s1903 = sshll.u32 %s1902, 4
    %1904 = dma.done %s127, %s1903
    %v1905 = vld [vmem:[%s9] sm:$0xff]
    %v1906 = vld [vmem:[%s9 + $0x8] sm:$0xff]
    %v1907 = vld [vmem:[%s9 + $0x10] sm:$0xff]
    %v1908 = vld [vmem:[%s9 + $0x18] sm:$0xff]
    %v1909 = vld [vmem:[%s9 + $0x20] sm:$0xff]
    %v1910 = vld [vmem:[%s9 + $0x28] sm:$0xff]
    %v1911 = vld [vmem:[%s9 + $0x30] sm:$0xff]
    %v1912 = vld [vmem:[%s9 + $0x38] sm:$0xff]
    %v1913 = vld [vmem:[#allocation3] sm:$0xff]
    %v1914 = vld [vmem:[#allocation3 + $0x8] sm:$0xff]
    %v1915 = vld [vmem:[#allocation3 + $0x10] sm:$0xff]
    %v1916 = vld [vmem:[#allocation3 + $0x18] sm:$0xff]
    %v1917 = vld [vmem:[#allocation3 + $0x20] sm:$0xff]
    %v1918 = vld [vmem:[#allocation3 + $0x28] sm:$0xff]
    %v1919 = vld [vmem:[#allocation3 + $0x30] sm:$0xff]
    %v1920 = vld [vmem:[#allocation3 + $0x38] sm:$0xff]
    %v1921 = vld [vmem:[#allocation3 + $0x40] sm:$0xff]
    %v1922 = vld [vmem:[#allocation3 + $0x48] sm:$0xff]
    %v1923 = vld [vmem:[#allocation3 + $0x50] sm:$0xff]
    %v1924 = vld [vmem:[#allocation3 + $0x58] sm:$0xff]
    %v1925 = vld [vmem:[#allocation3 + $0x60] sm:$0xff]
    %v1926 = vld [vmem:[#allocation3 + $0x68] sm:$0xff]
    %v1927 = vld [vmem:[#allocation3 + $0x70] sm:$0xff]
    %v1928 = vld [vmem:[#allocation3 + $0x78] sm:$0xff]
    %v1929 = vld [vmem:[#allocation3 + $0x80] sm:$0xff]
    %v1930 = vld [vmem:[#allocation3 + $0x88] sm:$0xff]
    %v1931 = vld [vmem:[#allocation3 + $0x90] sm:$0xff]
    %v1932 = vld [vmem:[#allocation3 + $0x98] sm:$0xff]
    %v1933 = vld [vmem:[#allocation3 + $0xa0] sm:$0xff]
    %v1934 = vld [vmem:[#allocation3 + $0xa8] sm:$0xff]
    %v1935 = vld [vmem:[#allocation3 + $0xb0] sm:$0xff]
    %v1936 = vld [vmem:[#allocation3 + $0xb8] sm:$0xff]
    %v1937 = vld [vmem:[#allocation3 + $0xc0] sm:$0xff]
    %v1938 = vld [vmem:[#allocation3 + $0xc8] sm:$0xff]
    %v1939 = vld [vmem:[#allocation3 + $0xd0] sm:$0xff]
    %v1940 = vld [vmem:[#allocation3 + $0xd8] sm:$0xff]
    %v1941 = vld [vmem:[#allocation3 + $0xe0] sm:$0xff]
    %v1942 = vld [vmem:[#allocation3 + $0xe8] sm:$0xff]
    %v1943 = vld [vmem:[#allocation3 + $0xf0] sm:$0xff]
    %v1944 = vld [vmem:[#allocation3 + $0xf8] sm:$0xff]
    %v1945 = vld [vmem:[#allocation3 + $0x100] sm:$0xff]
    %v1946 = vld [vmem:[#allocation3 + $0x108] sm:$0xff]
    %v1947 = vld [vmem:[#allocation3 + $0x110] sm:$0xff]
    %v1948 = vld [vmem:[#allocation3 + $0x118] sm:$0xff]
    %v1949 = vld [vmem:[#allocation3 + $0x120] sm:$0xff]
    %v1950 = vld [vmem:[#allocation3 + $0x128] sm:$0xff]
    %v1951 = vld [vmem:[#allocation3 + $0x130] sm:$0xff]
    %v1952 = vld [vmem:[#allocation3 + $0x138] sm:$0xff]
    %v1953 = vld [vmem:[#allocation3 + $0x140] sm:$0xff]
    %v1954 = vld [vmem:[#allocation3 + $0x148] sm:$0xff]
    %v1955 = vld [vmem:[#allocation3 + $0x150] sm:$0xff]
    %v1956 = vld [vmem:[#allocation3 + $0x158] sm:$0xff]
    %v1957 = vld [vmem:[#allocation3 + $0x160] sm:$0xff]
    %v1958 = vld [vmem:[#allocation3 + $0x168] sm:$0xff]
    %v1959 = vld [vmem:[#allocation3 + $0x170] sm:$0xff]
    %v1960 = vld [vmem:[#allocation3 + $0x178] sm:$0xff]
    %v1961 = vld [vmem:[#allocation3 + $0x180] sm:$0xff]
    %v1962 = vld [vmem:[#allocation3 + $0x188] sm:$0xff]
    %v1963 = vld [vmem:[#allocation3 + $0x190] sm:$0xff]
    %v1964 = vld [vmem:[#allocation3 + $0x198] sm:$0xff]
    %v1965 = vld [vmem:[#allocation3 + $0x1a0] sm:$0xff]
    %v1966 = vld [vmem:[#allocation3 + $0x1a8] sm:$0xff]
    %v1967 = vld [vmem:[#allocation3 + $0x1b0] sm:$0xff]
    %v1968 = vld [vmem:[#allocation3 + $0x1b8] sm:$0xff]
    %v1969 = vld [vmem:[#allocation3 + $0x1c0] sm:$0xff]
    %v1970 = vld [vmem:[#allocation3 + $0x1c8] sm:$0xff]
    %v1971 = vld [vmem:[#allocation3 + $0x1d0] sm:$0xff]
    %v1972 = vld [vmem:[#allocation3 + $0x1d8] sm:$0xff]
    %v1973 = vld [vmem:[#allocation3 + $0x1e0] sm:$0xff]
    %v1974 = vld [vmem:[#allocation3 + $0x1e8] sm:$0xff]
    %v1975 = vld [vmem:[#allocation3 + $0x1f0] sm:$0xff]
    %v1976 = vld [vmem:[#allocation3 + $0x1f8] sm:$0xff]
    %v1977 = vld [vmem:[#allocation3 + $0x200] sm:$0xff]
    %v1978 = vld [vmem:[#allocation3 + $0x208] sm:$0xff]
    %v1979 = vld [vmem:[#allocation3 + $0x210] sm:$0xff]
    %v1980 = vld [vmem:[#allocation3 + $0x218] sm:$0xff]
    %v1981 = vld [vmem:[#allocation3 + $0x220] sm:$0xff]
    %v1982 = vld [vmem:[#allocation3 + $0x228] sm:$0xff]
    %v1983 = vld [vmem:[#allocation3 + $0x230] sm:$0xff]
    %v1984 = vld [vmem:[#allocation3 + $0x238] sm:$0xff]
    %v1985 = vld [vmem:[#allocation3 + $0x240] sm:$0xff]
    %v1986 = vld [vmem:[#allocation3 + $0x248] sm:$0xff]
    %v1987 = vld [vmem:[#allocation3 + $0x250] sm:$0xff]
    %v1988 = vld [vmem:[#allocation3 + $0x258] sm:$0xff]
    %v1989 = vld [vmem:[#allocation3 + $0x260] sm:$0xff]
    %v1990 = vld [vmem:[#allocation3 + $0x268] sm:$0xff]
    %v1991 = vld [vmem:[#allocation3 + $0x270] sm:$0xff]
    %v1992 = vld [vmem:[#allocation3 + $0x278] sm:$0xff]
    %v1993 = vld [vmem:[#allocation3 + $0x280] sm:$0xff]
    %v1994 = vld [vmem:[#allocation3 + $0x288] sm:$0xff]
    %v1995 = vld [vmem:[#allocation3 + $0x290] sm:$0xff]
    %v1996 = vld [vmem:[#allocation3 + $0x298] sm:$0xff]
    %v1997 = vld [vmem:[#allocation3 + $0x2a0] sm:$0xff]
    %v1998 = vld [vmem:[#allocation3 + $0x2a8] sm:$0xff]
    %v1999 = vld [vmem:[#allocation3 + $0x2b0] sm:$0xff]
    %v2000 = vld [vmem:[#allocation3 + $0x2b8] sm:$0xff]
    %v2001 = vld [vmem:[#allocation3 + $0x2c0] sm:$0xff]
    %v2002 = vld [vmem:[#allocation3 + $0x2c8] sm:$0xff]
    %v2003 = vld [vmem:[#allocation3 + $0x2d0] sm:$0xff]
    %v2004 = vld [vmem:[#allocation3 + $0x2d8] sm:$0xff]
    %v2005 = vld [vmem:[#allocation3 + $0x2e0] sm:$0xff]
    %v2006 = vld [vmem:[#allocation3 + $0x2e8] sm:$0xff]
    %v2007 = vld [vmem:[#allocation3 + $0x2f0] sm:$0xff]
    %v2008 = vld [vmem:[#allocation3 + $0x2f8] sm:$0xff]
    %v2009 = vld [vmem:[#allocation3 + $0x300] sm:$0xff]
    %v2010 = vld [vmem:[#allocation3 + $0x308] sm:$0xff]
    %v2011 = vld [vmem:[#allocation3 + $0x310] sm:$0xff]
    %v2012 = vld [vmem:[#allocation3 + $0x318] sm:$0xff]
    %v2013 = vld [vmem:[#allocation3 + $0x320] sm:$0xff]
    %v2014 = vld [vmem:[#allocation3 + $0x328] sm:$0xff]
    %v2015 = vld [vmem:[#allocation3 + $0x330] sm:$0xff]
    %v2016 = vld [vmem:[#allocation3 + $0x338] sm:$0xff]
    %v2017 = vld [vmem:[#allocation3 + $0x340] sm:$0xff]
    %v2018 = vld [vmem:[#allocation3 + $0x348] sm:$0xff]
    %v2019 = vld [vmem:[#allocation3 + $0x350] sm:$0xff]
    %v2020 = vld [vmem:[#allocation3 + $0x358] sm:$0xff]
    %v2021 = vld [vmem:[#allocation3 + $0x360] sm:$0xff]
    %v2022 = vld [vmem:[#allocation3 + $0x368] sm:$0xff]
    %v2023 = vld [vmem:[#allocation3 + $0x370] sm:$0xff]
    %v2024 = vld [vmem:[#allocation3 + $0x378] sm:$0xff]
    %v2025 = vld [vmem:[#allocation3 + $0x380] sm:$0xff]
    %v2026 = vld [vmem:[#allocation3 + $0x388] sm:$0xff]
    %v2027 = vld [vmem:[#allocation3 + $0x390] sm:$0xff]
    %v2028 = vld [vmem:[#allocation3 + $0x398] sm:$0xff]
    %v2029 = vld [vmem:[#allocation3 + $0x3a0] sm:$0xff]
    %v2030 = vld [vmem:[#allocation3 + $0x3a8] sm:$0xff]
    %v2031 = vld [vmem:[#allocation3 + $0x3b0] sm:$0xff]
    %v2032 = vld [vmem:[#allocation3 + $0x3b8] sm:$0xff]
    %v2033 = vld [vmem:[#allocation3 + $0x3c0] sm:$0xff]
    %v2034 = vld [vmem:[#allocation3 + $0x3c8] sm:$0xff]
    %v2035 = vld [vmem:[#allocation3 + $0x3d0] sm:$0xff]
    %v2036 = vld [vmem:[#allocation3 + $0x3d8] sm:$0xff]
    %v2037 = vld [vmem:[#allocation3 + $0x3e0] sm:$0xff]
    %v2038 = vld [vmem:[#allocation3 + $0x3e8] sm:$0xff]
    %v2039 = vld [vmem:[#allocation3 + $0x3f0] sm:$0xff]
    %v2040 = vld [vmem:[#allocation3 + $0x3f8] sm:$0xff]
    %v2041 = vld [vmem:[%s10] sm:$0xf]
    %vm2042 = vcmask 97280
    %v2044 = vsel %vm2042, %v1905, 0
    %v2047 = vsel %vm2042, %v1906, 0
    %v2050 = vsel %vm2042, %v1907, 0
    %v2053 = vsel %vm2042, %v1908, 0
    %v2056 = vsel %vm2042, %v1909, 0
    %v2059 = vsel %vm2042, %v1910, 0
    %v2062 = vsel %vm2042, %v1911, 0
    %v2065 = vsel %vm2042, %v1912, 0
    %v2068 = vsel %vm863, %v1900, 0
    %2070 = vmatprep.subr.mxu0 0.0
    %2071 = vmatpush1.msra.mxu0 0.0
    %2072 = vmatprep.subr.mxu0 0.0
    %2073 = vmatpush1.msra.mxu0 0.0
    %2074 = vmatprep.subr.mxu0 0.0
    %2075 = vmatpush1.msra.mxu0 0.0
    %2076 = vmatprep.subr.mxu0 0.0
    %2077 = vmatpush1.msra.mxu0 0.0
    %2078 = vmatprep.subr.mxu0 0.0
    %2079 = vmatpush1.msra.mxu0 0.0
    %2080 = vmatprep.subr.mxu0 0.0
    %2081 = vmatpush1.msra.mxu0 0.0
    %2082 = vmatprep.subr.mxu0 0.0
    %2083 = vmatpush1.msra.mxu0 0.0
    %2084 = vmatprep.subr.mxu0 0.0
    %2085 = vmatpush1.msra.mxu0 0.0
    %2086 = vmatprep.subr.mxu0 0.0
    %2087 = vmatpush1.msra.mxu0 0.0
    %2088 = vmatprep.subr.mxu0 0.0
    %2089 = vmatpush1.msra.mxu0 0.0
    %2090 = vmatprep.subr.mxu0 0.0
    %2091 = vmatpush1.msra.mxu0 0.0
    %2092 = vmatprep.subr.mxu0 0.0
    %2093 = vmatpush1.msra.mxu0 0.0
    %2094 = vmatprep.subr.mxu0 0.0
    %2095 = vmatpush1.msra.mxu0 0.0
    %2096 = vmatprep.subr.mxu0 0.0
    %2097 = vmatpush1.msra.mxu0 0.0
    %2098 = vmatprep.subr.mxu0 0.0
    %2099 = vmatpush1.msra.mxu0 %v2068
    %2100 = vmatprep.subr.mxu0 0.0
    %2101 = vmatpush1.msra.mxu0 %v1899
    %2102 = vmatprep.subr.mxu0 0.0
    %2103 = vmatpush2.msra.mxu0 0.0
    %2104 = vmatprep.subr.mxu0 0.0
    %2105 = vmatpush2.msra.mxu0 0.0
    %2106 = vmatprep.subr.mxu0 0.0
    %2107 = vmatpush2.msra.mxu0 0.0
    %2108 = vmatprep.subr.mxu0 0.0
    %2109 = vmatpush2.msra.mxu0 0.0
    %2110 = vmatprep.subr.mxu0 0.0
    %2111 = vmatpush2.msra.mxu0 0.0
    %2112 = vmatprep.subr.mxu0 0.0
    %2113 = vmatpush2.msra.mxu0 0.0
    %2114 = vmatprep.subr.mxu0 0.0
    %2115 = vmatpush2.msra.mxu0 0.0
    %2116 = vmatprep.subr.mxu0 0.0
    %2117 = vmatpush2.msra.mxu0 0.0
    %2118 = vmatprep.subr.mxu0 0.0
    %2119 = vmatpush2.msra.mxu0 0.0
    %2120 = vmatprep.subr.mxu0 0.0
    %2121 = vmatpush2.msra.mxu0 0.0
    %2122 = vmatprep.subr.mxu0 0.0
    %2123 = vmatpush2.msra.mxu0 0.0
    %2124 = vmatprep.subr.mxu0 0.0
    %2125 = vmatpush2.msra.mxu0 0.0
    %2126 = vmatprep.subr.mxu0 0.0
    %2127 = vmatpush2.msra.mxu0 0.0
    %2128 = vmatprep.subr.mxu0 0.0
    %2129 = vmatpush2.msra.mxu0 0.0
    %2130 = vmatprep.subr.mxu0 0.0
    %2131 = vmatpush2.msra.mxu0 0.0
    %2132 = vmatprep.subr.mxu0 0.0
    %2133 = vmatpush2.msra.mxu0 0.0
    %2134 = vmatprep.mubr.f32.mxu0 0.0
    %2135 = vmatmul.mubr.f32.gmra.mxu0 %v2044
    %v2136 = vpop.f32.mrf.mxu0
    %v2137 = vadd.f32 0.0, %v2136
    %v2138 = vpop.f32.mrf.mxu0
    %2139 = vmatprep.mubr.f32.mxu0 0.0
    %2140 = vmatmul.mubr.f32.gmra.mxu0 %v2047
    %v2141 = vpop.f32.mrf.mxu0
    %v2142 = vadd.f32 0.0, %v2141
    %v2143 = vpop.f32.mrf.mxu0
    %2144 = vmatprep.mubr.f32.mxu0 0.0
    %2145 = vmatmul.mubr.f32.gmra.mxu0 %v2050
    %v2146 = vpop.f32.mrf.mxu0
    %v2147 = vadd.f32 0.0, %v2146
    %v2148 = vpop.f32.mrf.mxu0
    %2149 = vmatprep.mubr.f32.mxu0 0.0
    %2150 = vmatmul.mubr.f32.gmra.mxu0 %v2053
    %v2151 = vpop.f32.mrf.mxu0
    %v2152 = vadd.f32 0.0, %v2151
    %v2153 = vpop.f32.mrf.mxu0
    %2154 = vmatprep.mubr.f32.mxu0 0.0
    %2155 = vmatmul.mubr.f32.gmra.mxu0 %v2056
    %v2156 = vpop.f32.mrf.mxu0
    %v2157 = vadd.f32 0.0, %v2156
    %v2158 = vpop.f32.mrf.mxu0
    %2159 = vmatprep.mubr.f32.mxu0 0.0
    %2160 = vmatmul.mubr.f32.gmra.mxu0 %v2059
    %v2161 = vpop.f32.mrf.mxu0
    %v2162 = vadd.f32 0.0, %v2161
    %v2163 = vpop.f32.mrf.mxu0
    %2164 = vmatprep.mubr.f32.mxu0 0.0
    %2165 = vmatmul.mubr.f32.gmra.mxu0 %v2062
    %v2166 = vpop.f32.mrf.mxu0
    %v2167 = vadd.f32 0.0, %v2166
    %v2168 = vpop.f32.mrf.mxu0
    %2169 = vmatprep.mubr.f32.mxu0 0.0
    %2170 = vmatmul.mubr.f32.gmra.mxu0 %v2065
    %v2171 = vpop.f32.mrf.mxu0
    %v2172 = vadd.f32 0.0, %v2171
    %v2173 = vpop.f32.mrf.mxu0
    %2174 = vdwg.mxu0
    %v2176 = vrot.slane %v2137, 4
    %2177 = vrot.lane.b32.xlu0 %v2176, 64
    %v2178 = vpop.permute.xlu0 %2177
    %v2181 = vrot.slane %v2142, 4
    %2182 = vrot.lane.b32.xlu0 %v2181, 64
    %v2183 = vpop.permute.xlu0 %2182
    %v2186 = vrot.slane %v2147, 4
    %2187 = vrot.lane.b32.xlu0 %v2186, 64
    %v2188 = vpop.permute.xlu0 %2187
    %v2191 = vrot.slane %v2152, 4
    %2192 = vrot.lane.b32.xlu0 %v2191, 64
    %v2193 = vpop.permute.xlu0 %2192
    %v2196 = vrot.slane %v2157, 4
    %2197 = vrot.lane.b32.xlu0 %v2196, 64
    %v2198 = vpop.permute.xlu0 %2197
    %v2201 = vrot.slane %v2162, 4
    %2202 = vrot.lane.b32.xlu0 %v2201, 64
    %v2203 = vpop.permute.xlu0 %2202
    %v2206 = vrot.slane %v2167, 4
    %2207 = vrot.lane.b32.xlu0 %v2206, 64
    %v2208 = vpop.permute.xlu0 %2207
    %v2211 = vrot.slane %v2172, 4
    %2212 = vrot.lane.b32.xlu0 %v2211, 64
    %v2213 = vpop.permute.xlu0 %2212
    %v2215 = vsel %vm1003, %v2137, %v2178
    %v2216 = vsel %vm1003, %v2142, %v2183
    %v2217 = vsel %vm1003, %v2147, %v2188
    %v2218 = vsel %vm1003, %v2152, %v2193
    %v2219 = vsel %vm1003, %v2157, %v2198
    %v2220 = vsel %vm1003, %v2162, %v2203
    %v2221 = vsel %vm1003, %v2167, %v2208
    %v2222 = vsel %vm1003, %v2172, %v2213
    %v2223 = vunpack.c.l.bf16 %v1913
    %v2224 = vunpack.c.h.bf16 %v1913
    %v2225 = vunpack.c.l.bf16 %v1914
    %v2226 = vunpack.c.h.bf16 %v1914
    %v2227 = vunpack.c.l.bf16 %v1915
    %v2228 = vunpack.c.h.bf16 %v1915
    %v2229 = vunpack.c.l.bf16 %v1916
    %v2230 = vunpack.c.h.bf16 %v1916
    %v2231 = vunpack.c.l.bf16 %v1917
    %v2232 = vunpack.c.h.bf16 %v1917
    %v2233 = vunpack.c.l.bf16 %v1918
    %v2234 = vunpack.c.h.bf16 %v1918
    %v2235 = vunpack.c.l.bf16 %v1919
    %v2236 = vunpack.c.h.bf16 %v1919
    %v2237 = vunpack.c.l.bf16 %v1920
    %v2238 = vunpack.c.h.bf16 %v1920
    %v2239 = vunpack.c.l.bf16 %v1921
    %v2240 = vunpack.c.h.bf16 %v1921
    %v2241 = vunpack.c.l.bf16 %v1922
    %v2242 = vunpack.c.h.bf16 %v1922
    %v2243 = vunpack.c.l.bf16 %v1923
    %v2244 = vunpack.c.h.bf16 %v1923
    %v2245 = vunpack.c.l.bf16 %v1924
    %v2246 = vunpack.c.h.bf16 %v1924
    %v2247 = vunpack.c.l.bf16 %v1925
    %v2248 = vunpack.c.h.bf16 %v1925
    %v2249 = vunpack.c.l.bf16 %v1926
    %v2250 = vunpack.c.h.bf16 %v1926
    %v2251 = vunpack.c.l.bf16 %v1927
    %v2252 = vunpack.c.h.bf16 %v1927
    %v2253 = vunpack.c.l.bf16 %v1928
    %v2254 = vunpack.c.h.bf16 %v1928
    %v2255 = vunpack.c.l.bf16 %v1929
    %v2256 = vunpack.c.h.bf16 %v1929
    %v2257 = vunpack.c.l.bf16 %v1930
    %v2258 = vunpack.c.h.bf16 %v1930
    %v2259 = vunpack.c.l.bf16 %v1931
    %v2260 = vunpack.c.h.bf16 %v1931
    %v2261 = vunpack.c.l.bf16 %v1932
    %v2262 = vunpack.c.h.bf16 %v1932
    %v2263 = vunpack.c.l.bf16 %v1933
    %v2264 = vunpack.c.h.bf16 %v1933
    %v2265 = vunpack.c.l.bf16 %v1934
    %v2266 = vunpack.c.h.bf16 %v1934
    %v2267 = vunpack.c.l.bf16 %v1935
    %v2268 = vunpack.c.h.bf16 %v1935
    %v2269 = vunpack.c.l.bf16 %v1936
    %v2270 = vunpack.c.h.bf16 %v1936
    %v2271 = vunpack.c.l.bf16 %v1937
    %v2272 = vunpack.c.h.bf16 %v1937
    %v2273 = vunpack.c.l.bf16 %v1938
    %v2274 = vunpack.c.h.bf16 %v1938
    %v2275 = vunpack.c.l.bf16 %v1939
    %v2276 = vunpack.c.h.bf16 %v1939
    %v2277 = vunpack.c.l.bf16 %v1940
    %v2278 = vunpack.c.h.bf16 %v1940
    %v2279 = vunpack.c.l.bf16 %v1941
    %v2280 = vunpack.c.h.bf16 %v1941
    %v2281 = vunpack.c.l.bf16 %v1942
    %v2282 = vunpack.c.h.bf16 %v1942
    %v2283 = vunpack.c.l.bf16 %v1943
    %v2284 = vunpack.c.h.bf16 %v1943
    %v2285 = vunpack.c.l.bf16 %v1944
    %v2286 = vunpack.c.h.bf16 %v1944
    %v2287 = vunpack.c.l.bf16 %v1945
    %v2288 = vunpack.c.h.bf16 %v1945
    %v2289 = vunpack.c.l.bf16 %v1946
    %v2290 = vunpack.c.h.bf16 %v1946
    %v2291 = vunpack.c.l.bf16 %v1947
    %v2292 = vunpack.c.h.bf16 %v1947
    %v2293 = vunpack.c.l.bf16 %v1948
    %v2294 = vunpack.c.h.bf16 %v1948
    %v2295 = vunpack.c.l.bf16 %v1949
    %v2296 = vunpack.c.h.bf16 %v1949
    %v2297 = vunpack.c.l.bf16 %v1950
    %v2298 = vunpack.c.h.bf16 %v1950
    %v2299 = vunpack.c.l.bf16 %v1951
    %v2300 = vunpack.c.h.bf16 %v1951
    %v2301 = vunpack.c.l.bf16 %v1952
    %v2302 = vunpack.c.h.bf16 %v1952
    %v2303 = vunpack.c.l.bf16 %v1953
    %v2304 = vunpack.c.h.bf16 %v1953
    %v2305 = vunpack.c.l.bf16 %v1954
    %v2306 = vunpack.c.h.bf16 %v1954
    %v2307 = vunpack.c.l.bf16 %v1955
    %v2308 = vunpack.c.h.bf16 %v1955
    %v2309 = vunpack.c.l.bf16 %v1956
    %v2310 = vunpack.c.h.bf16 %v1956
    %v2311 = vunpack.c.l.bf16 %v1957
    %v2312 = vunpack.c.h.bf16 %v1957
    %v2313 = vunpack.c.l.bf16 %v1958
    %v2314 = vunpack.c.h.bf16 %v1958
    %v2315 = vunpack.c.l.bf16 %v1959
    %v2316 = vunpack.c.h.bf16 %v1959
    %v2317 = vunpack.c.l.bf16 %v1960
    %v2318 = vunpack.c.h.bf16 %v1960
    %v2319 = vunpack.c.l.bf16 %v1961
    %v2320 = vunpack.c.h.bf16 %v1961
    %v2321 = vunpack.c.l.bf16 %v1962
    %v2322 = vunpack.c.h.bf16 %v1962
    %v2323 = vunpack.c.l.bf16 %v1963
    %v2324 = vunpack.c.h.bf16 %v1963
    %v2325 = vunpack.c.l.bf16 %v1964
    %v2326 = vunpack.c.h.bf16 %v1964
    %v2327 = vunpack.c.l.bf16 %v1965
    %v2328 = vunpack.c.h.bf16 %v1965
    %v2329 = vunpack.c.l.bf16 %v1966
    %v2330 = vunpack.c.h.bf16 %v1966
    %v2331 = vunpack.c.l.bf16 %v1967
    %v2332 = vunpack.c.h.bf16 %v1967
    %v2333 = vunpack.c.l.bf16 %v1968
    %v2334 = vunpack.c.h.bf16 %v1968
    %v2335 = vunpack.c.l.bf16 %v1969
    %v2336 = vunpack.c.h.bf16 %v1969
    %v2337 = vunpack.c.l.bf16 %v1970
    %v2338 = vunpack.c.h.bf16 %v1970
    %v2339 = vunpack.c.l.bf16 %v1971
    %v2340 = vunpack.c.h.bf16 %v1971
    %v2341 = vunpack.c.l.bf16 %v1972
    %v2342 = vunpack.c.h.bf16 %v1972
    %v2343 = vunpack.c.l.bf16 %v1973
    %v2344 = vunpack.c.h.bf16 %v1973
    %v2345 = vunpack.c.l.bf16 %v1974
    %v2346 = vunpack.c.h.bf16 %v1974
    %v2347 = vunpack.c.l.bf16 %v1975
    %v2348 = vunpack.c.h.bf16 %v1975
    %v2349 = vunpack.c.l.bf16 %v1976
    %v2350 = vunpack.c.h.bf16 %v1976
    %v2351 = vunpack.c.l.bf16 %v1977
    %v2352 = vunpack.c.h.bf16 %v1977
    %v2353 = vunpack.c.l.bf16 %v1978
    %v2354 = vunpack.c.h.bf16 %v1978
    %v2355 = vunpack.c.l.bf16 %v1979
    %v2356 = vunpack.c.h.bf16 %v1979
    %v2357 = vunpack.c.l.bf16 %v1980
    %v2358 = vunpack.c.h.bf16 %v1980
    %v2359 = vunpack.c.l.bf16 %v1981
    %v2360 = vunpack.c.h.bf16 %v1981
    %v2361 = vunpack.c.l.bf16 %v1982
    %v2362 = vunpack.c.h.bf16 %v1982
    %v2363 = vunpack.c.l.bf16 %v1983
    %v2364 = vunpack.c.h.bf16 %v1983
    %v2365 = vunpack.c.l.bf16 %v1984
    %v2366 = vunpack.c.h.bf16 %v1984
    %v2367 = vunpack.c.l.bf16 %v1985
    %v2368 = vunpack.c.h.bf16 %v1985
    %v2369 = vunpack.c.l.bf16 %v1986
    %v2370 = vunpack.c.h.bf16 %v1986
    %v2371 = vunpack.c.l.bf16 %v1987
    %v2372 = vunpack.c.h.bf16 %v1987
    %v2373 = vunpack.c.l.bf16 %v1988
    %v2374 = vunpack.c.h.bf16 %v1988
    %v2375 = vunpack.c.l.bf16 %v1989
    %v2376 = vunpack.c.h.bf16 %v1989
    %v2377 = vunpack.c.l.bf16 %v1990
    %v2378 = vunpack.c.h.bf16 %v1990
    %v2379 = vunpack.c.l.bf16 %v1991
    %v2380 = vunpack.c.h.bf16 %v1991
    %v2381 = vunpack.c.l.bf16 %v1992
    %v2382 = vunpack.c.h.bf16 %v1992
    %v2383 = vunpack.c.l.bf16 %v1993
    %v2384 = vunpack.c.h.bf16 %v1993
    %v2385 = vunpack.c.l.bf16 %v1994
    %v2386 = vunpack.c.h.bf16 %v1994
    %v2387 = vunpack.c.l.bf16 %v1995
    %v2388 = vunpack.c.h.bf16 %v1995
    %v2389 = vunpack.c.l.bf16 %v1996
    %v2390 = vunpack.c.h.bf16 %v1996
    %v2391 = vunpack.c.l.bf16 %v1997
    %v2392 = vunpack.c.h.bf16 %v1997
    %v2393 = vunpack.c.l.bf16 %v1998
    %v2394 = vunpack.c.h.bf16 %v1998
    %v2395 = vunpack.c.l.bf16 %v1999
    %v2396 = vunpack.c.h.bf16 %v1999
    %v2397 = vunpack.c.l.bf16 %v2000
    %v2398 = vunpack.c.h.bf16 %v2000
    %v2399 = vunpack.c.l.bf16 %v2001
    %v2400 = vunpack.c.h.bf16 %v2001
    %v2401 = vunpack.c.l.bf16 %v2002
    %v2402 = vunpack.c.h.bf16 %v2002
    %v2403 = vunpack.c.l.bf16 %v2003
    %v2404 = vunpack.c.h.bf16 %v2003
    %v2405 = vunpack.c.l.bf16 %v2004
    %v2406 = vunpack.c.h.bf16 %v2004
    %v2407 = vunpack.c.l.bf16 %v2005
    %v2408 = vunpack.c.h.bf16 %v2005
    %v2409 = vunpack.c.l.bf16 %v2006
    %v2410 = vunpack.c.h.bf16 %v2006
    %v2411 = vunpack.c.l.bf16 %v2007
    %v2412 = vunpack.c.h.bf16 %v2007
    %v2413 = vunpack.c.l.bf16 %v2008
    %v2414 = vunpack.c.h.bf16 %v2008
    %v2415 = vunpack.c.l.bf16 %v2009
    %v2416 = vunpack.c.h.bf16 %v2009
    %v2417 = vunpack.c.l.bf16 %v2010
    %v2418 = vunpack.c.h.bf16 %v2010
    %v2419 = vunpack.c.l.bf16 %v2011
    %v2420 = vunpack.c.h.bf16 %v2011
    %v2421 = vunpack.c.l.bf16 %v2012
    %v2422 = vunpack.c.h.bf16 %v2012
    %v2423 = vunpack.c.l.bf16 %v2013
    %v2424 = vunpack.c.h.bf16 %v2013
    %v2425 = vunpack.c.l.bf16 %v2014
    %v2426 = vunpack.c.h.bf16 %v2014
    %v2427 = vunpack.c.l.bf16 %v2015
    %v2428 = vunpack.c.h.bf16 %v2015
    %v2429 = vunpack.c.l.bf16 %v2016
    %v2430 = vunpack.c.h.bf16 %v2016
    %v2431 = vunpack.c.l.bf16 %v2017
    %v2432 = vunpack.c.h.bf16 %v2017
    %v2433 = vunpack.c.l.bf16 %v2018
    %v2434 = vunpack.c.h.bf16 %v2018
    %v2435 = vunpack.c.l.bf16 %v2019
    %v2436 = vunpack.c.h.bf16 %v2019
    %v2437 = vunpack.c.l.bf16 %v2020
    %v2438 = vunpack.c.h.bf16 %v2020
    %v2439 = vunpack.c.l.bf16 %v2021
    %v2440 = vunpack.c.h.bf16 %v2021
    %v2441 = vunpack.c.l.bf16 %v2022
    %v2442 = vunpack.c.h.bf16 %v2022
    %v2443 = vunpack.c.l.bf16 %v2023
    %v2444 = vunpack.c.h.bf16 %v2023
    %v2445 = vunpack.c.l.bf16 %v2024
    %v2446 = vunpack.c.h.bf16 %v2024
    %v2447 = vunpack.c.l.bf16 %v2025
    %v2448 = vunpack.c.h.bf16 %v2025
    %v2449 = vunpack.c.l.bf16 %v2026
    %v2450 = vunpack.c.h.bf16 %v2026
    %v2451 = vunpack.c.l.bf16 %v2027
    %v2452 = vunpack.c.h.bf16 %v2027
    %v2453 = vunpack.c.l.bf16 %v2028
    %v2454 = vunpack.c.h.bf16 %v2028
    %v2455 = vunpack.c.l.bf16 %v2029
    %v2456 = vunpack.c.h.bf16 %v2029
    %v2457 = vunpack.c.l.bf16 %v2030
    %v2458 = vunpack.c.h.bf16 %v2030
    %v2459 = vunpack.c.l.bf16 %v2031
    %v2460 = vunpack.c.h.bf16 %v2031
    %v2461 = vunpack.c.l.bf16 %v2032
    %v2462 = vunpack.c.h.bf16 %v2032
    %v2463 = vunpack.c.l.bf16 %v2033
    %v2464 = vunpack.c.h.bf16 %v2033
    %v2465 = vunpack.c.l.bf16 %v2034
    %v2466 = vunpack.c.h.bf16 %v2034
    %v2467 = vunpack.c.l.bf16 %v2035
    %v2468 = vunpack.c.h.bf16 %v2035
    %v2469 = vunpack.c.l.bf16 %v2036
    %v2470 = vunpack.c.h.bf16 %v2036
    %v2471 = vunpack.c.l.bf16 %v2037
    %v2472 = vunpack.c.h.bf16 %v2037
    %v2473 = vunpack.c.l.bf16 %v2038
    %v2474 = vunpack.c.h.bf16 %v2038
    %v2475 = vunpack.c.l.bf16 %v2039
    %v2476 = vunpack.c.h.bf16 %v2039
    %v2477 = vunpack.c.l.bf16 %v2040
    %v2478 = vunpack.c.h.bf16 %v2040
    %2480 = vset.pattern.permute.xlu0 0
    %2481 = vperm.xlu0 %2480, %v2041
    %v2482 = vpop.permute.xlu0 %2481
    %2484 = vmatprep.subr.mxu0 %v2254
    %2485 = vmatpush1.msra.mxu0 %v2253
    %2486 = vmatprep.subr.mxu0 %v2252
    %2487 = vmatpush1.msra.mxu0 %v2251
    %2488 = vmatprep.subr.mxu0 %v2250
    %2489 = vmatpush1.msra.mxu0 %v2249
    %2490 = vmatprep.subr.mxu0 %v2248
    %2491 = vmatpush1.msra.mxu0 %v2247
    %2492 = vmatprep.subr.mxu0 %v2246
    %2493 = vmatpush1.msra.mxu0 %v2245
    %2494 = vmatprep.subr.mxu0 %v2244
    %2495 = vmatpush1.msra.mxu0 %v2243
    %2496 = vmatprep.subr.mxu0 %v2242
    %2497 = vmatpush1.msra.mxu0 %v2241
    %2498 = vmatprep.subr.mxu0 %v2240
    %2499 = vmatpush1.msra.mxu0 %v2239
    %2500 = vmatprep.subr.mxu0 %v2238
    %2501 = vmatpush1.msra.mxu0 %v2237
    %2502 = vmatprep.subr.mxu0 %v2236
    %2503 = vmatpush1.msra.mxu0 %v2235
    %2504 = vmatprep.subr.mxu0 %v2234
    %2505 = vmatpush1.msra.mxu0 %v2233
    %2506 = vmatprep.subr.mxu0 %v2232
    %2507 = vmatpush1.msra.mxu0 %v2231
    %2508 = vmatprep.subr.mxu0 %v2230
    %2509 = vmatpush1.msra.mxu0 %v2229
    %2510 = vmatprep.subr.mxu0 %v2228
    %2511 = vmatpush1.msra.mxu0 %v2227
    %2512 = vmatprep.subr.mxu0 %v2226
    %2513 = vmatpush1.msra.mxu0 %v2225
    %2514 = vmatprep.subr.mxu0 %v2224
    %2515 = vmatpush1.msra.mxu0 %v2223
    %2516 = vmatprep.subr.mxu0 %v2286
    %2517 = vmatpush2.msra.mxu0 %v2285
    %2518 = vmatprep.subr.mxu0 %v2284
    %2519 = vmatpush2.msra.mxu0 %v2283
    %2520 = vmatprep.subr.mxu0 %v2282
    %2521 = vmatpush2.msra.mxu0 %v2281
    %2522 = vmatprep.subr.mxu0 %v2280
    %2523 = vmatpush2.msra.mxu0 %v2279
    %2524 = vmatprep.subr.mxu0 %v2278
    %2525 = vmatpush2.msra.mxu0 %v2277
    %2526 = vmatprep.subr.mxu0 %v2276
    %2527 = vmatpush2.msra.mxu0 %v2275
    %2528 = vmatprep.subr.mxu0 %v2274
    %2529 = vmatpush2.msra.mxu0 %v2273
    %2530 = vmatprep.subr.mxu0 %v2272
    %2531 = vmatpush2.msra.mxu0 %v2271
    %2532 = vmatprep.subr.mxu0 %v2270
    %2533 = vmatpush2.msra.mxu0 %v2269
    %2534 = vmatprep.subr.mxu0 %v2268
    %2535 = vmatpush2.msra.mxu0 %v2267
    %2536 = vmatprep.subr.mxu0 %v2266
    %2537 = vmatpush2.msra.mxu0 %v2265
    %2538 = vmatprep.subr.mxu0 %v2264
    %2539 = vmatpush2.msra.mxu0 %v2263
    %2540 = vmatprep.subr.mxu0 %v2262
    %2541 = vmatpush2.msra.mxu0 %v2261
    %2542 = vmatprep.subr.mxu0 %v2260
    %2543 = vmatpush2.msra.mxu0 %v2259
    %2544 = vmatprep.subr.mxu0 %v2258
    %2545 = vmatpush2.msra.mxu0 %v2257
    %2546 = vmatprep.subr.mxu0 %v2256
    %2547 = vmatpush2.msra.mxu0 %v2255
    %2548 = vmatprep.mubr.f32.mxu0 %v2216
    %2549 = vmatmul.mubr.f32.gmra.mxu0 %v2215
    %v2550 = vpop.f32.mrf.mxu0
    %v2551 = vadd.f32 %v2482, %v2550
    %v2552 = vpop.f32.mrf.mxu0
    %v2553 = vadd.f32 %v2482, %v2552
    %2554 = vdwg.mxu0
    %2555 = vmatprep.subr.mxu0 %v2318
    %2556 = vmatpush1.msra.mxu0 %v2317
    %2557 = vmatprep.subr.mxu0 %v2316
    %2558 = vmatpush1.msra.mxu0 %v2315
    %2559 = vmatprep.subr.mxu0 %v2314
    %2560 = vmatpush1.msra.mxu0 %v2313
    %2561 = vmatprep.subr.mxu0 %v2312
    %2562 = vmatpush1.msra.mxu0 %v2311
    %2563 = vmatprep.subr.mxu0 %v2310
    %2564 = vmatpush1.msra.mxu0 %v2309
    %2565 = vmatprep.subr.mxu0 %v2308
    %2566 = vmatpush1.msra.mxu0 %v2307
    %2567 = vmatprep.subr.mxu0 %v2306
    %2568 = vmatpush1.msra.mxu0 %v2305
    %2569 = vmatprep.subr.mxu0 %v2304
    %2570 = vmatpush1.msra.mxu0 %v2303
    %2571 = vmatprep.subr.mxu0 %v2302
    %2572 = vmatpush1.msra.mxu0 %v2301
    %2573 = vmatprep.subr.mxu0 %v2300
    %2574 = vmatpush1.msra.mxu0 %v2299
    %2575 = vmatprep.subr.mxu0 %v2298
    %2576 = vmatpush1.msra.mxu0 %v2297
    %2577 = vmatprep.subr.mxu0 %v2296
    %2578 = vmatpush1.msra.mxu0 %v2295
    %2579 = vmatprep.subr.mxu0 %v2294
    %2580 = vmatpush1.msra.mxu0 %v2293
    %2581 = vmatprep.subr.mxu0 %v2292
    %2582 = vmatpush1.msra.mxu0 %v2291
    %2583 = vmatprep.subr.mxu0 %v2290
    %2584 = vmatpush1.msra.mxu0 %v2289
    %2585 = vmatprep.subr.mxu0 %v2288
    %2586 = vmatpush1.msra.mxu0 %v2287
    %2587 = vmatprep.subr.mxu0 %v2350
    %2588 = vmatpush2.msra.mxu0 %v2349
    %2589 = vmatprep.subr.mxu0 %v2348
    %2590 = vmatpush2.msra.mxu0 %v2347
    %2591 = vmatprep.subr.mxu0 %v2346
    %2592 = vmatpush2.msra.mxu0 %v2345
    %2593 = vmatprep.subr.mxu0 %v2344
    %2594 = vmatpush2.msra.mxu0 %v2343
    %2595 = vmatprep.subr.mxu0 %v2342
    %2596 = vmatpush2.msra.mxu0 %v2341
    %2597 = vmatprep.subr.mxu0 %v2340
    %2598 = vmatpush2.msra.mxu0 %v2339
    %2599 = vmatprep.subr.mxu0 %v2338
    %2600 = vmatpush2.msra.mxu0 %v2337
    %2601 = vmatprep.subr.mxu0 %v2336
    %2602 = vmatpush2.msra.mxu0 %v2335
    %2603 = vmatprep.subr.mxu0 %v2334
    %2604 = vmatpush2.msra.mxu0 %v2333
    %2605 = vmatprep.subr.mxu0 %v2332
    %2606 = vmatpush2.msra.mxu0 %v2331
    %2607 = vmatprep.subr.mxu0 %v2330
    %2608 = vmatpush2.msra.mxu0 %v2329
    %2609 = vmatprep.subr.mxu0 %v2328
    %2610 = vmatpush2.msra.mxu0 %v2327
    %2611 = vmatprep.subr.mxu0 %v2326
    %2612 = vmatpush2.msra.mxu0 %v2325
    %2613 = vmatprep.subr.mxu0 %v2324
    %2614 = vmatpush2.msra.mxu0 %v2323
    %2615 = vmatprep.subr.mxu0 %v2322
    %2616 = vmatpush2.msra.mxu0 %v2321
    %2617 = vmatprep.subr.mxu0 %v2320
    %2618 = vmatpush2.msra.mxu0 %v2319
    %2619 = vmatprep.mubr.f32.mxu0 %v2218
    %2620 = vmatmul.mubr.f32.gmra.mxu0 %v2217
    %v2621 = vpop.f32.mrf.mxu0
    %v2622 = vadd.f32 %v2551, %v2621
    %v2623 = vpop.f32.mrf.mxu0
    %v2624 = vadd.f32 %v2553, %v2623
    %2625 = vdwg.mxu0
    %2626 = vmatprep.subr.mxu0 %v2382
    %2627 = vmatpush1.msra.mxu0 %v2381
    %2628 = vmatprep.subr.mxu0 %v2380
    %2629 = vmatpush1.msra.mxu0 %v2379
    %2630 = vmatprep.subr.mxu0 %v2378
    %2631 = vmatpush1.msra.mxu0 %v2377
    %2632 = vmatprep.subr.mxu0 %v2376
    %2633 = vmatpush1.msra.mxu0 %v2375
    %2634 = vmatprep.subr.mxu0 %v2374
    %2635 = vmatpush1.msra.mxu0 %v2373
    %2636 = vmatprep.subr.mxu0 %v2372
    %2637 = vmatpush1.msra.mxu0 %v2371
    %2638 = vmatprep.subr.mxu0 %v2370
    %2639 = vmatpush1.msra.mxu0 %v2369
    %2640 = vmatprep.subr.mxu0 %v2368
    %2641 = vmatpush1.msra.mxu0 %v2367
    %2642 = vmatprep.subr.mxu0 %v2366
    %2643 = vmatpush1.msra.mxu0 %v2365
    %2644 = vmatprep.subr.mxu0 %v2364
    %2645 = vmatpush1.msra.mxu0 %v2363
    %2646 = vmatprep.subr.mxu0 %v2362
    %2647 = vmatpush1.msra.mxu0 %v2361
    %2648 = vmatprep.subr.mxu0 %v2360
    %2649 = vmatpush1.msra.mxu0 %v2359
    %2650 = vmatprep.subr.mxu0 %v2358
    %2651 = vmatpush1.msra.mxu0 %v2357
    %2652 = vmatprep.subr.mxu0 %v2356
    %2653 = vmatpush1.msra.mxu0 %v2355
    %2654 = vmatprep.subr.mxu0 %v2354
    %2655 = vmatpush1.msra.mxu0 %v2353
    %2656 = vmatprep.subr.mxu0 %v2352
    %2657 = vmatpush1.msra.mxu0 %v2351
    %2658 = vmatprep.subr.mxu0 %v2414
    %2659 = vmatpush2.msra.mxu0 %v2413
    %2660 = vmatprep.subr.mxu0 %v2412
    %2661 = vmatpush2.msra.mxu0 %v2411
    %2662 = vmatprep.subr.mxu0 %v2410
    %2663 = vmatpush2.msra.mxu0 %v2409
    %2664 = vmatprep.subr.mxu0 %v2408
    %2665 = vmatpush2.msra.mxu0 %v2407
    %2666 = vmatprep.subr.mxu0 %v2406
    %2667 = vmatpush2.msra.mxu0 %v2405
    %2668 = vmatprep.subr.mxu0 %v2404
    %2669 = vmatpush2.msra.mxu0 %v2403
    %2670 = vmatprep.subr.mxu0 %v2402
    %2671 = vmatpush2.msra.mxu0 %v2401
    %2672 = vmatprep.subr.mxu0 %v2400
    %2673 = vmatpush2.msra.mxu0 %v2399
    %2674 = vmatprep.subr.mxu0 %v2398
    %2675 = vmatpush2.msra.mxu0 %v2397
    %2676 = vmatprep.subr.mxu0 %v2396
    %2677 = vmatpush2.msra.mxu0 %v2395
    %2678 = vmatprep.subr.mxu0 %v2394
    %2679 = vmatpush2.msra.mxu0 %v2393
    %2680 = vmatprep.subr.mxu0 %v2392
    %2681 = vmatpush2.msra.mxu0 %v2391
    %2682 = vmatprep.subr.mxu0 %v2390
    %2683 = vmatpush2.msra.mxu0 %v2389
    %2684 = vmatprep.subr.mxu0 %v2388
    %2685 = vmatpush2.msra.mxu0 %v2387
    %2686 = vmatprep.subr.mxu0 %v2386
    %2687 = vmatpush2.msra.mxu0 %v2385
    %2688 = vmatprep.subr.mxu0 %v2384
    %2689 = vmatpush2.msra.mxu0 %v2383
    %2690 = vmatprep.mubr.f32.mxu0 %v2220
    %2691 = vmatmul.mubr.f32.gmra.mxu0 %v2219
    %v2692 = vpop.f32.mrf.mxu0
    %v2693 = vadd.f32 %v2622, %v2692
    %v2694 = vpop.f32.mrf.mxu0
    %v2695 = vadd.f32 %v2624, %v2694
    %2696 = vdwg.mxu0
    %2697 = vmatprep.subr.mxu0 %v2446
    %2698 = vmatpush1.msra.mxu0 %v2445
    %2699 = vmatprep.subr.mxu0 %v2444
    %2700 = vmatpush1.msra.mxu0 %v2443
    %2701 = vmatprep.subr.mxu0 %v2442
    %2702 = vmatpush1.msra.mxu0 %v2441
    %2703 = vmatprep.subr.mxu0 %v2440
    %2704 = vmatpush1.msra.mxu0 %v2439
    %2705 = vmatprep.subr.mxu0 %v2438
    %2706 = vmatpush1.msra.mxu0 %v2437
    %2707 = vmatprep.subr.mxu0 %v2436
    %2708 = vmatpush1.msra.mxu0 %v2435
    %2709 = vmatprep.subr.mxu0 %v2434
    %2710 = vmatpush1.msra.mxu0 %v2433
    %2711 = vmatprep.subr.mxu0 %v2432
    %2712 = vmatpush1.msra.mxu0 %v2431
    %2713 = vmatprep.subr.mxu0 %v2430
    %2714 = vmatpush1.msra.mxu0 %v2429
    %2715 = vmatprep.subr.mxu0 %v2428
    %2716 = vmatpush1.msra.mxu0 %v2427
    %2717 = vmatprep.subr.mxu0 %v2426
    %2718 = vmatpush1.msra.mxu0 %v2425
    %2719 = vmatprep.subr.mxu0 %v2424
    %2720 = vmatpush1.msra.mxu0 %v2423
    %2721 = vmatprep.subr.mxu0 %v2422
    %2722 = vmatpush1.msra.mxu0 %v2421
    %2723 = vmatprep.subr.mxu0 %v2420
    %2724 = vmatpush1.msra.mxu0 %v2419
    %2725 = vmatprep.subr.mxu0 %v2418
    %2726 = vmatpush1.msra.mxu0 %v2417
    %2727 = vmatprep.subr.mxu0 %v2416
    %2728 = vmatpush1.msra.mxu0 %v2415
    %2729 = vmatprep.subr.mxu0 %v2478
    %2730 = vmatpush2.msra.mxu0 %v2477
    %2731 = vmatprep.subr.mxu0 %v2476
    %2732 = vmatpush2.msra.mxu0 %v2475
    %2733 = vmatprep.subr.mxu0 %v2474
    %2734 = vmatpush2.msra.mxu0 %v2473
    %2735 = vmatprep.subr.mxu0 %v2472
    %2736 = vmatpush2.msra.mxu0 %v2471
    %2737 = vmatprep.subr.mxu0 %v2470
    %2738 = vmatpush2.msra.mxu0 %v2469
    %2739 = vmatprep.subr.mxu0 %v2468
    %2740 = vmatpush2.msra.mxu0 %v2467
    %2741 = vmatprep.subr.mxu0 %v2466
    %2742 = vmatpush2.msra.mxu0 %v2465
    %2743 = vmatprep.subr.mxu0 %v2464
    %2744 = vmatpush2.msra.mxu0 %v2463
    %2745 = vmatprep.subr.mxu0 %v2462
    %2746 = vmatpush2.msra.mxu0 %v2461
    %2747 = vmatprep.subr.mxu0 %v2460
    %2748 = vmatpush2.msra.mxu0 %v2459
    %2749 = vmatprep.subr.mxu0 %v2458
    %2750 = vmatpush2.msra.mxu0 %v2457
    %2751 = vmatprep.subr.mxu0 %v2456
    %2752 = vmatpush2.msra.mxu0 %v2455
    %2753 = vmatprep.subr.mxu0 %v2454
    %2754 = vmatpush2.msra.mxu0 %v2453
    %2755 = vmatprep.subr.mxu0 %v2452
    %2756 = vmatpush2.msra.mxu0 %v2451
    %2757 = vmatprep.subr.mxu0 %v2450
    %2758 = vmatpush2.msra.mxu0 %v2449
    %2759 = vmatprep.subr.mxu0 %v2448
    %2760 = vmatpush2.msra.mxu0 %v2447
    %2761 = vmatprep.mubr.f32.mxu0 %v2222
    %2762 = vmatmul.mubr.f32.gmra.mxu0 %v2221
    %v2763 = vpop.f32.mrf.mxu0
    %v2764 = vadd.f32 %v2693, %v2763
    %v2765 = vpop.f32.mrf.mxu0
    %v2766 = vadd.f32 %v2695, %v2765
    %2767 = vdwg.mxu0
    %v2770 = vcombine.low %v2764, %v2766
    %2772 = vst [vmem:[%s13] sm:$0xff] %v2770
    // Predicated region
    $region88: #{aut_enc_e_forward.1} parent=1 // pred_check
      _
    $region89: #{aut_enc_e_forward.1} parent=1 // pred_check_branch
      %2774 = sbr.rel (0) target = $region91
    $region90: #{aut_enc_e_forward.1} parent=1 // pred_region
      _
    $region91: #{aut_enc_e_forward.1} parent=1 // pred_fallthru
      _
    // Predicated region
    $region92: #{aut_enc_e_forward.1} parent=1 // pred_check
      _
    $region93: #{aut_enc_e_forward.1} parent=1 // pred_check_branch
      %2776 = sbr.rel (0) target = $region95
    $region94: #{aut_enc_e_forward.1} parent=1 // pred_region
      _
    $region95: #{aut_enc_e_forward.1} parent=1 // pred_fallthru
      _
    %2777 = vsyncpa [#allocation6], 1
  %2778 = vsyncmov [#allocation4]
  %s2779 = vpop.sfrf %2778
  %p2780 = scmp.eq.s32.totalorder %s2779, 0
  %p2781 = pneg %p2780
  %2783 = shalt.err (%p2781)
  %s2784 = scalar_lea.sflag [#allocation4], 1
  %2785 = vsyncmov %s2784
  %s2786 = vpop.sfrf %2785
  %p2787 = scmp.eq.s32.totalorder %s2786, 0
  %p2788 = pneg %p2787
  %2790 = shalt.err (%p2788)

</llo_original>
